<compile_context>
chip_gen: v7x
topology: tpu7x:2x2x1
jax: 0.10.0
libtpu: 0.0.40
codegen_flags: <defaults>
</compile_context>

<pallas_src>
import functools

import jax
import jax.numpy as jnp
from jax import lax
from jax.experimental import pallas as pl
from jax.experimental.pallas import tpu as pltpu


# ----------------------------------------------------------------------------
# Synthetic darknet config (replaces parse_model_config / .cfg file).
# ----------------------------------------------------------------------------
HYPERPARAMS = {'type': 'net', 'channels': '4', 'height': '16'}

MODULE_DEFS = [
    {'type': 'convolutional', 'batch_normalize': '1', 'filters': '8',  'size': '3', 'stride': '1', 'activation': 'leaky'},   # 0: 8 @ 16x16
    {'type': 'maxpool', 'size': '2', 'stride': '1'},                                                                          # 1: 8 @ 16x16
    {'type': 'convolutional', 'batch_normalize': '1', 'filters': '16', 'size': '3', 'stride': '2', 'activation': 'leaky'},   # 2: 16 @ 8x8
    {'type': 'convolutional', 'batch_normalize': '1', 'filters': '8',  'size': '1', 'stride': '1', 'activation': 'leaky'},   # 3: 8 @ 8x8
    {'type': 'convolutional', 'batch_normalize': '1', 'filters': '16', 'size': '3', 'stride': '1', 'activation': 'leaky'},   # 4: 16 @ 8x8
    {'type': 'shortcut', 'from': '-3', 'activation': 'linear'},                                                               # 5: 16 @ 8x8
    {'type': 'convolutional', 'batch_normalize': '1', 'filters': '16', 'size': '3', 'stride': '2', 'activation': 'leaky'},   # 6: 16 @ 4x4
    {'type': 'convolutional', 'batch_normalize': '0', 'filters': '16', 'size': '1', 'stride': '1', 'activation': 'linear'},  # 7: 16 @ 4x4
    {'type': 'yolo', 'mask': '0,1', 'anchors': '10,13,16,30,33,23,30,61', 'classes': '3'},                                    # 8
    {'type': 'route', 'layers': '-3'},                                                                                        # 9: 16 @ 4x4
    {'type': 'convolutional', 'batch_normalize': '1', 'filters': '8',  'size': '1', 'stride': '1', 'activation': 'leaky'},   # 10: 8 @ 4x4
    {'type': 'upsample', 'stride': '2'},                                                                                      # 11: 8 @ 8x8
    {'type': 'route', 'layers': '-1,-7'},                                                                                     # 12: 24 @ 8x8
    {'type': 'convolutional', 'batch_normalize': '1', 'filters': '16', 'size': '3', 'stride': '1', 'activation': 'leaky'},   # 13: 16 @ 8x8
    {'type': 'convolutional', 'batch_normalize': '0', 'filters': '16', 'size': '1', 'stride': '1', 'activation': 'linear'},  # 14: 16 @ 8x8
    {'type': 'yolo', 'mask': '1,2', 'anchors': '10,13,16,30,33,23,30,61', 'classes': '3'},                                    # 15
]

LEAKY_SLOPE = 0.1


def _leaky(y):
    # LeakyReLU(0.1): max(y, 0.1*y) is exact for slope < 1.
    return jnp.maximum(y, LEAKY_SLOPE * y)


# ----------------------------------------------------------------------------
# Host-side parameter folding / constant builders
# ----------------------------------------------------------------------------
def _fold_conv(p):
    """Fold eval-mode BN into the conv: returns (w_scaled f32 (F,C,k,k), shift f32 (F,))."""
    w = p['w']
    if 'gamma' in p:
        scale = p['gamma'] / jnp.sqrt(p['rv'] + 1e-5)
        shift = p['beta'] - p['rm'] * scale
    else:
        scale = jnp.ones((w.shape[0],), jnp.float32)
        shift = p['b']
    return w * scale[:, None, None, None], shift


def _w_taps(w_scaled):
    """(F,C,3,3) -> (9,F,C) bf16, tap-major (t = u*3+v), for in-kernel rolled 3x3 convs."""
    F_, C, k, _ = w_scaled.shape
    return jnp.transpose(w_scaled, (2, 3, 0, 1)).reshape(k * k, F_, C).astype(jnp.bfloat16)


def _w_flat(w_scaled):
    """(F,C,k,k) -> (F, k*k*C) bf16 with column order (u,v,c), matching im2col rows."""
    F_, C, k, _ = w_scaled.shape
    return jnp.transpose(w_scaled, (0, 2, 3, 1)).reshape(F_, k * k * C).astype(jnp.bfloat16)


def _col(shift):
    return shift.reshape(-1, 1).astype(jnp.float32)


def _tap_masks(n_img, H, W):
    """(9, 1, n_img*H*W) f32 validity masks for the 9 (du,dv) taps of a 3x3/s1 conv
    (and, rows 5/7/8, for the right/down/diag neighbours of the 2x2/s1 maxpool)."""
    m = jnp.arange(n_img * H * W, dtype=jnp.int32)
    h = (m // W) % H
    w = m % W
    rows = []
    for u in range(3):
        for v in range(3):
            du, dv = u - 1, v - 1
            ok = (h + du >= 0) & (h + du < H) & (w + dv >= 0) & (w + dv < W)
            rows.append(ok)
    return jnp.stack(rows, axis=0).astype(jnp.float32).reshape(9, 1, n_img * H * W)


def _im2col_s2(arr, C, N, H, W):
    """XLA glue: channel-major (C, N*H*W) -> 3x3 / stride-2 / pad-1 patches (9C, N*Ho*Wo).
    TODO(synk): replace with an in-kernel strided gather at real YOLO resolutions."""
    Ho, Wo = H // 2, W // 2
    x4 = arr.reshape(C, N, H, W)
    x4 = jnp.pad(x4, ((0, 0), (0, 0), (1, 1), (1, 1)))
    cols = [x4[:, :, u:u + 2 * Ho:2, v:v + 2 * Wo:2] for u in range(3) for v in range(3)]
    return jnp.stack(cols, axis=0).reshape(9 * C, N * Ho * Wo), Ho, Wo


def _upsample2(arr, C, N, H, W):
    """XLA glue: 2x nearest-neighbour upsample in channel-major layout (tiny).
    TODO(synk): fold into the consumer conv's in-kernel gather."""
    x4 = arr.reshape(C, N, H, W)
    x4 = jnp.repeat(jnp.repeat(x4, 2, axis=2), 2, axis=3)
    return x4.reshape(C, N * (2 * H) * (2 * W))


def _parse_yolo(md, img_dim, g):
    anchor_idxs = [int(a) for a in md['mask'].split(',')]
    aflat = [float(a) for a in md['anchors'].split(',')]
    anchors_all = [(aflat[j], aflat[j + 1]) for j in range(0, len(aflat), 2)]
    anchors = [anchors_all[j] for j in anchor_idxs]
    num_classes = int(md['classes'])
    return anchors, num_classes, len(anchors), num_classes + 5, float(img_dim) / float(g)


def _yolo_consts(md, img_dim, g, n_img):
    """Host-side YOLO decode constants (no in-kernel iota / %,//):
    per-row (F,1) sigmoid scale / wh mask / anchor size, and (F,M) grid offsets."""
    anchors, _, A, D, stride = _parse_yolo(md, img_dim, g)
    d = jnp.arange(D, dtype=jnp.int32)
    is_wh = (d == 2) | (d == 3)
    csig_d = jnp.where((d == 0) | (d == 1), stride, jnp.where(is_wh, 0.0, 1.0))
    csig = jnp.tile(csig_d, A).reshape(A * D, 1).astype(jnp.float32)
    mwh = jnp.tile(is_wh.astype(jnp.float32), A).reshape(A * D, 1)
    anc = jnp.asarray(anchors, jnp.float32)                       # raw pixels == (anchor/stride)*stride
    whs = jnp.zeros((A, D), jnp.float32).at[:, 2].set(anc[:, 0]).at[:, 3].set(anc[:, 1])
    whs = whs.reshape(A * D, 1)
    M = n_img * g * g
    m = jnp.arange(M, dtype=jnp.int32)
    gx = ((m % (g * g)) % g).astype(jnp.float32) * stride
    gy = ((m % (g * g)) // g).astype(jnp.float32) * stride
    dd = jnp.tile(d, A).reshape(A * D, 1)
    gadd = jnp.where(dd == 0, gx[None, :], jnp.where(dd == 1, gy[None, :], 0.0))
    return csig, mwh, whs, gadd, A, D


# ----------------------------------------------------------------------------
# In-kernel building blocks
# ----------------------------------------------------------------------------
def _lane_shift(x, off, mask):
    """y[:, m] = x[:, m + off] * mask[:, m]; pltpu.roll has jnp.roll semantics (XLU lane rotate),
    so shift = -off; wrapped lanes are zeroed by the border mask."""
    M = x.shape[1]
    return pltpu.roll(x, shift=(-off) % M, axis=1) * mask


def _conv3x3_s1(x, w_ref, masks_ref, W):
    """3x3 / stride-1 / pad-1 conv on a channel-major (C, M) f32 map: nine lane-rolled
    (F,C)@(C,M) MXU products accumulated in f32.  w_ref: (9,F,C) bf16, masks_ref: (9,1,M) f32."""
    acc = None
    for t in range(9):
        u, v = divmod(t, 3)
        off = (u - 1) * W + (v - 1)
        xt = x if off == 0 else _lane_shift(x, off, masks_ref[t])
        p = jnp.dot(w_ref[t], xt.astype(jnp.bfloat16), preferred_element_type=jnp.float32)
        acc = p if acc is None else acc + p
    return acc


def _conv1x1(x_f32, w_ref, s_ref):
    y = jnp.dot(w_ref[...], x_f32.astype(jnp.bfloat16), preferred_element_type=jnp.float32)
    return _leaky(y + s_ref[...])


def _yolo_decode(y, csig_ref, mwh_ref, whs_ref, gadd_ref):
    """(sigmoid+grid)*stride for x/y, exp*anchor for w/h, sigmoid for conf/cls — all via
    host-precomputed per-row constants."""
    sig = 1.0 / (1.0 + jnp.exp(-y))
    return sig * csig_ref[...] + jnp.exp(y * mwh_ref[...]) * whs_ref[...] + gadd_ref[...]


# ----------------------------------------------------------------------------
# Fused chain kernels
# ----------------------------------------------------------------------------
def _chain_a_kernel(x_ref, w0_ref, s0_ref, masks_ref, o_ref, *, W):
    """Modules 0-1: conv3x3/s1 + BN + LeakyReLU, fused ZeroPad2d((0,1,0,1)) + MaxPool2d(2,1).
    One grid step per image (lane-dense blocks, 'parallel')."""
    x = x_ref[...].astype(jnp.float32)
    y = _leaky(_conv3x3_s1(x, w0_ref, masks_ref, W) + s0_ref[...])
    # maxpool neighbours via three XLU lane rolls; masked-out lanes become the pad zero.
    right = _lane_shift(y, 1, masks_ref[5])        # (0,+1): valid iff w+1 < W
    down = _lane_shift(y, W, masks_ref[7])         # (+1,0): valid iff h+1 < H
    diag = _lane_shift(y, W + 1, masks_ref[8])     # (+1,+1)
    o_ref[...] = jnp.maximum(jnp.maximum(y, right), jnp.maximum(down, diag)).astype(o_ref.dtype)


def _chain_b_kernel(p2_ref, w2_ref, s2_ref, w3_ref, s3_ref, w4_ref, s4_ref,
                    masks_ref, o_ref, *, W):
    """Modules 2-5: conv3x3/s2 (pre-gathered patches) -> conv1x1 -> conv3x3/s1 -> shortcut,
    all resident in VMEM/vregs."""
    a2 = _leaky(jnp.dot(w2_ref[...], p2_ref[...], preferred_element_type=jnp.float32) + s2_ref[...])
    a3 = _conv1x1(a2, w3_ref, s3_ref)
    a4 = _leaky(_conv3x3_s1(a3, w4_ref, masks_ref, W) + s4_ref[...])
    o_ref[...] = (a4 + a2).astype(o_ref.dtype)     # fused 'shortcut' (module 5)


def _chain_c_kernel(p6_ref, w6_ref, s6_ref, w7_ref, s7_ref, w10_ref, s10_ref,
                    csig_ref, mwh_ref, whs_ref, gadd_ref, head_ref, a10_ref):
    """Modules 6-8 (+10): conv3x3/s2 -> conv1x1 (leaky quirk) -> fused YOLO decode,
    plus route(-3) -> conv1x1 feeding the upsample branch."""
    a6 = _leaky(jnp.dot(w6_ref[...], p6_ref[...], preferred_element_type=jnp.float32) + s6_ref[...])
    a7 = _conv1x1(a6, w7_ref, s7_ref)              # 'linear' conv still gets LeakyReLU (reference quirk)
    head_ref[...] = _yolo_decode(a7, csig_ref, mwh_ref, whs_ref, gadd_ref)
    a10_ref[...] = _conv1x1(a6, w10_ref, s10_ref).astype(a10_ref.dtype)


def _chain_d_kernel(up_ref, a5_ref, w13a_ref, w13b_ref, s13_ref, w14_ref, s14_ref,
                    masks_ref, csig_ref, mwh_ref, whs_ref, gadd_ref, head_ref, *, W):
    """Modules 12-15: route-12 without concat (K split across the two sources),
    conv3x3/s1 -> conv1x1 (leaky quirk) -> fused YOLO decode."""
    up = up_ref[...].astype(jnp.float32)
    a5 = a5_ref[...].astype(jnp.float32)
    a13 = _leaky(_conv3x3_s1(up, w13a_ref, masks_ref, W)
                 + _conv3x3_s1(a5, w13b_ref, masks_ref, W) + s13_ref[...])
    a14 = _conv1x1(a13, w14_ref, s14_ref)
    head_ref[...] = _yolo_decode(a14, csig_ref, mwh_ref, whs_ref, gadd_ref)


# ----------------------------------------------------------------------------
# pallas_call wrappers
# ----------------------------------------------------------------------------
def _bs_full(shape):
    n = len(shape)
    return pl.BlockSpec(shape, lambda i, _n=n: (0,) * _n)


def _run_chain_a(x_cm, w0, s0, masks_img, n_img, H, W):
    C = x_cm.shape[0]
    F_ = w0.shape[1]
    Mi = H * W
    return pl.pallas_call(
        functools.partial(_chain_a_kernel, W=W),
        out_shape=jax.ShapeDtypeStruct((F_, n_img * Mi), jnp.bfloat16),
        grid=(n_img,),
        in_specs=[pl.BlockSpec((C, Mi), lambda i: (0, i)),
                  pl.BlockSpec(w0.shape, lambda i: (0, 0, 0)),
                  pl.BlockSpec(s0.shape, lambda i: (0, 0)),
                  pl.BlockSpec(masks_img.shape, lambda i: (0, 0, 0))],
        out_specs=pl.BlockSpec((F_, Mi), lambda i: (0, i)),
        compiler_params=pltpu.CompilerParams(dimension_semantics=("parallel",)),
    )(x_cm, w0, s0, masks_img)


def _run_chain_b(p2, w2, s2, w3, s3, w4, s4, masks, W):
    F_, M = w4.shape[1], p2.shape[1]
    args = (p2, w2, s2, w3, s3, w4, s4, masks)
    return pl.pallas_call(
        functools.partial(_chain_b_kernel, W=W),
        out_shape=jax.ShapeDtypeStruct((F_, M), jnp.bfloat16),
        grid=(1,),
        in_specs=[_bs_full(a.shape) for a in args],
        out_specs=_bs_full((F_, M)),
    )(*args)


def _run_chain_c(p6, w6, s6, w7, s7, w10, s10, csig, mwh, whs, gadd):
    F7, F10, M = w7.shape[0], w10.shape[0], p6.shape[1]
    args = (p6, w6, s6, w7, s7, w10, s10, csig, mwh, whs, gadd)
    return pl.pallas_call(
        _chain_c_kernel,
        out_shape=(jax.ShapeDtypeStruct((F7, M), jnp.float32),
                   jax.ShapeDtypeStruct((F10, M), jnp.bfloat16)),
        grid=(1,),
        in_specs=[_bs_full(a.shape) for a in args],
        out_specs=(_bs_full((F7, M)), _bs_full((F10, M))),
    )(*args)


def _run_chain_d(up, a5, w13a, w13b, s13, w14, s14, masks, csig, mwh, whs, gadd, W):
    F14, M = w14.shape[0], up.shape[1]
    args = (up, a5, w13a, w13b, s13, w14, s14, masks, csig, mwh, whs, gadd)
    return pl.pallas_call(
        functools.partial(_chain_d_kernel, W=W),
        out_shape=jax.ShapeDtypeStruct((F14, M), jnp.float32),
        grid=(1,),
        in_specs=[_bs_full(a.shape) for a in args],
        out_specs=_bs_full((F14, M)),
    )(*args)


# ----------------------------------------------------------------------------
# Deterministic parameter initialization (mirrors create_modules shapes)
# ----------------------------------------------------------------------------
def init_params(key, module_defs, in_channels):
    params = []
    output_filters = [in_channels]
    for i, md in enumerate(module_defs):
        filters = output_filters[-1]
        p = None
        if md['type'] == 'convolutional':
            bn = int(md['batch_normalize'])
            filters = int(md['filters'])
            k = int(md['size'])
            c_in = output_filters[-1]
            kk = jax.random.fold_in(key, i)
            k1, k2, k3, k4 = jax.random.split(kk, 4)
            w = jax.random.normal(k1, (filters, c_in, k, k), jnp.float32) / (c_in * k * k) ** 0.5
            if bn:
                p = dict(w=w,
                         gamma=1.0 + 0.1 * jax.random.normal(k2, (filters,), jnp.float32),
                         beta=0.05 * jax.random.normal(k3, (filters,), jnp.float32),
                         rm=0.05 * jax.random.normal(k4, (filters,), jnp.float32),
                         rv=jnp.ones((filters,), jnp.float32))
            else:
                p = dict(w=w, b=0.05 * jax.random.normal(k2, (filters,), jnp.float32))
        elif md['type'] == 'route':
            layers = [int(s) for s in md['layers'].split(',')]
            filters = sum(output_filters[1:][li] for li in layers)
        elif md['type'] == 'shortcut':
            filters = output_filters[1:][int(md['from'])]
        params.append(p)
        output_filters.append(filters)
    return params


# ----------------------------------------------------------------------------
# Darknet forward (inference path), specialised into the 4 fused chains
# ----------------------------------------------------------------------------
def darknet_forward(x, params, module_defs):
    assert [md['type'] for md in module_defs] == [
        'convolutional', 'maxpool', 'convolutional', 'convolutional', 'convolutional',
        'shortcut', 'convolutional', 'convolutional', 'yolo', 'route', 'convolutional',
        'upsample', 'route', 'convolutional', 'convolutional', 'yolo',
    ], 'forward is specialised to the synthetic config'   # TODO(synk): general chain fuser
    N, C0, H0, W0 = x.shape
    img_dim = H0

    # One-time relayout: NCHW -> channel-major (C, N*H*W); lanes carry spatial.
    x_cm = jnp.transpose(x, (1, 0, 2, 3)).reshape(C0, N * H0 * W0).astype(jnp.float32)

    fold = [(_fold_conv(params[i]) if params[i] is not None else None)
            for i in range(len(module_defs))]

    # ---- chain A: modules 0 (conv 3x3/s1) + 1 (maxpool 2/1) ------------------
    w0s, b0 = fold[0]
    a1 = _run_chain_a(x_cm, _w_taps(w0s), _col(b0), _tap_masks(1, H0, W0), N, H0, W0)
    C1 = w0s.shape[0]

    # ---- chain B: modules 2-5 -------------------------------------------------
    p2, H2, W2 = _im2col_s2(a1, C1, N, H0, W0)
    w2s, b2 = fold[2]
    w3s, b3 = fold[3]
    w4s, b4 = fold[4]
    masks8 = _tap_masks(N, H2, W2)
    a5 = _run_chain_b(p2, _w_flat(w2s), _col(b2), _w_flat(w3s), _col(b3),
                      _w_taps(w4s), _col(b4), masks8, W2)
    C5 = w4s.shape[0]

    # ---- chain C: modules 6-8 (+ module 10 for the upsample branch) -----------
    p6, H6, W6 = _im2col_s2(a5, C5, N, H2, W2)
    w6s, b6 = fold[6]
    w7s, b7 = fold[7]
    w10s, b10 = fold[10]
    csig1, mwh1, whs1, gadd1, A1, D1 = _yolo_consts(module_defs[8], img_dim, H6, N)
    head1_cm, a10 = _run_chain_c(p6, _w_flat(w6s), _col(b6), _w_flat(w7s), _col(b7),
                                 _w_flat(w10s), _col(b10), csig1, mwh1, whs1, gadd1)
    C10 = w10s.shape[0]

    # ---- chain D: modules 12-15 (route 12 via split-K, no concat) -------------
    up = _upsample2(a10, C10, N, H6, W6)
    w13s, b13 = fold[13]
    w14s, b14 = fold[14]
    w13a, w13b = w13s[:, :C10], w13s[:, C10:]
    csig2, mwh2, whs2, gadd2, A2, D2 = _yolo_consts(module_defs[15], img_dim, H2, N)
    head2_cm = _run_chain_d(up, a5, _w_taps(w13a), _w_taps(w13b), _col(b13),
                            _w_flat(w14s), _col(b14), masks8,
                            csig2, mwh2, whs2, gadd2, W2)

    # ---- assemble YOLO heads: (A*D, N*g*g) -> (N, A*g*g, D), concat -----------
    def to_head(dec, A, D, g):
        return dec.reshape(A, D, N, g * g).transpose(2, 0, 3, 1).reshape(N, A * g * g, D)

    return jnp.concatenate([to_head(head1_cm, A1, D1, H6),
                            to_head(head2_cm, A2, D2, H2)], axis=1)


# ----------------------------------------------------------------------------
# Pure-JAX f32 reference (mirrors the PyTorch Darknet.forward, eval mode)
# ----------------------------------------------------------------------------
def _ref_yolo_decode(feat, md, img_dim):
    N, g = feat.shape[0], feat.shape[2]
    anchors, num_classes, A, D, stride = _parse_yolo(md, img_dim, g)
    pred = feat.reshape(N, A, D, g, g).transpose(0, 1, 3, 4, 2)
    xs, ys = jax.nn.sigmoid(pred[..., 0]), jax.nn.sigmoid(pred[..., 1])
    ws, hs = pred[..., 2], pred[..., 3]
    conf, cls = jax.nn.sigmoid(pred[..., 4]), jax.nn.sigmoid(pred[..., 5:])
    gx = jnp.arange(g, dtype=jnp.float32).reshape(1, 1, 1, g)
    gy = jnp.arange(g, dtype=jnp.float32).reshape(1, 1, g, 1)
    anc = jnp.asarray(anchors, jnp.float32) / stride
    aw, ah = anc[:, 0].reshape(1, A, 1, 1), anc[:, 1].reshape(1, A, 1, 1)
    boxes = jnp.stack([(xs + gx) * stride, (ys + gy) * stride,
                       jnp.exp(ws) * aw * stride, jnp.exp(hs) * ah * stride], axis=-1)
    return jnp.concatenate([boxes.reshape(N, -1, 4), conf.reshape(N, -1, 1),
                            cls.reshape(N, -1, num_classes)], axis=-1)


def reference_forward(x, params, module_defs):
    img_dim = x.shape[2]
    layer_outputs, yolo_outputs = [], []
    h = x
    for i, md in enumerate(module_defs):
        t = md['type']
        if t == 'convolutional':
            w_s, b = _fold_conv(params[i])
            w_s = w_s.astype(jnp.bfloat16).astype(jnp.float32)   # same rounded weights as the kernels
            k, s = int(md['size']), int(md['stride'])
            pad = (k - 1) // 2
            h = lax.conv_general_dilated(h, w_s, (s, s), [(pad, pad), (pad, pad)],
                                         dimension_numbers=('NCHW', 'OIHW', 'NCHW'))
            h = _leaky(h + b.reshape(1, -1, 1, 1))                # LeakyReLU even for 'linear' (quirk)
        elif t == 'maxpool':
            hp = jnp.pad(h, ((0, 0), (0, 0), (0, 1), (0, 1)))     # ZeroPad2d((0,1,0,1))
            h = lax.reduce_window(hp, -jnp.inf, lax.max, (1, 1, 2, 2), (1, 1, 1, 1), 'VALID')
        elif t == 'upsample':
            s = int(md['stride'])
            h = jnp.repeat(jnp.repeat(h, s, axis=2), s, axis=3)
        elif t == 'route':
            h = jnp.concatenate([layer_outputs[int(l)] for l in md['layers'].split(',')], axis=1)
        elif t == 'shortcut':
            h = layer_outputs[-1] + layer_outputs[int(md['from'])]
        elif t == 'yolo':
            h = _ref_yolo_decode(h, md, img_dim)
            yolo_outputs.append(h)
        layer_outputs.append(h)
    return jnp.concatenate(yolo_outputs, axis=1)


# ----------------------------------------------------------------------------
if __name__ == '__main__':
    key = jax.random.PRNGKey(0)
    kx, kp = jax.random.split(key)

    in_channels = int(HYPERPARAMS['channels'])
    img_size = int(HYPERPARAMS['height'])
    x = jax.random.normal(kx, (2, in_channels, img_size, img_size), jnp.float32)
    params = init_params(kp, MODULE_DEFS, in_channels)

    fwd = jax.jit(lambda xx, pp: darknet_forward(xx, pp, MODULE_DEFS))
    out = jax.block_until_ready(fwd(x, params))

    # Two YOLO heads: 2 anchors * (4*4 + 8*8) cells = 160 boxes, 5 + 3 classes = 8 fields.
    assert out.shape == (2, 160, 8), out.shape
    assert bool(jnp.all(jnp.isfinite(out)))

    # Validate against a pure-JAX f32 reference of the same (BN-folded) network.
    ref = jax.jit(lambda xx, pp: reference_forward(xx, pp, MODULE_DEFS))(x, params)
    rel = float(jnp.max(jnp.abs(out - ref) / (1.0 + jnp.abs(ref))))
    assert rel < 0.1, f'mismatch vs reference: {rel}'

    print("KERNEL_OK")
</pallas_src>

<mosaic_0001>
module attributes {stable_mosaic.version = 11 : i64} {
  func.func @_chain_a_kernel(%arg0: i32, %arg1: memref<4x256xf32, #tpu.memory_space<vmem>>, %arg2: memref<9x8x4xbf16, #tpu.memory_space<vmem>>, %arg3: memref<8x1xf32, #tpu.memory_space<vmem>>, %arg4: memref<9x1x256xf32, #tpu.memory_space<vmem>>, %arg5: memref<8x256xbf16, #tpu.memory_space<vmem>>) attributes {dimension_semantics = [#tpu.dimension_semantics<parallel>], iteration_bounds = array<i64: 2>, scalar_prefetch = 0 : i64, scratch_operands = 0 : i64, tpu.core_type = #tpu.core_type<tc>, window_params = [{transform_indices = @transform_0, window_bounds = array<i64: 4, 256>}, {pipeline_mode = #tpu.pipeline_mode<synchronous>, transform_indices = @transform_1, window_bounds = array<i64: 9, 8, 4>}, {pipeline_mode = #tpu.pipeline_mode<synchronous>, transform_indices = @transform_2, window_bounds = array<i64: 8, 1>}, {pipeline_mode = #tpu.pipeline_mode<synchronous>, transform_indices = @transform_3, window_bounds = array<i64: 9, 1, 256>}, {transform_indices = @transform_4, window_bounds = array<i64: 8, 256>}]} {
    %c0 = arith.constant 0 : index
    %c0_0 = arith.constant 0 : index
    %0 = vector.load %arg1[%c0, %c0_0] : memref<4x256xf32, #tpu.memory_space<vmem>>, vector<4x256xf32>
    %c0_1 = arith.constant 0 : index
    %c0_2 = arith.constant 0 : index
    %c0_3 = arith.constant 0 : index
    %1 = vector.load %arg4[%c0_1, %c0_2, %c0_3] : memref<9x1x256xf32, #tpu.memory_space<vmem>>, vector<1x1x256xf32>
    %2 = vector.shape_cast %1 : vector<1x1x256xf32> to vector<1x256xf32>
    %c17_i32 = arith.constant 17 : i32
    %3 = tpu.dynamic_rotate %0 by %c17_i32 dim 1 : vector<4x256xf32>, i32 -> vector<4x256xf32>
    %4 = vector.broadcast %2 : vector<1x256xf32> to vector<4x256xf32>
    %5 = arith.mulf %3, %4 : vector<4x256xf32>
    %c0_4 = arith.constant 0 : index
    %c0_5 = arith.constant 0 : index
    %c0_6 = arith.constant 0 : index
    %6 = vector.load %arg2[%c0_4, %c0_5, %c0_6] : memref<9x8x4xbf16, #tpu.memory_space<vmem>>, vector<1x8x4xbf16>
    %7 = vector.shape_cast %6 : vector<1x8x4xbf16> to vector<8x4xbf16>
    %8 = arith.truncf %5 : vector<4x256xf32> to vector<4x256xbf16>
    %cst = arith.constant dense<0.000000e+00> : vector<8x256xf32>
    %9 = tpu.matmul %7, %8, %cst {dimension_numbers = #tpu.dot_dimension_numbers<[1], [0], [0], [1], [0, 0, 1, 1], [], []>} : vector<8x4xbf16>, vector<4x256xbf16>, vector<8x256xf32> -> vector<8x256xf32>
    %c1 = arith.constant 1 : index
    %c0_7 = arith.constant 0 : index
    %c0_8 = arith.constant 0 : index
    %10 = vector.load %arg4[%c1, %c0_7, %c0_8] : memref<9x1x256xf32, #tpu.memory_space<vmem>>, vector<1x1x256xf32>
    %11 = vector.shape_cast %10 : vector<1x1x256xf32> to vector<1x256xf32>
    %c16_i32 = arith.constant 16 : i32
    %12 = tpu.dynamic_rotate %0 by %c16_i32 dim 1 : vector<4x256xf32>, i32 -> vector<4x256xf32>
    %13 = vector.broadcast %11 : vector<1x256xf32> to vector<4x256xf32>
    %14 = arith.mulf %12, %13 : vector<4x256xf32>
    %c1_9 = arith.constant 1 : index
    %c0_10 = arith.constant 0 : index
    %c0_11 = arith.constant 0 : index
    %15 = vector.load %arg2[%c1_9, %c0_10, %c0_11] : memref<9x8x4xbf16, #tpu.memory_space<vmem>>, vector<1x8x4xbf16>
    %16 = vector.shape_cast %15 : vector<1x8x4xbf16> to vector<8x4xbf16>
    %17 = arith.truncf %14 : vector<4x256xf32> to vector<4x256xbf16>
    %cst_12 = arith.constant dense<0.000000e+00> : vector<8x256xf32>
    %18 = tpu.matmul %16, %17, %cst_12 {dimension_numbers = #tpu.dot_dimension_numbers<[1], [0], [0], [1], [0, 0, 1, 1], [], []>} : vector<8x4xbf16>, vector<4x256xbf16>, vector<8x256xf32> -> vector<8x256xf32>
    %19 = arith.addf %9, %18 : vector<8x256xf32>
    %c2 = arith.constant 2 : index
    %c0_13 = arith.constant 0 : index
    %c0_14 = arith.constant 0 : index
    %20 = vector.load %arg4[%c2, %c0_13, %c0_14] : memref<9x1x256xf32, #tpu.memory_space<vmem>>, vector<1x1x256xf32>
    %21 = vector.shape_cast %20 : vector<1x1x256xf32> to vector<1x256xf32>
    %c15_i32 = arith.constant 15 : i32
    %22 = tpu.dynamic_rotate %0 by %c15_i32 dim 1 : vector<4x256xf32>, i32 -> vector<4x256xf32>
    %23 = vector.broadcast %21 : vector<1x256xf32> to vector<4x256xf32>
    %24 = arith.mulf %22, %23 : vector<4x256xf32>
    %c2_15 = arith.constant 2 : index
    %c0_16 = arith.constant 0 : index
    %c0_17 = arith.constant 0 : index
    %25 = vector.load %arg2[%c2_15, %c0_16, %c0_17] : memref<9x8x4xbf16, #tpu.memory_space<vmem>>, vector<1x8x4xbf16>
    %26 = vector.shape_cast %25 : vector<1x8x4xbf16> to vector<8x4xbf16>
    %27 = arith.truncf %24 : vector<4x256xf32> to vector<4x256xbf16>
    %cst_18 = arith.constant dense<0.000000e+00> : vector<8x256xf32>
    %28 = tpu.matmul %26, %27, %cst_18 {dimension_numbers = #tpu.dot_dimension_numbers<[1], [0], [0], [1], [0, 0, 1, 1], [], []>} : vector<8x4xbf16>, vector<4x256xbf16>, vector<8x256xf32> -> vector<8x256xf32>
    %29 = arith.addf %19, %28 : vector<8x256xf32>
    %c3 = arith.constant 3 : index
    %c0_19 = arith.constant 0 : index
    %c0_20 = arith.constant 0 : index
    %30 = vector.load %arg4[%c3, %c0_19, %c0_20] : memref<9x1x256xf32, #tpu.memory_space<vmem>>, vector<1x1x256xf32>
    %31 = vector.shape_cast %30 : vector<1x1x256xf32> to vector<1x256xf32>
    %c1_i32 = arith.constant 1 : i32
    %32 = tpu.dynamic_rotate %0 by %c1_i32 dim 1 : vector<4x256xf32>, i32 -> vector<4x256xf32>
    %33 = vector.broadcast %31 : vector<1x256xf32> to vector<4x256xf32>
    %34 = arith.mulf %32, %33 : vector<4x256xf32>
    %c3_21 = arith.constant 3 : index
    %c0_22 = arith.constant 0 : index
    %c0_23 = arith.constant 0 : index
    %35 = vector.load %arg2[%c3_21, %c0_22, %c0_23] : memref<9x8x4xbf16, #tpu.memory_space<vmem>>, vector<1x8x4xbf16>
    %36 = vector.shape_cast %35 : vector<1x8x4xbf16> to vector<8x4xbf16>
    %37 = arith.truncf %34 : vector<4x256xf32> to vector<4x256xbf16>
    %cst_24 = arith.constant dense<0.000000e+00> : vector<8x256xf32>
    %38 = tpu.matmul %36, %37, %cst_24 {dimension_numbers = #tpu.dot_dimension_numbers<[1], [0], [0], [1], [0, 0, 1, 1], [], []>} : vector<8x4xbf16>, vector<4x256xbf16>, vector<8x256xf32> -> vector<8x256xf32>
    %39 = arith.addf %29, %38 : vector<8x256xf32>
    %c4 = arith.constant 4 : index
    %c0_25 = arith.constant 0 : index
    %c0_26 = arith.constant 0 : index
    %40 = vector.load %arg2[%c4, %c0_25, %c0_26] : memref<9x8x4xbf16, #tpu.memory_space<vmem>>, vector<1x8x4xbf16>
    %41 = vector.shape_cast %40 : vector<1x8x4xbf16> to vector<8x4xbf16>
    %42 = arith.truncf %0 : vector<4x256xf32> to vector<4x256xbf16>
    %cst_27 = arith.constant dense<0.000000e+00> : vector<8x256xf32>
    %43 = tpu.matmul %41, %42, %cst_27 {dimension_numbers = #tpu.dot_dimension_numbers<[1], [0], [0], [1], [0, 0, 1, 1], [], []>} : vector<8x4xbf16>, vector<4x256xbf16>, vector<8x256xf32> -> vector<8x256xf32>
    %44 = arith.addf %39, %43 : vector<8x256xf32>
    %c5 = arith.constant 5 : index
    %c0_28 = arith.constant 0 : index
    %c0_29 = arith.constant 0 : index
    %45 = vector.load %arg4[%c5, %c0_28, %c0_29] : memref<9x1x256xf32, #tpu.memory_space<vmem>>, vector<1x1x256xf32>
    %46 = vector.shape_cast %45 : vector<1x1x256xf32> to vector<1x256xf32>
    %c255_i32 = arith.constant 255 : i32
    %47 = tpu.dynamic_rotate %0 by %c255_i32 dim 1 : vector<4x256xf32>, i32 -> vector<4x256xf32>
    %48 = vector.broadcast %46 : vector<1x256xf32> to vector<4x256xf32>
    %49 = arith.mulf %47, %48 : vector<4x256xf32>
    %c5_30 = arith.constant 5 : index
    %c0_31 = arith.constant 0 : index
    %c0_32 = arith.constant 0 : index
    %50 = vector.load %arg2[%c5_30, %c0_31, %c0_32] : memref<9x8x4xbf16, #tpu.memory_space<vmem>>, vector<1x8x4xbf16>
    %51 = vector.shape_cast %50 : vector<1x8x4xbf16> to vector<8x4xbf16>
    %52 = arith.truncf %49 : vector<4x256xf32> to vector<4x256xbf16>
    %cst_33 = arith.constant dense<0.000000e+00> : vector<8x256xf32>
    %53 = tpu.matmul %51, %52, %cst_33 {dimension_numbers = #tpu.dot_dimension_numbers<[1], [0], [0], [1], [0, 0, 1, 1], [], []>} : vector<8x4xbf16>, vector<4x256xbf16>, vector<8x256xf32> -> vector<8x256xf32>
    %54 = arith.addf %44, %53 : vector<8x256xf32>
    %c6 = arith.constant 6 : index
    %c0_34 = arith.constant 0 : index
    %c0_35 = arith.constant 0 : index
    %55 = vector.load %arg4[%c6, %c0_34, %c0_35] : memref<9x1x256xf32, #tpu.memory_space<vmem>>, vector<1x1x256xf32>
    %56 = vector.shape_cast %55 : vector<1x1x256xf32> to vector<1x256xf32>
    %c241_i32 = arith.constant 241 : i32
    %57 = tpu.dynamic_rotate %0 by %c241_i32 dim 1 : vector<4x256xf32>, i32 -> vector<4x256xf32>
    %58 = vector.broadcast %56 : vector<1x256xf32> to vector<4x256xf32>
    %59 = arith.mulf %57, %58 : vector<4x256xf32>
    %c6_36 = arith.constant 6 : index
    %c0_37 = arith.constant 0 : index
    %c0_38 = arith.constant 0 : index
    %60 = vector.load %arg2[%c6_36, %c0_37, %c0_38] : memref<9x8x4xbf16, #tpu.memory_space<vmem>>, vector<1x8x4xbf16>
    %61 = vector.shape_cast %60 : vector<1x8x4xbf16> to vector<8x4xbf16>
    %62 = arith.truncf %59 : vector<4x256xf32> to vector<4x256xbf16>
    %cst_39 = arith.constant dense<0.000000e+00> : vector<8x256xf32>
    %63 = tpu.matmul %61, %62, %cst_39 {dimension_numbers = #tpu.dot_dimension_numbers<[1], [0], [0], [1], [0, 0, 1, 1], [], []>} : vector<8x4xbf16>, vector<4x256xbf16>, vector<8x256xf32> -> vector<8x256xf32>
    %64 = arith.addf %54, %63 : vector<8x256xf32>
    %c7 = arith.constant 7 : index
    %c0_40 = arith.constant 0 : index
    %c0_41 = arith.constant 0 : index
    %65 = vector.load %arg4[%c7, %c0_40, %c0_41] : memref<9x1x256xf32, #tpu.memory_space<vmem>>, vector<1x1x256xf32>
    %66 = vector.shape_cast %65 : vector<1x1x256xf32> to vector<1x256xf32>
    %c240_i32 = arith.constant 240 : i32
    %67 = tpu.dynamic_rotate %0 by %c240_i32 dim 1 : vector<4x256xf32>, i32 -> vector<4x256xf32>
    %68 = vector.broadcast %66 : vector<1x256xf32> to vector<4x256xf32>
    %69 = arith.mulf %67, %68 : vector<4x256xf32>
    %c7_42 = arith.constant 7 : index
    %c0_43 = arith.constant 0 : index
    %c0_44 = arith.constant 0 : index
    %70 = vector.load %arg2[%c7_42, %c0_43, %c0_44] : memref<9x8x4xbf16, #tpu.memory_space<vmem>>, vector<1x8x4xbf16>
    %71 = vector.shape_cast %70 : vector<1x8x4xbf16> to vector<8x4xbf16>
    %72 = arith.truncf %69 : vector<4x256xf32> to vector<4x256xbf16>
    %cst_45 = arith.constant dense<0.000000e+00> : vector<8x256xf32>
    %73 = tpu.matmul %71, %72, %cst_45 {dimension_numbers = #tpu.dot_dimension_numbers<[1], [0], [0], [1], [0, 0, 1, 1], [], []>} : vector<8x4xbf16>, vector<4x256xbf16>, vector<8x256xf32> -> vector<8x256xf32>
    %74 = arith.addf %64, %73 : vector<8x256xf32>
    %c8 = arith.constant 8 : index
    %c0_46 = arith.constant 0 : index
    %c0_47 = arith.constant 0 : index
    %75 = vector.load %arg4[%c8, %c0_46, %c0_47] : memref<9x1x256xf32, #tpu.memory_space<vmem>>, vector<1x1x256xf32>
    %76 = vector.shape_cast %75 : vector<1x1x256xf32> to vector<1x256xf32>
    %c239_i32 = arith.constant 239 : i32
    %77 = tpu.dynamic_rotate %0 by %c239_i32 dim 1 : vector<4x256xf32>, i32 -> vector<4x256xf32>
    %78 = vector.broadcast %76 : vector<1x256xf32> to vector<4x256xf32>
    %79 = arith.mulf %77, %78 : vector<4x256xf32>
    %c8_48 = arith.constant 8 : index
    %c0_49 = arith.constant 0 : index
    %c0_50 = arith.constant 0 : index
    %80 = vector.load %arg2[%c8_48, %c0_49, %c0_50] : memref<9x8x4xbf16, #tpu.memory_space<vmem>>, vector<1x8x4xbf16>
    %81 = vector.shape_cast %80 : vector<1x8x4xbf16> to vector<8x4xbf16>
    %82 = arith.truncf %79 : vector<4x256xf32> to vector<4x256xbf16>
    %cst_51 = arith.constant dense<0.000000e+00> : vector<8x256xf32>
    %83 = tpu.matmul %81, %82, %cst_51 {dimension_numbers = #tpu.dot_dimension_numbers<[1], [0], [0], [1], [0, 0, 1, 1], [], []>} : vector<8x4xbf16>, vector<4x256xbf16>, vector<8x256xf32> -> vector<8x256xf32>
    %84 = arith.addf %74, %83 : vector<8x256xf32>
    %c0_52 = arith.constant 0 : index
    %c0_53 = arith.constant 0 : index
    %85 = vector.load %arg3[%c0_52, %c0_53] : memref<8x1xf32, #tpu.memory_space<vmem>>, vector<8x1xf32>
    %86 = vector.broadcast %85 : vector<8x1xf32> to vector<8x256xf32>
    %87 = arith.addf %84, %86 : vector<8x256xf32>
    %cst_54 = arith.constant 1.000000e-01 : f32
    %88 = vector.broadcast %cst_54 : f32 to vector<8x256xf32>
    %89 = arith.mulf %88, %87 : vector<8x256xf32>
    %90 = arith.maximumf %87, %89 : vector<8x256xf32>
    %c5_55 = arith.constant 5 : index
    %c0_56 = arith.constant 0 : index
    %c0_57 = arith.constant 0 : index
    %91 = vector.load %arg4[%c5_55, %c0_56, %c0_57] : memref<9x1x256xf32, #tpu.memory_space<vmem>>, vector<1x1x256xf32>
    %92 = vector.shape_cast %91 : vector<1x1x256xf32> to vector<1x256xf32>
    %c255_i32_58 = arith.constant 255 : i32
    %93 = tpu.dynamic_rotate %90 by %c255_i32_58 dim 1 : vector<8x256xf32>, i32 -> vector<8x256xf32>
    %94 = vector.broadcast %92 : vector<1x256xf32> to vector<8x256xf32>
    %95 = arith.mulf %93, %94 : vector<8x256xf32>
    %c7_59 = arith.constant 7 : index
    %c0_60 = arith.constant 0 : index
    %c0_61 = arith.constant 0 : index
    %96 = vector.load %arg4[%c7_59, %c0_60, %c0_61] : memref<9x1x256xf32, #tpu.memory_space<vmem>>, vector<1x1x256xf32>
    %97 = vector.shape_cast %96 : vector<1x1x256xf32> to vector<1x256xf32>
    %c240_i32_62 = arith.constant 240 : i32
    %98 = tpu.dynamic_rotate %90 by %c240_i32_62 dim 1 : vector<8x256xf32>, i32 -> vector<8x256xf32>
    %99 = vector.broadcast %97 : vector<1x256xf32> to vector<8x256xf32>
    %100 = arith.mulf %98, %99 : vector<8x256xf32>
    %c8_63 = arith.constant 8 : index
    %c0_64 = arith.constant 0 : index
    %c0_65 = arith.constant 0 : index
    %101 = vector.load %arg4[%c8_63, %c0_64, %c0_65] : memref<9x1x256xf32, #tpu.memory_space<vmem>>, vector<1x1x256xf32>
    %102 = vector.shape_cast %101 : vector<1x1x256xf32> to vector<1x256xf32>
    %c239_i32_66 = arith.constant 239 : i32
    %103 = tpu.dynamic_rotate %90 by %c239_i32_66 dim 1 : vector<8x256xf32>, i32 -> vector<8x256xf32>
    %104 = vector.broadcast %102 : vector<1x256xf32> to vector<8x256xf32>
    %105 = arith.mulf %103, %104 : vector<8x256xf32>
    %106 = arith.maximumf %90, %95 : vector<8x256xf32>
    %107 = arith.maximumf %100, %105 : vector<8x256xf32>
    %108 = arith.maximumf %106, %107 : vector<8x256xf32>
    %109 = arith.truncf %108 : vector<8x256xf32> to vector<8x256xbf16>
    %c0_67 = arith.constant 0 : index
    %c0_68 = arith.constant 0 : index
    %110 = vector.load %arg5[%c0_67, %c0_68] : memref<8x256xbf16, #tpu.memory_space<vmem>>, vector<8x256xbf16>
    tpu.vector_store %arg5[%c0_67, %c0_68], %109 {strides = array<i32>} : memref<8x256xbf16, #tpu.memory_space<vmem>>, vector<8x256xbf16>,
    return
  }
  func.func @transform_0(%arg0: i32) -> (i32, i32) {
    %c0_i32 = arith.constant 0 : i32
    %c0_i32_0 = arith.constant 0 : i32
    return %c0_i32, %arg0 : i32, i32
  }
  func.func @transform_1(%arg0: i32) -> (i32, i32, i32) {
    %c0_i32 = arith.constant 0 : i32
    %c0_i32_0 = arith.constant 0 : i32
    %c0_i32_1 = arith.constant 0 : i32
    %c0_i32_2 = arith.constant 0 : i32
    return %c0_i32, %c0_i32_0, %c0_i32_1 : i32, i32, i32
  }
  func.func @transform_2(%arg0: i32) -> (i32, i32) {
    %c0_i32 = arith.constant 0 : i32
    %c0_i32_0 = arith.constant 0 : i32
    %c0_i32_1 = arith.constant 0 : i32
    return %c0_i32, %c0_i32_0 : i32, i32
  }
  func.func @transform_3(%arg0: i32) -> (i32, i32, i32) {
    %c0_i32 = arith.constant 0 : i32
    %c0_i32_0 = arith.constant 0 : i32
    %c0_i32_1 = arith.constant 0 : i32
    %c0_i32_2 = arith.constant 0 : i32
    return %c0_i32, %c0_i32_0, %c0_i32_1 : i32, i32, i32
  }
  func.func @transform_4(%arg0: i32) -> (i32, i32) {
    %c0_i32 = arith.constant 0 : i32
    %c0_i32_0 = arith.constant 0 : i32
    return %c0_i32, %arg0 : i32, i32
  }
}

module attributes {stable_mosaic.version = 11 : i64} {
  func.func @_chain_b_kernel(%arg0: i32, %arg1: memref<72x128xbf16, #tpu.memory_space<vmem>>, %arg2: memref<16x72xbf16, #tpu.memory_space<vmem>>, %arg3: memref<16x1xf32, #tpu.memory_space<vmem>>, %arg4: memref<8x16xbf16, #tpu.memory_space<vmem>>, %arg5: memref<8x1xf32, #tpu.memory_space<vmem>>, %arg6: memref<9x16x8xbf16, #tpu.memory_space<vmem>>, %arg7: memref<16x1xf32, #tpu.memory_space<vmem>>, %arg8: memref<9x1x128xf32, #tpu.memory_space<vmem>>, %arg9: memref<16x128xbf16, #tpu.memory_space<vmem>>) attributes {dimension_semantics = [#tpu.dimension_semantics<arbitrary>], iteration_bounds = array<i64: 1>, scalar_prefetch = 0 : i64, scratch_operands = 0 : i64, tpu.core_type = #tpu.core_type<tc>, window_params = [{pipeline_mode = #tpu.pipeline_mode<synchronous>, transform_indices = @transform_0, window_bounds = array<i64: 72, 128>}, {pipeline_mode = #tpu.pipeline_mode<synchronous>, transform_indices = @transform_1, window_bounds = array<i64: 16, 72>}, {pipeline_mode = #tpu.pipeline_mode<synchronous>, transform_indices = @transform_2, window_bounds = array<i64: 16, 1>}, {pipeline_mode = #tpu.pipeline_mode<synchronous>, transform_indices = @transform_3, window_bounds = array<i64: 8, 16>}, {pipeline_mode = #tpu.pipeline_mode<synchronous>, transform_indices = @transform_4, window_bounds = array<i64: 8, 1>}, {pipeline_mode = #tpu.pipeline_mode<synchronous>, transform_indices = @transform_5, window_bounds = array<i64: 9, 16, 8>}, {pipeline_mode = #tpu.pipeline_mode<synchronous>, transform_indices = @transform_6, window_bounds = array<i64: 16, 1>}, {pipeline_mode = #tpu.pipeline_mode<synchronous>, transform_indices = @transform_7, window_bounds = array<i64: 9, 1, 128>}, {pipeline_mode = #tpu.pipeline_mode<synchronous>, transform_indices = @transform_8, window_bounds = array<i64: 16, 128>}]} {
    %c0 = arith.constant 0 : index
    %c0_0 = arith.constant 0 : index
    %0 = vector.load %arg2[%c0, %c0_0] : memref<16x72xbf16, #tpu.memory_space<vmem>>, vector<16x72xbf16>
    %c0_1 = arith.constant 0 : index
    %c0_2 = arith.constant 0 : index
    %1 = vector.load %arg1[%c0_1, %c0_2] : memref<72x128xbf16, #tpu.memory_space<vmem>>, vector<72x128xbf16>
    %cst = arith.constant dense<0.000000e+00> : vector<16x128xf32>
    %2 = tpu.matmul %0, %1, %cst {dimension_numbers = #tpu.dot_dimension_numbers<[1], [0], [0], [1], [0, 0, 1, 1], [], []>} : vector<16x72xbf16>, vector<72x128xbf16>, vector<16x128xf32> -> vector<16x128xf32>
    %c0_3 = arith.constant 0 : index
    %c0_4 = arith.constant 0 : index
    %3 = vector.load %arg3[%c0_3, %c0_4] : memref<16x1xf32, #tpu.memory_space<vmem>>, vector<16x1xf32>
    %4 = vector.broadcast %3 : vector<16x1xf32> to vector<16x128xf32>
    %5 = arith.addf %2, %4 : vector<16x128xf32>
    %cst_5 = arith.constant 1.000000e-01 : f32
    %6 = vector.broadcast %cst_5 : f32 to vector<16x128xf32>
    %7 = arith.mulf %6, %5 : vector<16x128xf32>
    %8 = arith.maximumf %5, %7 : vector<16x128xf32>
    %c0_6 = arith.constant 0 : index
    %c0_7 = arith.constant 0 : index
    %9 = vector.load %arg4[%c0_6, %c0_7] : memref<8x16xbf16, #tpu.memory_space<vmem>>, vector<8x16xbf16>
    %10 = arith.truncf %8 : vector<16x128xf32> to vector<16x128xbf16>
    %cst_8 = arith.constant dense<0.000000e+00> : vector<8x128xf32>
    %11 = tpu.matmul %9, %10, %cst_8 {dimension_numbers = #tpu.dot_dimension_numbers<[1], [0], [0], [1], [0, 0, 1, 1], [], []>} : vector<8x16xbf16>, vector<16x128xbf16>, vector<8x128xf32> -> vector<8x128xf32>
    %c0_9 = arith.constant 0 : index
    %c0_10 = arith.constant 0 : index
    %12 = vector.load %arg5[%c0_9, %c0_10] : memref<8x1xf32, #tpu.memory_space<vmem>>, vector<8x1xf32>
    %13 = vector.broadcast %12 : vector<8x1xf32> to vector<8x128xf32>
    %14 = arith.addf %11, %13 : vector<8x128xf32>
    %cst_11 = arith.constant 1.000000e-01 : f32
    %15 = vector.broadcast %cst_11 : f32 to vector<8x128xf32>
    %16 = arith.mulf %15, %14 : vector<8x128xf32>
    %17 = arith.maximumf %14, %16 : vector<8x128xf32>
    %c0_12 = arith.constant 0 : index
    %c0_13 = arith.constant 0 : index
    %c0_14 = arith.constant 0 : index
    %18 = vector.load %arg8[%c0_12, %c0_13, %c0_14] : memref<9x1x128xf32, #tpu.memory_space<vmem>>, vector<1x1x128xf32>
    %19 = vector.shape_cast %18 : vector<1x1x128xf32> to vector<1x128xf32>
    %c9_i32 = arith.constant 9 : i32
    %20 = tpu.dynamic_rotate %17 by %c9_i32 dim 1 : vector<8x128xf32>, i32 -> vector<8x128xf32>
    %21 = vector.broadcast %19 : vector<1x128xf32> to vector<8x128xf32>
    %22 = arith.mulf %20, %21 : vector<8x128xf32>
    %c0_15 = arith.constant 0 : index
    %c0_16 = arith.constant 0 : index
    %c0_17 = arith.constant 0 : index
    %23 = vector.load %arg6[%c0_15, %c0_16, %c0_17] : memref<9x16x8xbf16, #tpu.memory_space<vmem>>, vector<1x16x8xbf16>
    %24 = vector.shape_cast %23 : vector<1x16x8xbf16> to vector<16x8xbf16>
    %25 = arith.truncf %22 : vector<8x128xf32> to vector<8x128xbf16>
    %cst_18 = arith.constant dense<0.000000e+00> : vector<16x128xf32>
    %26 = tpu.matmul %24, %25, %cst_18 {dimension_numbers = #tpu.dot_dimension_numbers<[1], [0], [0], [1], [0, 0, 1, 1], [], []>} : vector<16x8xbf16>, vector<8x128xbf16>, vector<16x128xf32> -> vector<16x128xf32>
    %c1 = arith.constant 1 : index
    %c0_19 = arith.constant 0 : index
    %c0_20 = arith.constant 0 : index
    %27 = vector.load %arg8[%c1, %c0_19, %c0_20] : memref<9x1x128xf32, #tpu.memory_space<vmem>>, vector<1x1x128xf32>
    %28 = vector.shape_cast %27 : vector<1x1x128xf32> to vector<1x128xf32>
    %c8_i32 = arith.constant 8 : i32
    %29 = tpu.dynamic_rotate %17 by %c8_i32 dim 1 : vector<8x128xf32>, i32 -> vector<8x128xf32>
    %30 = vector.broadcast %28 : vector<1x128xf32> to vector<8x128xf32>
    %31 = arith.mulf %29, %30 : vector<8x128xf32>
    %c1_21 = arith.constant 1 : index
    %c0_22 = arith.constant 0 : index
    %c0_23 = arith.constant 0 : index
    %32 = vector.load %arg6[%c1_21, %c0_22, %c0_23] : memref<9x16x8xbf16, #tpu.memory_space<vmem>>, vector<1x16x8xbf16>
    %33 = vector.shape_cast %32 : vector<1x16x8xbf16> to vector<16x8xbf16>
    %34 = arith.truncf %31 : vector<8x128xf32> to vector<8x128xbf16>
    %cst_24 = arith.constant dense<0.000000e+00> : vector<16x128xf32>
    %35 = tpu.matmul %33, %34, %cst_24 {dimension_numbers = #tpu.dot_dimension_numbers<[1], [0], [0], [1], [0, 0, 1, 1], [], []>} : vector<16x8xbf16>, vector<8x128xbf16>, vector<16x128xf32> -> vector<16x128xf32>
    %36 = arith.addf %26, %35 : vector<16x128xf32>
    %c2 = arith.constant 2 : index
    %c0_25 = arith.constant 0 : index
    %c0_26 = arith.constant 0 : index
    %37 = vector.load %arg8[%c2, %c0_25, %c0_26] : memref<9x1x128xf32, #tpu.memory_space<vmem>>, vector<1x1x128xf32>
    %38 = vector.shape_cast %37 : vector<1x1x128xf32> to vector<1x128xf32>
    %c7_i32 = arith.constant 7 : i32
    %39 = tpu.dynamic_rotate %17 by %c7_i32 dim 1 : vector<8x128xf32>, i32 -> vector<8x128xf32>
    %40 = vector.broadcast %38 : vector<1x128xf32> to vector<8x128xf32>
    %41 = arith.mulf %39, %40 : vector<8x128xf32>
    %c2_27 = arith.constant 2 : index
    %c0_28 = arith.constant 0 : index
    %c0_29 = arith.constant 0 : index
    %42 = vector.load %arg6[%c2_27, %c0_28, %c0_29] : memref<9x16x8xbf16, #tpu.memory_space<vmem>>, vector<1x16x8xbf16>
    %43 = vector.shape_cast %42 : vector<1x16x8xbf16> to vector<16x8xbf16>
    %44 = arith.truncf %41 : vector<8x128xf32> to vector<8x128xbf16>
    %cst_30 = arith.constant dense<0.000000e+00> : vector<16x128xf32>
    %45 = tpu.matmul %43, %44, %cst_30 {dimension_numbers = #tpu.dot_dimension_numbers<[1], [0], [0], [1], [0, 0, 1, 1], [], []>} : vector<16x8xbf16>, vector<8x128xbf16>, vector<16x128xf32> -> vector<16x128xf32>
    %46 = arith.addf %36, %45 : vector<16x128xf32>
    %c3 = arith.constant 3 : index
    %c0_31 = arith.constant 0 : index
    %c0_32 = arith.constant 0 : index
    %47 = vector.load %arg8[%c3, %c0_31, %c0_32] : memref<9x1x128xf32, #tpu.memory_space<vmem>>, vector<1x1x128xf32>
    %48 = vector.shape_cast %47 : vector<1x1x128xf32> to vector<1x128xf32>
    %c1_i32 = arith.constant 1 : i32
    %49 = tpu.dynamic_rotate %17 by %c1_i32 dim 1 : vector<8x128xf32>, i32 -> vector<8x128xf32>
    %50 = vector.broadcast %48 : vector<1x128xf32> to vector<8x128xf32>
    %51 = arith.mulf %49, %50 : vector<8x128xf32>
    %c3_33 = arith.constant 3 : index
    %c0_34 = arith.constant 0 : index
    %c0_35 = arith.constant 0 : index
    %52 = vector.load %arg6[%c3_33, %c0_34, %c0_35] : memref<9x16x8xbf16, #tpu.memory_space<vmem>>, vector<1x16x8xbf16>
    %53 = vector.shape_cast %52 : vector<1x16x8xbf16> to vector<16x8xbf16>
    %54 = arith.truncf %51 : vector<8x128xf32> to vector<8x128xbf16>
    %cst_36 = arith.constant dense<0.000000e+00> : vector<16x128xf32>
    %55 = tpu.matmul %53, %54, %cst_36 {dimension_numbers = #tpu.dot_dimension_numbers<[1], [0], [0], [1], [0, 0, 1, 1], [], []>} : vector<16x8xbf16>, vector<8x128xbf16>, vector<16x128xf32> -> vector<16x128xf32>
    %56 = arith.addf %46, %55 : vector<16x128xf32>
    %c4 = arith.constant 4 : index
    %c0_37 = arith.constant 0 : index
    %c0_38 = arith.constant 0 : index
    %57 = vector.load %arg6[%c4, %c0_37, %c0_38] : memref<9x16x8xbf16, #tpu.memory_space<vmem>>, vector<1x16x8xbf16>
    %58 = vector.shape_cast %57 : vector<1x16x8xbf16> to vector<16x8xbf16>
    %59 = arith.truncf %17 : vector<8x128xf32> to vector<8x128xbf16>
    %cst_39 = arith.constant dense<0.000000e+00> : vector<16x128xf32>
    %60 = tpu.matmul %58, %59, %cst_39 {dimension_numbers = #tpu.dot_dimension_numbers<[1], [0], [0], [1], [0, 0, 1, 1], [], []>} : vector<16x8xbf16>, vector<8x128xbf16>, vector<16x128xf32> -> vector<16x128xf32>
    %61 = arith.addf %56, %60 : vector<16x128xf32>
    %c5 = arith.constant 5 : index
    %c0_40 = arith.constant 0 : index
    %c0_41 = arith.constant 0 : index
    %62 = vector.load %arg8[%c5, %c0_40, %c0_41] : memref<9x1x128xf32, #tpu.memory_space<vmem>>, vector<1x1x128xf32>
    %63 = vector.shape_cast %62 : vector<1x1x128xf32> to vector<1x128xf32>
    %c127_i32 = arith.constant 127 : i32
    %64 = tpu.dynamic_rotate %17 by %c127_i32 dim 1 : vector<8x128xf32>, i32 -> vector<8x128xf32>
    %65 = vector.broadcast %63 : vector<1x128xf32> to vector<8x128xf32>
    %66 = arith.mulf %64, %65 : vector<8x128xf32>
    %c5_42 = arith.constant 5 : index
    %c0_43 = arith.constant 0 : index
    %c0_44 = arith.constant 0 : index
    %67 = vector.load %arg6[%c5_42, %c0_43, %c0_44] : memref<9x16x8xbf16, #tpu.memory_space<vmem>>, vector<1x16x8xbf16>
    %68 = vector.shape_cast %67 : vector<1x16x8xbf16> to vector<16x8xbf16>
    %69 = arith.truncf %66 : vector<8x128xf32> to vector<8x128xbf16>
    %cst_45 = arith.constant dense<0.000000e+00> : vector<16x128xf32>
    %70 = tpu.matmul %68, %69, %cst_45 {dimension_numbers = #tpu.dot_dimension_numbers<[1], [0], [0], [1], [0, 0, 1, 1], [], []>} : vector<16x8xbf16>, vector<8x128xbf16>, vector<16x128xf32> -> vector<16x128xf32>
    %71 = arith.addf %61, %70 : vector<16x128xf32>
    %c6 = arith.constant 6 : index
    %c0_46 = arith.constant 0 : index
    %c0_47 = arith.constant 0 : index
    %72 = vector.load %arg8[%c6, %c0_46, %c0_47] : memref<9x1x128xf32, #tpu.memory_space<vmem>>, vector<1x1x128xf32>
    %73 = vector.shape_cast %72 : vector<1x1x128xf32> to vector<1x128xf32>
    %c121_i32 = arith.constant 121 : i32
    %74 = tpu.dynamic_rotate %17 by %c121_i32 dim 1 : vector<8x128xf32>, i32 -> vector<8x128xf32>
    %75 = vector.broadcast %73 : vector<1x128xf32> to vector<8x128xf32>
    %76 = arith.mulf %74, %75 : vector<8x128xf32>
    %c6_48 = arith.constant 6 : index
    %c0_49 = arith.constant 0 : index
    %c0_50 = arith.constant 0 : index
    %77 = vector.load %arg6[%c6_48, %c0_49, %c0_50] : memref<9x16x8xbf16, #tpu.memory_space<vmem>>, vector<1x16x8xbf16>
    %78 = vector.shape_cast %77 : vector<1x16x8xbf16> to vector<16x8xbf16>
    %79 = arith.truncf %76 : vector<8x128xf32> to vector<8x128xbf16>
    %cst_51 = arith.constant dense<0.000000e+00> : vector<16x128xf32>
    %80 = tpu.matmul %78, %79, %cst_51 {dimension_numbers = #tpu.dot_dimension_numbers<[1], [0], [0], [1], [0, 0, 1, 1], [], []>} : vector<16x8xbf16>, vector<8x128xbf16>, vector<16x128xf32> -> vector<16x128xf32>
    %81 = arith.addf %71, %80 : vector<16x128xf32>
    %c7 = arith.constant 7 : index
    %c0_52 = arith.constant 0 : index
    %c0_53 = arith.constant 0 : index
    %82 = vector.load %arg8[%c7, %c0_52, %c0_53] : memref<9x1x128xf32, #tpu.memory_space<vmem>>, vector<1x1x128xf32>
    %83 = vector.shape_cast %82 : vector<1x1x128xf32> to vector<1x128xf32>
    %c120_i32 = arith.constant 120 : i32
    %84 = tpu.dynamic_rotate %17 by %c120_i32 dim 1 : vector<8x128xf32>, i32 -> vector<8x128xf32>
    %85 = vector.broadcast %83 : vector<1x128xf32> to vector<8x128xf32>
    %86 = arith.mulf %84, %85 : vector<8x128xf32>
    %c7_54 = arith.constant 7 : index
    %c0_55 = arith.constant 0 : index
    %c0_56 = arith.constant 0 : index
    %87 = vector.load %arg6[%c7_54, %c0_55, %c0_56] : memref<9x16x8xbf16, #tpu.memory_space<vmem>>, vector<1x16x8xbf16>
    %88 = vector.shape_cast %87 : vector<1x16x8xbf16> to vector<16x8xbf16>
    %89 = arith.truncf %86 : vector<8x128xf32> to vector<8x128xbf16>
    %cst_57 = arith.constant dense<0.000000e+00> : vector<16x128xf32>
    %90 = tpu.matmul %88, %89, %cst_57 {dimension_numbers = #tpu.dot_dimension_numbers<[1], [0], [0], [1], [0, 0, 1, 1], [], []>} : vector<16x8xbf16>, vector<8x128xbf16>, vector<16x128xf32> -> vector<16x128xf32>
    %91 = arith.addf %81, %90 : vector<16x128xf32>
    %c8 = arith.constant 8 : index
    %c0_58 = arith.constant 0 : index
    %c0_59 = arith.constant 0 : index
    %92 = vector.load %arg8[%c8, %c0_58, %c0_59] : memref<9x1x128xf32, #tpu.memory_space<vmem>>, vector<1x1x128xf32>
    %93 = vector.shape_cast %92 : vector<1x1x128xf32> to vector<1x128xf32>
    %c119_i32 = arith.constant 119 : i32
    %94 = tpu.dynamic_rotate %17 by %c119_i32 dim 1 : vector<8x128xf32>, i32 -> vector<8x128xf32>
    %95 = vector.broadcast %93 : vector<1x128xf32> to vector<8x128xf32>
    %96 = arith.mulf %94, %95 : vector<8x128xf32>
    %c8_60 = arith.constant 8 : index
    %c0_61 = arith.constant 0 : index
    %c0_62 = arith.constant 0 : index
    %97 = vector.load %arg6[%c8_60, %c0_61, %c0_62] : memref<9x16x8xbf16, #tpu.memory_space<vmem>>, vector<1x16x8xbf16>
    %98 = vector.shape_cast %97 : vector<1x16x8xbf16> to vector<16x8xbf16>
    %99 = arith.truncf %96 : vector<8x128xf32> to vector<8x128xbf16>
    %cst_63 = arith.constant dense<0.000000e+00> : vector<16x128xf32>
    %100 = tpu.matmul %98, %99, %cst_63 {dimension_numbers = #tpu.dot_dimension_numbers<[1], [0], [0], [1], [0, 0, 1, 1], [], []>} : vector<16x8xbf16>, vector<8x128xbf16>, vector<16x128xf32> -> vector<16x128xf32>
    %101 = arith.addf %91, %100 : vector<16x128xf32>
    %c0_64 = arith.constant 0 : index
    %c0_65 = arith.constant 0 : index
    %102 = vector.load %arg7[%c0_64, %c0_65] : memref<16x1xf32, #tpu.memory_space<vmem>>, vector<16x1xf32>
    %103 = vector.broadcast %102 : vector<16x1xf32> to vector<16x128xf32>
    %104 = arith.addf %101, %103 : vector<16x128xf32>
    %cst_66 = arith.constant 1.000000e-01 : f32
    %105 = vector.broadcast %cst_66 : f32 to vector<16x128xf32>
    %106 = arith.mulf %105, %104 : vector<16x128xf32>
    %107 = arith.maximumf %104, %106 : vector<16x128xf32>
    %108 = arith.addf %107, %8 : vector<16x128xf32>
    %109 = arith.truncf %108 : vector<16x128xf32> to vector<16x128xbf16>
    %c0_67 = arith.constant 0 : index
    %c0_68 = arith.constant 0 : index
    %110 = vector.load %arg9[%c0_67, %c0_68] : memref<16x128xbf16, #tpu.memory_space<vmem>>, vector<16x128xbf16>
    tpu.vector_store %arg9[%c0_67, %c0_68], %109 {strides = array<i32>} : memref<16x128xbf16, #tpu.memory_space<vmem>>, vector<16x128xbf16>,
    return
  }
  func.func @transform_0(%arg0: i32) -> (i32, i32) {
    %c0_i32 = arith.constant 0 : i32
    %c0_i32_0 = arith.constant 0 : i32
    %c0_i32_1 = arith.constant 0 : i32
    return %c0_i32, %c0_i32_0 : i32, i32
  }
  func.func @transform_1(%arg0: i32) -> (i32, i32) {
    %c0_i32 = arith.constant 0 : i32
    %c0_i32_0 = arith.constant 0 : i32
    %c0_i32_1 = arith.constant 0 : i32
    return %c0_i32, %c0_i32_0 : i32, i32
  }
  func.func @transform_2(%arg0: i32) -> (i32, i32) {
    %c0_i32 = arith.constant 0 : i32
    %c0_i32_0 = arith.constant 0 : i32
    %c0_i32_1 = arith.constant 0 : i32
    return %c0_i32, %c0_i32_0 : i32, i32
  }
  func.func @transform_3(%arg0: i32) -> (i32, i32) {
    %c0_i32 = arith.constant 0 : i32
    %c0_i32_0 = arith.constant 0 : i32
    %c0_i32_1 = arith.constant 0 : i32
    return %c0_i32, %c0_i32_0 : i32, i32
  }
  func.func @transform_4(%arg0: i32) -> (i32, i32) {
    %c0_i32 = arith.constant 0 : i32
    %c0_i32_0 = arith.constant 0 : i32
    %c0_i32_1 = arith.constant 0 : i32
    return %c0_i32, %c0_i32_0 : i32, i32
  }
  func.func @transform_5(%arg0: i32) -> (i32, i32, i32) {
    %c0_i32 = arith.constant 0 : i32
    %c0_i32_0 = arith.constant 0 : i32
    %c0_i32_1 = arith.constant 0 : i32
    %c0_i32_2 = arith.constant 0 : i32
    return %c0_i32, %c0_i32_0, %c0_i32_1 : i32, i32, i32
  }
  func.func @transform_6(%arg0: i32) -> (i32, i32) {
    %c0_i32 = arith.constant 0 : i32
    %c0_i32_0 = arith.constant 0 : i32
    %c0_i32_1 = arith.constant 0 : i32
    return %c0_i32, %c0_i32_0 : i32, i32
  }
  func.func @transform_7(%arg0: i32) -> (i32, i32, i32) {
    %c0_i32 = arith.constant 0 : i32
    %c0_i32_0 = arith.constant 0 : i32
    %c0_i32_1 = arith.constant 0 : i32
    %c0_i32_2 = arith.constant 0 : i32
    return %c0_i32, %c0_i32_0, %c0_i32_1 : i32, i32, i32
  }
  func.func @transform_8(%arg0: i32) -> (i32, i32) {
    %c0_i32 = arith.constant 0 : i32
    %c0_i32_0 = arith.constant 0 : i32
    %c0_i32_1 = arith.constant 0 : i32
    return %c0_i32, %c0_i32_0 : i32, i32
  }
}

module attributes {stable_mosaic.version = 11 : i64} {
  func.func @_chain_c_kernel(%arg0: i32, %arg1: memref<144x32xbf16, #tpu.memory_space<vmem>>, %arg2: memref<16x144xbf16, #tpu.memory_space<vmem>>, %arg3: memref<16x1xf32, #tpu.memory_space<vmem>>, %arg4: memref<16x16xbf16, #tpu.memory_space<vmem>>, %arg5: memref<16x1xf32, #tpu.memory_space<vmem>>, %arg6: memref<8x16xbf16, #tpu.memory_space<vmem>>, %arg7: memref<8x1xf32, #tpu.memory_space<vmem>>, %arg8: memref<16x1xf32, #tpu.memory_space<vmem>>, %arg9: memref<16x1xf32, #tpu.memory_space<vmem>>, %arg10: memref<16x1xf32, #tpu.memory_space<vmem>>, %arg11: memref<16x32xf32, #tpu.memory_space<vmem>>, %arg12: memref<16x32xf32, #tpu.memory_space<vmem>>, %arg13: memref<8x32xbf16, #tpu.memory_space<vmem>>) attributes {dimension_semantics = [#tpu.dimension_semantics<arbitrary>], iteration_bounds = array<i64: 1>, scalar_prefetch = 0 : i64, scratch_operands = 0 : i64, tpu.core_type = #tpu.core_type<tc>, window_params = [{pipeline_mode = #tpu.pipeline_mode<synchronous>, transform_indices = @transform_0, window_bounds = array<i64: 144, 32>}, {pipeline_mode = #tpu.pipeline_mode<synchronous>, transform_indices = @transform_1, window_bounds = array<i64: 16, 144>}, {pipeline_mode = #tpu.pipeline_mode<synchronous>, transform_indices = @transform_2, window_bounds = array<i64: 16, 1>}, {pipeline_mode = #tpu.pipeline_mode<synchronous>, transform_indices = @transform_3, window_bounds = array<i64: 16, 16>}, {pipeline_mode = #tpu.pipeline_mode<synchronous>, transform_indices = @transform_4, window_bounds = array<i64: 16, 1>}, {pipeline_mode = #tpu.pipeline_mode<synchronous>, transform_indices = @transform_5, window_bounds = array<i64: 8, 16>}, {pipeline_mode = #tpu.pipeline_mode<synchronous>, transform_indices = @transform_6, window_bounds = array<i64: 8, 1>}, {pipeline_mode = #tpu.pipeline_mode<synchronous>, transform_indices = @transform_7, window_bounds = array<i64: 16, 1>}, {pipeline_mode = #tpu.pipeline_mode<synchronous>, transform_indices = @transform_8, window_bounds = array<i64: 16, 1>}, {pipeline_mode = #tpu.pipeline_mode<synchronous>, transform_indices = @transform_9, window_bounds = array<i64: 16, 1>}, {pipeline_mode = #tpu.pipeline_mode<synchronous>, transform_indices = @transform_10, window_bounds = array<i64: 16, 32>}, {pipeline_mode = #tpu.pipeline_mode<synchronous>, transform_indices = @transform_11, window_bounds = array<i64: 16, 32>}, {pipeline_mode = #tpu.pipeline_mode<synchronous>, transform_indices = @transform_12, window_bounds = array<i64: 8, 32>}]} {
    %c0 = arith.constant 0 : index
    %c0_0 = arith.constant 0 : index
    %0 = vector.load %arg2[%c0, %c0_0] : memref<16x144xbf16, #tpu.memory_space<vmem>>, vector<16x144xbf16>
    %c0_1 = arith.constant 0 : index
    %c0_2 = arith.constant 0 : index
    %1 = vector.load %arg1[%c0_1, %c0_2] : memref<144x32xbf16, #tpu.memory_space<vmem>>, vector<144x32xbf16>
    %cst = arith.constant dense<0.000000e+00> : vector<16x32xf32>
    %2 = tpu.matmul %0, %1, %cst {dimension_numbers = #tpu.dot_dimension_numbers<[1], [0], [0], [1], [0, 0, 1, 1], [], []>} : vector<16x144xbf16>, vector<144x32xbf16>, vector<16x32xf32> -> vector<16x32xf32>
    %c0_3 = arith.constant 0 : index
    %c0_4 = arith.constant 0 : index
    %3 = vector.load %arg3[%c0_3, %c0_4] : memref<16x1xf32, #tpu.memory_space<vmem>>, vector<16x1xf32>
    %4 = vector.broadcast %3 : vector<16x1xf32> to vector<16x32xf32>
    %5 = arith.addf %2, %4 : vector<16x32xf32>
    %cst_5 = arith.constant 1.000000e-01 : f32
    %6 = vector.broadcast %cst_5 : f32 to vector<16x32xf32>
    %7 = arith.mulf %6, %5 : vector<16x32xf32>
    %8 = arith.maximumf %5, %7 : vector<16x32xf32>
    %c0_6 = arith.constant 0 : index
    %c0_7 = arith.constant 0 : index
    %9 = vector.load %arg4[%c0_6, %c0_7] : memref<16x16xbf16, #tpu.memory_space<vmem>>, vector<16x16xbf16>
    %10 = arith.truncf %8 : vector<16x32xf32> to vector<16x32xbf16>
    %cst_8 = arith.constant dense<0.000000e+00> : vector<16x32xf32>
    %11 = tpu.matmul %9, %10, %cst_8 {dimension_numbers = #tpu.dot_dimension_numbers<[1], [0], [0], [1], [0, 0, 1, 1], [], []>} : vector<16x16xbf16>, vector<16x32xbf16>, vector<16x32xf32> -> vector<16x32xf32>
    %c0_9 = arith.constant 0 : index
    %c0_10 = arith.constant 0 : index
    %12 = vector.load %arg5[%c0_9, %c0_10] : memref<16x1xf32, #tpu.memory_space<vmem>>, vector<16x1xf32>
    %13 = vector.broadcast %12 : vector<16x1xf32> to vector<16x32xf32>
    %14 = arith.addf %11, %13 : vector<16x32xf32>
    %cst_11 = arith.constant 1.000000e-01 : f32
    %15 = vector.broadcast %cst_11 : f32 to vector<16x32xf32>
    %16 = arith.mulf %15, %14 : vector<16x32xf32>
    %17 = arith.maximumf %14, %16 : vector<16x32xf32>
    %cst_12 = arith.constant 0.000000e+00 : f32
    %18 = vector.broadcast %cst_12 : f32 to vector<16x32xf32>
    %19 = arith.subf %18, %17 : vector<16x32xf32>
    %20 = math.exp %19 : vector<16x32xf32>
    %cst_13 = arith.constant 1.000000e+00 : f32
    %21 = vector.broadcast %cst_13 : f32 to vector<16x32xf32>
    %22 = arith.addf %21, %20 : vector<16x32xf32>
    %cst_14 = arith.constant 1.000000e+00 : f32
    %23 = vector.broadcast %cst_14 : f32 to vector<16x32xf32>
    %24 = arith.divf %23, %22 : vector<16x32xf32>
    %c0_15 = arith.constant 0 : index
    %c0_16 = arith.constant 0 : index
    %25 = vector.load %arg8[%c0_15, %c0_16] : memref<16x1xf32, #tpu.memory_space<vmem>>, vector<16x1xf32>
    %26 = vector.broadcast %25 : vector<16x1xf32> to vector<16x32xf32>
    %27 = arith.mulf %24, %26 : vector<16x32xf32>
    %c0_17 = arith.constant 0 : index
    %c0_18 = arith.constant 0 : index
    %28 = vector.load %arg9[%c0_17, %c0_18] : memref<16x1xf32, #tpu.memory_space<vmem>>, vector<16x1xf32>
    %29 = vector.broadcast %28 : vector<16x1xf32> to vector<16x32xf32>
    %30 = arith.mulf %17, %29 : vector<16x32xf32>
    %31 = math.exp %30 : vector<16x32xf32>
    %c0_19 = arith.constant 0 : index
    %c0_20 = arith.constant 0 : index
    %32 = vector.load %arg10[%c0_19, %c0_20] : memref<16x1xf32, #tpu.memory_space<vmem>>, vector<16x1xf32>
    %33 = vector.broadcast %32 : vector<16x1xf32> to vector<16x32xf32>
    %34 = arith.mulf %31, %33 : vector<16x32xf32>
    %35 = arith.addf %27, %34 : vector<16x32xf32>
    %c0_21 = arith.constant 0 : index
    %c0_22 = arith.constant 0 : index
    %36 = vector.load %arg11[%c0_21, %c0_22] : memref<16x32xf32, #tpu.memory_space<vmem>>, vector<16x32xf32>
    %37 = arith.addf %35, %36 : vector<16x32xf32>
    %c0_23 = arith.constant 0 : index
    %c0_24 = arith.constant 0 : index
    %38 = vector.load %arg12[%c0_23, %c0_24] : memref<16x32xf32, #tpu.memory_space<vmem>>, vector<16x32xf32>
    tpu.vector_store %arg12[%c0_23, %c0_24], %37 {strides = array<i32>} : memref<16x32xf32, #tpu.memory_space<vmem>>, vector<16x32xf32>,
    %c0_25 = arith.constant 0 : index
    %c0_26 = arith.constant 0 : index
    %39 = vector.load %arg6[%c0_25, %c0_26] : memref<8x16xbf16, #tpu.memory_space<vmem>>, vector<8x16xbf16>
    %40 = arith.truncf %8 : vector<16x32xf32> to vector<16x32xbf16>
    %cst_27 = arith.constant dense<0.000000e+00> : vector<8x32xf32>
    %41 = tpu.matmul %39, %40, %cst_27 {dimension_numbers = #tpu.dot_dimension_numbers<[1], [0], [0], [1], [0, 0, 1, 1], [], []>} : vector<8x16xbf16>, vector<16x32xbf16>, vector<8x32xf32> -> vector<8x32xf32>
    %c0_28 = arith.constant 0 : index
    %c0_29 = arith.constant 0 : index
    %42 = vector.load %arg7[%c0_28, %c0_29] : memref<8x1xf32, #tpu.memory_space<vmem>>, vector<8x1xf32>
    %43 = vector.broadcast %42 : vector<8x1xf32> to vector<8x32xf32>
    %44 = arith.addf %41, %43 : vector<8x32xf32>
    %cst_30 = arith.constant 1.000000e-01 : f32
    %45 = vector.broadcast %cst_30 : f32 to vector<8x32xf32>
    %46 = arith.mulf %45, %44 : vector<8x32xf32>
    %47 = arith.maximumf %44, %46 : vector<8x32xf32>
    %48 = arith.truncf %47 : vector<8x32xf32> to vector<8x32xbf16>
    %c0_31 = arith.constant 0 : index
    %c0_32 = arith.constant 0 : index
    %49 = vector.load %arg13[%c0_31, %c0_32] : memref<8x32xbf16, #tpu.memory_space<vmem>>, vector<8x32xbf16>
    tpu.vector_store %arg13[%c0_31, %c0_32], %48 {strides = array<i32>} : memref<8x32xbf16, #tpu.memory_space<vmem>>, vector<8x32xbf16>,
    return
  }
  func.func @transform_0(%arg0: i32) -> (i32, i32) {
    %c0_i32 = arith.constant 0 : i32
    %c0_i32_0 = arith.constant 0 : i32
    %c0_i32_1 = arith.constant 0 : i32
    return %c0_i32, %c0_i32_0 : i32, i32
  }
  func.func @transform_1(%arg0: i32) -> (i32, i32) {
    %c0_i32 = arith.constant 0 : i32
    %c0_i32_0 = arith.constant 0 : i32
    %c0_i32_1 = arith.constant 0 : i32
    return %c0_i32, %c0_i32_0 : i32, i32
  }
  func.func @transform_2(%arg0: i32) -> (i32, i32) {
    %c0_i32 = arith.constant 0 : i32
    %c0_i32_0 = arith.constant 0 : i32
    %c0_i32_1 = arith.constant 0 : i32
    return %c0_i32, %c0_i32_0 : i32, i32
  }
  func.func @transform_3(%arg0: i32) -> (i32, i32) {
    %c0_i32 = arith.constant 0 : i32
    %c0_i32_0 = arith.constant 0 : i32
    %c0_i32_1 = arith.constant 0 : i32
    return %c0_i32, %c0_i32_0 : i32, i32
  }
  func.func @transform_4(%arg0: i32) -> (i32, i32) {
    %c0_i32 = arith.constant 0 : i32
    %c0_i32_0 = arith.constant 0 : i32
    %c0_i32_1 = arith.constant 0 : i32
    return %c0_i32, %c0_i32_0 : i32, i32
  }
  func.func @transform_5(%arg0: i32) -> (i32, i32) {
    %c0_i32 = arith.constant 0 : i32
    %c0_i32_0 = arith.constant 0 : i32
    %c0_i32_1 = arith.constant 0 : i32
    return %c0_i32, %c0_i32_0 : i32, i32
  }
  func.func @transform_6(%arg0: i32) -> (i32, i32) {
    %c0_i32 = arith.constant 0 : i32
    %c0_i32_0 = arith.constant 0 : i32
    %c0_i32_1 = arith.constant 0 : i32
    return %c0_i32, %c0_i32_0 : i32, i32
  }
  func.func @transform_7(%arg0: i32) -> (i32, i32) {
    %c0_i32 = arith.constant 0 : i32
    %c0_i32_0 = arith.constant 0 : i32
    %c0_i32_1 = arith.constant 0 : i32
    return %c0_i32, %c0_i32_0 : i32, i32
  }
  func.func @transform_8(%arg0: i32) -> (i32, i32) {
    %c0_i32 = arith.constant 0 : i32
    %c0_i32_0 = arith.constant 0 : i32
    %c0_i32_1 = arith.constant 0 : i32
    return %c0_i32, %c0_i32_0 : i32, i32
  }
  func.func @transform_9(%arg0: i32) -> (i32, i32) {
    %c0_i32 = arith.constant 0 : i32
    %c0_i32_0 = arith.constant 0 : i32
    %c0_i32_1 = arith.constant 0 : i32
    return %c0_i32, %c0_i32_0 : i32, i32
  }
  func.func @transform_10(%arg0: i32) -> (i32, i32) {
    %c0_i32 = arith.constant 0 : i32
    %c0_i32_0 = arith.constant 0 : i32
    %c0_i32_1 = arith.constant 0 : i32
    return %c0_i32, %c0_i32_0 : i32, i32
  }
  func.func @transform_11(%arg0: i32) -> (i32, i32) {
    %c0_i32 = arith.constant 0 : i32
    %c0_i32_0 = arith.constant 0 : i32
    %c0_i32_1 = arith.constant 0 : i32
    return %c0_i32, %c0_i32_0 : i32, i32
  }
  func.func @transform_12(%arg0: i32) -> (i32, i32) {
    %c0_i32 = arith.constant 0 : i32
    %c0_i32_0 = arith.constant 0 : i32
    %c0_i32_1 = arith.constant 0 : i32
    return %c0_i32, %c0_i32_0 : i32, i32
  }
}

module attributes {stable_mosaic.version = 11 : i64} {
  func.func @_chain_d_kernel(%arg0: i32, %arg1: memref<8x128xbf16, #tpu.memory_space<vmem>>, %arg2: memref<16x128xbf16, #tpu.memory_space<vmem>>, %arg3: memref<9x16x8xbf16, #tpu.memory_space<vmem>>, %arg4: memref<9x16x16xbf16, #tpu.memory_space<vmem>>, %arg5: memref<16x1xf32, #tpu.memory_space<vmem>>, %arg6: memref<16x16xbf16, #tpu.memory_space<vmem>>, %arg7: memref<16x1xf32, #tpu.memory_space<vmem>>, %arg8: memref<9x1x128xf32, #tpu.memory_space<vmem>>, %arg9: memref<16x1xf32, #tpu.memory_space<vmem>>, %arg10: memref<16x1xf32, #tpu.memory_space<vmem>>, %arg11: memref<16x1xf32, #tpu.memory_space<vmem>>, %arg12: memref<16x128xf32, #tpu.memory_space<vmem>>, %arg13: memref<16x128xf32, #tpu.memory_space<vmem>>) attributes {dimension_semantics = [#tpu.dimension_semantics<arbitrary>], iteration_bounds = array<i64: 1>, scalar_prefetch = 0 : i64, scratch_operands = 0 : i64, tpu.core_type = #tpu.core_type<tc>, window_params = [{pipeline_mode = #tpu.pipeline_mode<synchronous>, transform_indices = @transform_0, window_bounds = array<i64: 8, 128>}, {pipeline_mode = #tpu.pipeline_mode<synchronous>, transform_indices = @transform_1, window_bounds = array<i64: 16, 128>}, {pipeline_mode = #tpu.pipeline_mode<synchronous>, transform_indices = @transform_2, window_bounds = array<i64: 9, 16, 8>}, {pipeline_mode = #tpu.pipeline_mode<synchronous>, transform_indices = @transform_3, window_bounds = array<i64: 9, 16, 16>}, {pipeline_mode = #tpu.pipeline_mode<synchronous>, transform_indices = @transform_4, window_bounds = array<i64: 16, 1>}, {pipeline_mode = #tpu.pipeline_mode<synchronous>, transform_indices = @transform_5, window_bounds = array<i64: 16, 16>}, {pipeline_mode = #tpu.pipeline_mode<synchronous>, transform_indices = @transform_6, window_bounds = array<i64: 16, 1>}, {pipeline_mode = #tpu.pipeline_mode<synchronous>, transform_indices = @transform_7, window_bounds = array<i64: 9, 1, 128>}, {pipeline_mode = #tpu.pipeline_mode<synchronous>, transform_indices = @transform_8, window_bounds = array<i64: 16, 1>}, {pipeline_mode = #tpu.pipeline_mode<synchronous>, transform_indices = @transform_9, window_bounds = array<i64: 16, 1>}, {pipeline_mode = #tpu.pipeline_mode<synchronous>, transform_indices = @transform_10, window_bounds = array<i64: 16, 1>}, {pipeline_mode = #tpu.pipeline_mode<synchronous>, transform_indices = @transform_11, window_bounds = array<i64: 16, 128>}, {pipeline_mode = #tpu.pipeline_mode<synchronous>, transform_indices = @transform_12, window_bounds = array<i64: 16, 128>}]} {
    %c0 = arith.constant 0 : index
    %c0_0 = arith.constant 0 : index
    %0 = vector.load %arg1[%c0, %c0_0] : memref<8x128xbf16, #tpu.memory_space<vmem>>, vector<8x128xbf16>
    %1 = arith.extf %0 : vector<8x128xbf16> to vector<8x128xf32>
    %c0_1 = arith.constant 0 : index
    %c0_2 = arith.constant 0 : index
    %2 = vector.load %arg2[%c0_1, %c0_2] : memref<16x128xbf16, #tpu.memory_space<vmem>>, vector<16x128xbf16>
    %3 = arith.extf %2 : vector<16x128xbf16> to vector<16x128xf32>
    %c0_3 = arith.constant 0 : index
    %c0_4 = arith.constant 0 : index
    %c0_5 = arith.constant 0 : index
    %4 = vector.load %arg8[%c0_3, %c0_4, %c0_5] : memref<9x1x128xf32, #tpu.memory_space<vmem>>, vector<1x1x128xf32>
    %5 = vector.shape_cast %4 : vector<1x1x128xf32> to vector<1x128xf32>
    %c9_i32 = arith.constant 9 : i32
    %6 = tpu.dynamic_rotate %1 by %c9_i32 dim 1 : vector<8x128xf32>, i32 -> vector<8x128xf32>
    %7 = vector.broadcast %5 : vector<1x128xf32> to vector<8x128xf32>
    %8 = arith.mulf %6, %7 : vector<8x128xf32>
    %c0_6 = arith.constant 0 : index
    %c0_7 = arith.constant 0 : index
    %c0_8 = arith.constant 0 : index
    %9 = vector.load %arg3[%c0_6, %c0_7, %c0_8] : memref<9x16x8xbf16, #tpu.memory_space<vmem>>, vector<1x16x8xbf16>
    %10 = vector.shape_cast %9 : vector<1x16x8xbf16> to vector<16x8xbf16>
    %11 = arith.truncf %8 : vector<8x128xf32> to vector<8x128xbf16>
    %cst = arith.constant dense<0.000000e+00> : vector<16x128xf32>
    %12 = tpu.matmul %10, %11, %cst {dimension_numbers = #tpu.dot_dimension_numbers<[1], [0], [0], [1], [0, 0, 1, 1], [], []>} : vector<16x8xbf16>, vector<8x128xbf16>, vector<16x128xf32> -> vector<16x128xf32>
    %c1 = arith.constant 1 : index
    %c0_9 = arith.constant 0 : index
    %c0_10 = arith.constant 0 : index
    %13 = vector.load %arg8[%c1, %c0_9, %c0_10] : memref<9x1x128xf32, #tpu.memory_space<vmem>>, vector<1x1x128xf32>
    %14 = vector.shape_cast %13 : vector<1x1x128xf32> to vector<1x128xf32>
    %c8_i32 = arith.constant 8 : i32
    %15 = tpu.dynamic_rotate %1 by %c8_i32 dim 1 : vector<8x128xf32>, i32 -> vector<8x128xf32>
    %16 = vector.broadcast %14 : vector<1x128xf32> to vector<8x128xf32>
    %17 = arith.mulf %15, %16 : vector<8x128xf32>
    %c1_11 = arith.constant 1 : index
    %c0_12 = arith.constant 0 : index
    %c0_13 = arith.constant 0 : index
    %18 = vector.load %arg3[%c1_11, %c0_12, %c0_13] : memref<9x16x8xbf16, #tpu.memory_space<vmem>>, vector<1x16x8xbf16>
    %19 = vector.shape_cast %18 : vector<1x16x8xbf16> to vector<16x8xbf16>
    %20 = arith.truncf %17 : vector<8x128xf32> to vector<8x128xbf16>
    %cst_14 = arith.constant dense<0.000000e+00> : vector<16x128xf32>
    %21 = tpu.matmul %19, %20, %cst_14 {dimension_numbers = #tpu.dot_dimension_numbers<[1], [0], [0], [1], [0, 0, 1, 1], [], []>} : vector<16x8xbf16>, vector<8x128xbf16>, vector<16x128xf32> -> vector<16x128xf32>
    %22 = arith.addf %12, %21 : vector<16x128xf32>
    %c2 = arith.constant 2 : index
    %c0_15 = arith.constant 0 : index
    %c0_16 = arith.constant 0 : index
    %23 = vector.load %arg8[%c2, %c0_15, %c0_16] : memref<9x1x128xf32, #tpu.memory_space<vmem>>, vector<1x1x128xf32>
    %24 = vector.shape_cast %23 : vector<1x1x128xf32> to vector<1x128xf32>
    %c7_i32 = arith.constant 7 : i32
    %25 = tpu.dynamic_rotate %1 by %c7_i32 dim 1 : vector<8x128xf32>, i32 -> vector<8x128xf32>
    %26 = vector.broadcast %24 : vector<1x128xf32> to vector<8x128xf32>
    %27 = arith.mulf %25, %26 : vector<8x128xf32>
    %c2_17 = arith.constant 2 : index
    %c0_18 = arith.constant 0 : index
    %c0_19 = arith.constant 0 : index
    %28 = vector.load %arg3[%c2_17, %c0_18, %c0_19] : memref<9x16x8xbf16, #tpu.memory_space<vmem>>, vector<1x16x8xbf16>
    %29 = vector.shape_cast %28 : vector<1x16x8xbf16> to vector<16x8xbf16>
    %30 = arith.truncf %27 : vector<8x128xf32> to vector<8x128xbf16>
    %cst_20 = arith.constant dense<0.000000e+00> : vector<16x128xf32>
    %31 = tpu.matmul %29, %30, %cst_20 {dimension_numbers = #tpu.dot_dimension_numbers<[1], [0], [0], [1], [0, 0, 1, 1], [], []>} : vector<16x8xbf16>, vector<8x128xbf16>, vector<16x128xf32> -> vector<16x128xf32>
    %32 = arith.addf %22, %31 : vector<16x128xf32>
    %c3 = arith.constant 3 : index
    %c0_21 = arith.constant 0 : index
    %c0_22 = arith.constant 0 : index
    %33 = vector.load %arg8[%c3, %c0_21, %c0_22] : memref<9x1x128xf32, #tpu.memory_space<vmem>>, vector<1x1x128xf32>
    %34 = vector.shape_cast %33 : vector<1x1x128xf32> to vector<1x128xf32>
    %c1_i32 = arith.constant 1 : i32
    %35 = tpu.dynamic_rotate %1 by %c1_i32 dim 1 : vector<8x128xf32>, i32 -> vector<8x128xf32>
    %36 = vector.broadcast %34 : vector<1x128xf32> to vector<8x128xf32>
    %37 = arith.mulf %35, %36 : vector<8x128xf32>
    %c3_23 = arith.constant 3 : index
    %c0_24 = arith.constant 0 : index
    %c0_25 = arith.constant 0 : index
    %38 = vector.load %arg3[%c3_23, %c0_24, %c0_25] : memref<9x16x8xbf16, #tpu.memory_space<vmem>>, vector<1x16x8xbf16>
    %39 = vector.shape_cast %38 : vector<1x16x8xbf16> to vector<16x8xbf16>
    %40 = arith.truncf %37 : vector<8x128xf32> to vector<8x128xbf16>
    %cst_26 = arith.constant dense<0.000000e+00> : vector<16x128xf32>
    %41 = tpu.matmul %39, %40, %cst_26 {dimension_numbers = #tpu.dot_dimension_numbers<[1], [0], [0], [1], [0, 0, 1, 1], [], []>} : vector<16x8xbf16>, vector<8x128xbf16>, vector<16x128xf32> -> vector<16x128xf32>
    %42 = arith.addf %32, %41 : vector<16x128xf32>
    %c4 = arith.constant 4 : index
    %c0_27 = arith.constant 0 : index
    %c0_28 = arith.constant 0 : index
    %43 = vector.load %arg3[%c4, %c0_27, %c0_28] : memref<9x16x8xbf16, #tpu.memory_space<vmem>>, vector<1x16x8xbf16>
    %44 = vector.shape_cast %43 : vector<1x16x8xbf16> to vector<16x8xbf16>
    %45 = arith.truncf %1 : vector<8x128xf32> to vector<8x128xbf16>
    %cst_29 = arith.constant dense<0.000000e+00> : vector<16x128xf32>
    %46 = tpu.matmul %44, %45, %cst_29 {dimension_numbers = #tpu.dot_dimension_numbers<[1], [0], [0], [1], [0, 0, 1, 1], [], []>} : vector<16x8xbf16>, vector<8x128xbf16>, vector<16x128xf32> -> vector<16x128xf32>
    %47 = arith.addf %42, %46 : vector<16x128xf32>
    %c5 = arith.constant 5 : index
    %c0_30 = arith.constant 0 : index
    %c0_31 = arith.constant 0 : index
    %48 = vector.load %arg8[%c5, %c0_30, %c0_31] : memref<9x1x128xf32, #tpu.memory_space<vmem>>, vector<1x1x128xf32>
    %49 = vector.shape_cast %48 : vector<1x1x128xf32> to vector<1x128xf32>
    %c127_i32 = arith.constant 127 : i32
    %50 = tpu.dynamic_rotate %1 by %c127_i32 dim 1 : vector<8x128xf32>, i32 -> vector<8x128xf32>
    %51 = vector.broadcast %49 : vector<1x128xf32> to vector<8x128xf32>
    %52 = arith.mulf %50, %51 : vector<8x128xf32>
    %c5_32 = arith.constant 5 : index
    %c0_33 = arith.constant 0 : index
    %c0_34 = arith.constant 0 : index
    %53 = vector.load %arg3[%c5_32, %c0_33, %c0_34] : memref<9x16x8xbf16, #tpu.memory_space<vmem>>, vector<1x16x8xbf16>
    %54 = vector.shape_cast %53 : vector<1x16x8xbf16> to vector<16x8xbf16>
    %55 = arith.truncf %52 : vector<8x128xf32> to vector<8x128xbf16>
    %cst_35 = arith.constant dense<0.000000e+00> : vector<16x128xf32>
    %56 = tpu.matmul %54, %55, %cst_35 {dimension_numbers = #tpu.dot_dimension_numbers<[1], [0], [0], [1], [0, 0, 1, 1], [], []>} : vector<16x8xbf16>, vector<8x128xbf16>, vector<16x128xf32> -> vector<16x128xf32>
    %57 = arith.addf %47, %56 : vector<16x128xf32>
    %c6 = arith.constant 6 : index
    %c0_36 = arith.constant 0 : index
    %c0_37 = arith.constant 0 : index
    %58 = vector.load %arg8[%c6, %c0_36, %c0_37] : memref<9x1x128xf32, #tpu.memory_space<vmem>>, vector<1x1x128xf32>
    %59 = vector.shape_cast %58 : vector<1x1x128xf32> to vector<1x128xf32>
    %c121_i32 = arith.constant 121 : i32
    %60 = tpu.dynamic_rotate %1 by %c121_i32 dim 1 : vector<8x128xf32>, i32 -> vector<8x128xf32>
    %61 = vector.broadcast %59 : vector<1x128xf32> to vector<8x128xf32>
    %62 = arith.mulf %60, %61 : vector<8x128xf32>
    %c6_38 = arith.constant 6 : index
    %c0_39 = arith.constant 0 : index
    %c0_40 = arith.constant 0 : index
    %63 = vector.load %arg3[%c6_38, %c0_39, %c0_40] : memref<9x16x8xbf16, #tpu.memory_space<vmem>>, vector<1x16x8xbf16>
    %64 = vector.shape_cast %63 : vector<1x16x8xbf16> to vector<16x8xbf16>
    %65 = arith.truncf %62 : vector<8x128xf32> to vector<8x128xbf16>
    %cst_41 = arith.constant dense<0.000000e+00> : vector<16x128xf32>
    %66 = tpu.matmul %64, %65, %cst_41 {dimension_numbers = #tpu.dot_dimension_numbers<[1], [0], [0], [1], [0, 0, 1, 1], [], []>} : vector<16x8xbf16>, vector<8x128xbf16>, vector<16x128xf32> -> vector<16x128xf32>
    %67 = arith.addf %57, %66 : vector<16x128xf32>
    %c7 = arith.constant 7 : index
    %c0_42 = arith.constant 0 : index
    %c0_43 = arith.constant 0 : index
    %68 = vector.load %arg8[%c7, %c0_42, %c0_43] : memref<9x1x128xf32, #tpu.memory_space<vmem>>, vector<1x1x128xf32>
    %69 = vector.shape_cast %68 : vector<1x1x128xf32> to vector<1x128xf32>
    %c120_i32 = arith.constant 120 : i32
    %70 = tpu.dynamic_rotate %1 by %c120_i32 dim 1 : vector<8x128xf32>, i32 -> vector<8x128xf32>
    %71 = vector.broadcast %69 : vector<1x128xf32> to vector<8x128xf32>
    %72 = arith.mulf %70, %71 : vector<8x128xf32>
    %c7_44 = arith.constant 7 : index
    %c0_45 = arith.constant 0 : index
    %c0_46 = arith.constant 0 : index
    %73 = vector.load %arg3[%c7_44, %c0_45, %c0_46] : memref<9x16x8xbf16, #tpu.memory_space<vmem>>, vector<1x16x8xbf16>
    %74 = vector.shape_cast %73 : vector<1x16x8xbf16> to vector<16x8xbf16>
    %75 = arith.truncf %72 : vector<8x128xf32> to vector<8x128xbf16>
    %cst_47 = arith.constant dense<0.000000e+00> : vector<16x128xf32>
    %76 = tpu.matmul %74, %75, %cst_47 {dimension_numbers = #tpu.dot_dimension_numbers<[1], [0], [0], [1], [0, 0, 1, 1], [], []>} : vector<16x8xbf16>, vector<8x128xbf16>, vector<16x128xf32> -> vector<16x128xf32>
    %77 = arith.addf %67, %76 : vector<16x128xf32>
    %c8 = arith.constant 8 : index
    %c0_48 = arith.constant 0 : index
    %c0_49 = arith.constant 0 : index
    %78 = vector.load %arg8[%c8, %c0_48, %c0_49] : memref<9x1x128xf32, #tpu.memory_space<vmem>>, vector<1x1x128xf32>
    %79 = vector.shape_cast %78 : vector<1x1x128xf32> to vector<1x128xf32>
    %c119_i32 = arith.constant 119 : i32
    %80 = tpu.dynamic_rotate %1 by %c119_i32 dim 1 : vector<8x128xf32>, i32 -> vector<8x128xf32>
    %81 = vector.broadcast %79 : vector<1x128xf32> to vector<8x128xf32>
    %82 = arith.mulf %80, %81 : vector<8x128xf32>
    %c8_50 = arith.constant 8 : index
    %c0_51 = arith.constant 0 : index
    %c0_52 = arith.constant 0 : index
    %83 = vector.load %arg3[%c8_50, %c0_51, %c0_52] : memref<9x16x8xbf16, #tpu.memory_space<vmem>>, vector<1x16x8xbf16>
    %84 = vector.shape_cast %83 : vector<1x16x8xbf16> to vector<16x8xbf16>
    %85 = arith.truncf %82 : vector<8x128xf32> to vector<8x128xbf16>
    %cst_53 = arith.constant dense<0.000000e+00> : vector<16x128xf32>
    %86 = tpu.matmul %84, %85, %cst_53 {dimension_numbers = #tpu.dot_dimension_numbers<[1], [0], [0], [1], [0, 0, 1, 1], [], []>} : vector<16x8xbf16>, vector<8x128xbf16>, vector<16x128xf32> -> vector<16x128xf32>
    %87 = arith.addf %77, %86 : vector<16x128xf32>
    %c0_54 = arith.constant 0 : index
    %c0_55 = arith.constant 0 : index
    %c0_56 = arith.constant 0 : index
    %88 = vector.load %arg8[%c0_54, %c0_55, %c0_56] : memref<9x1x128xf32, #tpu.memory_space<vmem>>, vector<1x1x128xf32>
    %89 = vector.shape_cast %88 : vector<1x1x128xf32> to vector<1x128xf32>
    %c9_i32_57 = arith.constant 9 : i32
    %90 = tpu.dynamic_rotate %3 by %c9_i32_57 dim 1 : vector<16x128xf32>, i32 -> vector<16x128xf32>
    %91 = vector.broadcast %89 : vector<1x128xf32> to vector<16x128xf32>
    %92 = arith.mulf %90, %91 : vector<16x128xf32>
    %c0_58 = arith.constant 0 : index
    %c0_59 = arith.constant 0 : index
    %c0_60 = arith.constant 0 : index
    %93 = vector.load %arg4[%c0_58, %c0_59, %c0_60] : memref<9x16x16xbf16, #tpu.memory_space<vmem>>, vector<1x16x16xbf16>
    %94 = vector.shape_cast %93 : vector<1x16x16xbf16> to vector<16x16xbf16>
    %95 = arith.truncf %92 : vector<16x128xf32> to vector<16x128xbf16>
    %cst_61 = arith.constant dense<0.000000e+00> : vector<16x128xf32>
    %96 = tpu.matmul %94, %95, %cst_61 {dimension_numbers = #tpu.dot_dimension_numbers<[1], [0], [0], [1], [0, 0, 1, 1], [], []>} : vector<16x16xbf16>, vector<16x128xbf16>, vector<16x128xf32> -> vector<16x128xf32>
    %c1_62 = arith.constant 1 : index
    %c0_63 = arith.constant 0 : index
    %c0_64 = arith.constant 0 : index
    %97 = vector.load %arg8[%c1_62, %c0_63, %c0_64] : memref<9x1x128xf32, #tpu.memory_space<vmem>>, vector<1x1x128xf32>
    %98 = vector.shape_cast %97 : vector<1x1x128xf32> to vector<1x128xf32>
    %c8_i32_65 = arith.constant 8 : i32
    %99 = tpu.dynamic_rotate %3 by %c8_i32_65 dim 1 : vector<16x128xf32>, i32 -> vector<16x128xf32>
    %100 = vector.broadcast %98 : vector<1x128xf32> to vector<16x128xf32>
    %101 = arith.mulf %99, %100 : vector<16x128xf32>
    %c1_66 = arith.constant 1 : index
    %c0_67 = arith.constant 0 : index
    %c0_68 = arith.constant 0 : index
    %102 = vector.load %arg4[%c1_66, %c0_67, %c0_68] : memref<9x16x16xbf16, #tpu.memory_space<vmem>>, vector<1x16x16xbf16>
    %103 = vector.shape_cast %102 : vector<1x16x16xbf16> to vector<16x16xbf16>
    %104 = arith.truncf %101 : vector<16x128xf32> to vector<16x128xbf16>
    %cst_69 = arith.constant dense<0.000000e+00> : vector<16x128xf32>
    %105 = tpu.matmul %103, %104, %cst_69 {dimension_numbers = #tpu.dot_dimension_numbers<[1], [0], [0], [1], [0, 0, 1, 1], [], []>} : vector<16x16xbf16>, vector<16x128xbf16>, vector<16x128xf32> -> vector<16x128xf32>
    %106 = arith.addf %96, %105 : vector<16x128xf32>
    %c2_70 = arith.constant 2 : index
    %c0_71 = arith.constant 0 : index
    %c0_72 = arith.constant 0 : index
    %107 = vector.load %arg8[%c2_70, %c0_71, %c0_72] : memref<9x1x128xf32, #tpu.memory_space<vmem>>, vector<1x1x128xf32>
    %108 = vector.shape_cast %107 : vector<1x1x128xf32> to vector<1x128xf32>
    %c7_i32_73 = arith.constant 7 : i32
    %109 = tpu.dynamic_rotate %3 by %c7_i32_73 dim 1 : vector<16x128xf32>, i32 -> vector<16x128xf32>
    %110 = vector.broadcast %108 : vector<1x128xf32> to vector<16x128xf32>
    %111 = arith.mulf %109, %110 : vector<16x128xf32>
    %c2_74 = arith.constant 2 : index
    %c0_75 = arith.constant 0 : index
    %c0_76 = arith.constant 0 : index
    %112 = vector.load %arg4[%c2_74, %c0_75, %c0_76] : memref<9x16x16xbf16, #tpu.memory_space<vmem>>, vector<1x16x16xbf16>
    %113 = vector.shape_cast %112 : vector<1x16x16xbf16> to vector<16x16xbf16>
    %114 = arith.truncf %111 : vector<16x128xf32> to vector<16x128xbf16>
    %cst_77 = arith.constant dense<0.000000e+00> : vector<16x128xf32>
    %115 = tpu.matmul %113, %114, %cst_77 {dimension_numbers = #tpu.dot_dimension_numbers<[1], [0], [0], [1], [0, 0, 1, 1], [], []>} : vector<16x16xbf16>, vector<16x128xbf16>, vector<16x128xf32> -> vector<16x128xf32>
    %116 = arith.addf %106, %115 : vector<16x128xf32>
    %c3_78 = arith.constant 3 : index
    %c0_79 = arith.constant 0 : index
    %c0_80 = arith.constant 0 : index
    %117 = vector.load %arg8[%c3_78, %c0_79, %c0_80] : memref<9x1x128xf32, #tpu.memory_space<vmem>>, vector<1x1x128xf32>
    %118 = vector.shape_cast %117 : vector<1x1x128xf32> to vector<1x128xf32>
    %c1_i32_81 = arith.constant 1 : i32
    %119 = tpu.dynamic_rotate %3 by %c1_i32_81 dim 1 : vector<16x128xf32>, i32 -> vector<16x128xf32>
    %120 = vector.broadcast %118 : vector<1x128xf32> to vector<16x128xf32>
    %121 = arith.mulf %119, %120 : vector<16x128xf32>
    %c3_82 = arith.constant 3 : index
    %c0_83 = arith.constant 0 : index
    %c0_84 = arith.constant 0 : index
    %122 = vector.load %arg4[%c3_82, %c0_83, %c0_84] : memref<9x16x16xbf16, #tpu.memory_space<vmem>>, vector<1x16x16xbf16>
    %123 = vector.shape_cast %122 : vector<1x16x16xbf16> to vector<16x16xbf16>
    %124 = arith.truncf %121 : vector<16x128xf32> to vector<16x128xbf16>
    %cst_85 = arith.constant dense<0.000000e+00> : vector<16x128xf32>
    %125 = tpu.matmul %123, %124, %cst_85 {dimension_numbers = #tpu.dot_dimension_numbers<[1], [0], [0], [1], [0, 0, 1, 1], [], []>} : vector<16x16xbf16>, vector<16x128xbf16>, vector<16x128xf32> -> vector<16x128xf32>
    %126 = arith.addf %116, %125 : vector<16x128xf32>
    %c4_86 = arith.constant 4 : index
    %c0_87 = arith.constant 0 : index
    %c0_88 = arith.constant 0 : index
    %127 = vector.load %arg4[%c4_86, %c0_87, %c0_88] : memref<9x16x16xbf16, #tpu.memory_space<vmem>>, vector<1x16x16xbf16>
    %128 = vector.shape_cast %127 : vector<1x16x16xbf16> to vector<16x16xbf16>
    %129 = arith.truncf %3 : vector<16x128xf32> to vector<16x128xbf16>
    %cst_89 = arith.constant dense<0.000000e+00> : vector<16x128xf32>
    %130 = tpu.matmul %128, %129, %cst_89 {dimension_numbers = #tpu.dot_dimension_numbers<[1], [0], [0], [1], [0, 0, 1, 1], [], []>} : vector<16x16xbf16>, vector<16x128xbf16>, vector<16x128xf32> -> vector<16x128xf32>
    %131 = arith.addf %126, %130 : vector<16x128xf32>
    %c5_90 = arith.constant 5 : index
    %c0_91 = arith.constant 0 : index
    %c0_92 = arith.constant 0 : index
    %132 = vector.load %arg8[%c5_90, %c0_91, %c0_92] : memref<9x1x128xf32, #tpu.memory_space<vmem>>, vector<1x1x128xf32>
    %133 = vector.shape_cast %132 : vector<1x1x128xf32> to vector<1x128xf32>
    %c127_i32_93 = arith.constant 127 : i32
    %134 = tpu.dynamic_rotate %3 by %c127_i32_93 dim 1 : vector<16x128xf32>, i32 -> vector<16x128xf32>
    %135 = vector.broadcast %133 : vector<1x128xf32> to vector<16x128xf32>
    %136 = arith.mulf %134, %135 : vector<16x128xf32>
    %c5_94 = arith.constant 5 : index
    %c0_95 = arith.constant 0 : index
    %c0_96 = arith.constant 0 : index
    %137 = vector.load %arg4[%c5_94, %c0_95, %c0_96] : memref<9x16x16xbf16, #tpu.memory_space<vmem>>, vector<1x16x16xbf16>
    %138 = vector.shape_cast %137 : vector<1x16x16xbf16> to vector<16x16xbf16>
    %139 = arith.truncf %136 : vector<16x128xf32> to vector<16x128xbf16>
    %cst_97 = arith.constant dense<0.000000e+00> : vector<16x128xf32>
    %140 = tpu.matmul %138, %139, %cst_97 {dimension_numbers = #tpu.dot_dimension_numbers<[1], [0], [0], [1], [0, 0, 1, 1], [], []>} : vector<16x16xbf16>, vector<16x128xbf16>, vector<16x128xf32> -> vector<16x128xf32>
    %141 = arith.addf %131, %140 : vector<16x128xf32>
    %c6_98 = arith.constant 6 : index
    %c0_99 = arith.constant 0 : index
    %c0_100 = arith.constant 0 : index
    %142 = vector.load %arg8[%c6_98, %c0_99, %c0_100] : memref<9x1x128xf32, #tpu.memory_space<vmem>>, vector<1x1x128xf32>
    %143 = vector.shape_cast %142 : vector<1x1x128xf32> to vector<1x128xf32>
    %c121_i32_101 = arith.constant 121 : i32
    %144 = tpu.dynamic_rotate %3 by %c121_i32_101 dim 1 : vector<16x128xf32>, i32 -> vector<16x128xf32>
    %145 = vector.broadcast %143 : vector<1x128xf32> to vector<16x128xf32>
    %146 = arith.mulf %144, %145 : vector<16x128xf32>
    %c6_102 = arith.constant 6 : index
    %c0_103 = arith.constant 0 : index
    %c0_104 = arith.constant 0 : index
    %147 = vector.load %arg4[%c6_102, %c0_103, %c0_104] : memref<9x16x16xbf16, #tpu.memory_space<vmem>>, vector<1x16x16xbf16>
    %148 = vector.shape_cast %147 : vector<1x16x16xbf16> to vector<16x16xbf16>
    %149 = arith.truncf %146 : vector<16x128xf32> to vector<16x128xbf16>
    %cst_105 = arith.constant dense<0.000000e+00> : vector<16x128xf32>
    %150 = tpu.matmul %148, %149, %cst_105 {dimension_numbers = #tpu.dot_dimension_numbers<[1], [0], [0], [1], [0, 0, 1, 1], [], []>} : vector<16x16xbf16>, vector<16x128xbf16>, vector<16x128xf32> -> vector<16x128xf32>
    %151 = arith.addf %141, %150 : vector<16x128xf32>
    %c7_106 = arith.constant 7 : index
    %c0_107 = arith.constant 0 : index
    %c0_108 = arith.constant 0 : index
    %152 = vector.load %arg8[%c7_106, %c0_107, %c0_108] : memref<9x1x128xf32, #tpu.memory_space<vmem>>, vector<1x1x128xf32>
    %153 = vector.shape_cast %152 : vector<1x1x128xf32> to vector<1x128xf32>
    %c120_i32_109 = arith.constant 120 : i32
    %154 = tpu.dynamic_rotate %3 by %c120_i32_109 dim 1 : vector<16x128xf32>, i32 -> vector<16x128xf32>
    %155 = vector.broadcast %153 : vector<1x128xf32> to vector<16x128xf32>
    %156 = arith.mulf %154, %155 : vector<16x128xf32>
    %c7_110 = arith.constant 7 : index
    %c0_111 = arith.constant 0 : index
    %c0_112 = arith.constant 0 : index
    %157 = vector.load %arg4[%c7_110, %c0_111, %c0_112] : memref<9x16x16xbf16, #tpu.memory_space<vmem>>, vector<1x16x16xbf16>
    %158 = vector.shape_cast %157 : vector<1x16x16xbf16> to vector<16x16xbf16>
    %159 = arith.truncf %156 : vector<16x128xf32> to vector<16x128xbf16>
    %cst_113 = arith.constant dense<0.000000e+00> : vector<16x128xf32>
    %160 = tpu.matmul %158, %159, %cst_113 {dimension_numbers = #tpu.dot_dimension_numbers<[1], [0], [0], [1], [0, 0, 1, 1], [], []>} : vector<16x16xbf16>, vector<16x128xbf16>, vector<16x128xf32> -> vector<16x128xf32>
    %161 = arith.addf %151, %160 : vector<16x128xf32>
    %c8_114 = arith.constant 8 : index
    %c0_115 = arith.constant 0 : index
    %c0_116 = arith.constant 0 : index
    %162 = vector.load %arg8[%c8_114, %c0_115, %c0_116] : memref<9x1x128xf32, #tpu.memory_space<vmem>>, vector<1x1x128xf32>
    %163 = vector.shape_cast %162 : vector<1x1x128xf32> to vector<1x128xf32>
    %c119_i32_117 = arith.constant 119 : i32
    %164 = tpu.dynamic_rotate %3 by %c119_i32_117 dim 1 : vector<16x128xf32>, i32 -> vector<16x128xf32>
    %165 = vector.broadcast %163 : vector<1x128xf32> to vector<16x128xf32>
    %166 = arith.mulf %164, %165 : vector<16x128xf32>
    %c8_118 = arith.constant 8 : index
    %c0_119 = arith.constant 0 : index
    %c0_120 = arith.constant 0 : index
    %167 = vector.load %arg4[%c8_118, %c0_119, %c0_120] : memref<9x16x16xbf16, #tpu.memory_space<vmem>>, vector<1x16x16xbf16>
    %168 = vector.shape_cast %167 : vector<1x16x16xbf16> to vector<16x16xbf16>
    %169 = arith.truncf %166 : vector<16x128xf32> to vector<16x128xbf16>
    %cst_121 = arith.constant dense<0.000000e+00> : vector<16x128xf32>
    %170 = tpu.matmul %168, %169, %cst_121 {dimension_numbers = #tpu.dot_dimension_numbers<[1], [0], [0], [1], [0, 0, 1, 1], [], []>} : vector<16x16xbf16>, vector<16x128xbf16>, vector<16x128xf32> -> vector<16x128xf32>
    %171 = arith.addf %161, %170 : vector<16x128xf32>
    %172 = arith.addf %87, %171 : vector<16x128xf32>
    %c0_122 = arith.constant 0 : index
    %c0_123 = arith.constant 0 : index
    %173 = vector.load %arg5[%c0_122, %c0_123] : memref<16x1xf32, #tpu.memory_space<vmem>>, vector<16x1xf32>
    %174 = vector.broadcast %173 : vector<16x1xf32> to vector<16x128xf32>
    %175 = arith.addf %172, %174 : vector<16x128xf32>
    %cst_124 = arith.constant 1.000000e-01 : f32
    %176 = vector.broadcast %cst_124 : f32 to vector<16x128xf32>
    %177 = arith.mulf %176, %175 : vector<16x128xf32>
    %178 = arith.maximumf %175, %177 : vector<16x128xf32>
    %c0_125 = arith.constant 0 : index
    %c0_126 = arith.constant 0 : index
    %179 = vector.load %arg6[%c0_125, %c0_126] : memref<16x16xbf16, #tpu.memory_space<vmem>>, vector<16x16xbf16>
    %180 = arith.truncf %178 : vector<16x128xf32> to vector<16x128xbf16>
    %cst_127 = arith.constant dense<0.000000e+00> : vector<16x128xf32>
    %181 = tpu.matmul %179, %180, %cst_127 {dimension_numbers = #tpu.dot_dimension_numbers<[1], [0], [0], [1], [0, 0, 1, 1], [], []>} : vector<16x16xbf16>, vector<16x128xbf16>, vector<16x128xf32> -> vector<16x128xf32>
    %c0_128 = arith.constant 0 : index
    %c0_129 = arith.constant 0 : index
    %182 = vector.load %arg7[%c0_128, %c0_129] : memref<16x1xf32, #tpu.memory_space<vmem>>, vector<16x1xf32>
    %183 = vector.broadcast %182 : vector<16x1xf32> to vector<16x128xf32>
    %184 = arith.addf %181, %183 : vector<16x128xf32>
    %cst_130 = arith.constant 1.000000e-01 : f32
    %185 = vector.broadcast %cst_130 : f32 to vector<16x128xf32>
    %186 = arith.mulf %185, %184 : vector<16x128xf32>
    %187 = arith.maximumf %184, %186 : vector<16x128xf32>
    %cst_131 = arith.constant 0.000000e+00 : f32
    %188 = vector.broadcast %cst_131 : f32 to vector<16x128xf32>
    %189 = arith.subf %188, %187 : vector<16x128xf32>
    %190 = math.exp %189 : vector<16x128xf32>
    %cst_132 = arith.constant 1.000000e+00 : f32
    %191 = vector.broadcast %cst_132 : f32 to vector<16x128xf32>
    %192 = arith.addf %191, %190 : vector<16x128xf32>
    %cst_133 = arith.constant 1.000000e+00 : f32
    %193 = vector.broadcast %cst_133 : f32 to vector<16x128xf32>
    %194 = arith.divf %193, %192 : vector<16x128xf32>
    %c0_134 = arith.constant 0 : index
    %c0_135 = arith.constant 0 : index
    %195 = vector.load %arg9[%c0_134, %c0_135] : memref<16x1xf32, #tpu.memory_space<vmem>>, vector<16x1xf32>
    %196 = vector.broadcast %195 : vector<16x1xf32> to vector<16x128xf32>
    %197 = arith.mulf %194, %196 : vector<16x128xf32>
    %c0_136 = arith.constant 0 : index
    %c0_137 = arith.constant 0 : index
    %198 = vector.load %arg10[%c0_136, %c0_137] : memref<16x1xf32, #tpu.memory_space<vmem>>, vector<16x1xf32>
    %199 = vector.broadcast %198 : vector<16x1xf32> to vector<16x128xf32>
    %200 = arith.mulf %187, %199 : vector<16x128xf32>
    %201 = math.exp %200 : vector<16x128xf32>
    %c0_138 = arith.constant 0 : index
    %c0_139 = arith.constant 0 : index
    %202 = vector.load %arg11[%c0_138, %c0_139] : memref<16x1xf32, #tpu.memory_space<vmem>>, vector<16x1xf32>
    %203 = vector.broadcast %202 : vector<16x1xf32> to vector<16x128xf32>
    %204 = arith.mulf %201, %203 : vector<16x128xf32>
    %205 = arith.addf %197, %204 : vector<16x128xf32>
    %c0_140 = arith.constant 0 : index
    %c0_141 = arith.constant 0 : index
    %206 = vector.load %arg12[%c0_140, %c0_141] : memref<16x128xf32, #tpu.memory_space<vmem>>, vector<16x128xf32>
    %207 = arith.addf %205, %206 : vector<16x128xf32>
    %c0_142 = arith.constant 0 : index
    %c0_143 = arith.constant 0 : index
    %208 = vector.load %arg13[%c0_142, %c0_143] : memref<16x128xf32, #tpu.memory_space<vmem>>, vector<16x128xf32>
    tpu.vector_store %arg13[%c0_142, %c0_143], %207 {strides = array<i32>} : memref<16x128xf32, #tpu.memory_space<vmem>>, vector<16x128xf32>,
    return
  }
  func.func @transform_0(%arg0: i32) -> (i32, i32) {
    %c0_i32 = arith.constant 0 : i32
    %c0_i32_0 = arith.constant 0 : i32
    %c0_i32_1 = arith.constant 0 : i32
    return %c0_i32, %c0_i32_0 : i32, i32
  }
  func.func @transform_1(%arg0: i32) -> (i32, i32) {
    %c0_i32 = arith.constant 0 : i32
    %c0_i32_0 = arith.constant 0 : i32
    %c0_i32_1 = arith.constant 0 : i32
    return %c0_i32, %c0_i32_0 : i32, i32
  }
  func.func @transform_2(%arg0: i32) -> (i32, i32, i32) {
    %c0_i32 = arith.constant 0 : i32
    %c0_i32_0 = arith.constant 0 : i32
    %c0_i32_1 = arith.constant 0 : i32
    %c0_i32_2 = arith.constant 0 : i32
    return %c0_i32, %c0_i32_0, %c0_i32_1 : i32, i32, i32
  }
  func.func @transform_3(%arg0: i32) -> (i32, i32, i32) {
    %c0_i32 = arith.constant 0 : i32
    %c0_i32_0 = arith.constant 0 : i32
    %c0_i32_1 = arith.constant 0 : i32
    %c0_i32_2 = arith.constant 0 : i32
    return %c0_i32, %c0_i32_0, %c0_i32_1 : i32, i32, i32
  }
  func.func @transform_4(%arg0: i32) -> (i32, i32) {
    %c0_i32 = arith.constant 0 : i32
    %c0_i32_0 = arith.constant 0 : i32
    %c0_i32_1 = arith.constant 0 : i32
    return %c0_i32, %c0_i32_0 : i32, i32
  }
  func.func @transform_5(%arg0: i32) -> (i32, i32) {
    %c0_i32 = arith.constant 0 : i32
    %c0_i32_0 = arith.constant 0 : i32
    %c0_i32_1 = arith.constant 0 : i32
    return %c0_i32, %c0_i32_0 : i32, i32
  }
  func.func @transform_6(%arg0: i32) -> (i32, i32) {
    %c0_i32 = arith.constant 0 : i32
    %c0_i32_0 = arith.constant 0 : i32
    %c0_i32_1 = arith.constant 0 : i32
    return %c0_i32, %c0_i32_0 : i32, i32
  }
  func.func @transform_7(%arg0: i32) -> (i32, i32, i32) {
    %c0_i32 = arith.constant 0 : i32
    %c0_i32_0 = arith.constant 0 : i32
    %c0_i32_1 = arith.constant 0 : i32
    %c0_i32_2 = arith.constant 0 : i32
    return %c0_i32, %c0_i32_0, %c0_i32_1 : i32, i32, i32
  }
  func.func @transform_8(%arg0: i32) -> (i32, i32) {
    %c0_i32 = arith.constant 0 : i32
    %c0_i32_0 = arith.constant 0 : i32
    %c0_i32_1 = arith.constant 0 : i32
    return %c0_i32, %c0_i32_0 : i32, i32
  }
  func.func @transform_9(%arg0: i32) -> (i32, i32) {
    %c0_i32 = arith.constant 0 : i32
    %c0_i32_0 = arith.constant 0 : i32
    %c0_i32_1 = arith.constant 0 : i32
    return %c0_i32, %c0_i32_0 : i32, i32
  }
  func.func @transform_10(%arg0: i32) -> (i32, i32) {
    %c0_i32 = arith.constant 0 : i32
    %c0_i32_0 = arith.constant 0 : i32
    %c0_i32_1 = arith.constant 0 : i32
    return %c0_i32, %c0_i32_0 : i32, i32
  }
  func.func @transform_11(%arg0: i32) -> (i32, i32) {
    %c0_i32 = arith.constant 0 : i32
    %c0_i32_0 = arith.constant 0 : i32
    %c0_i32_1 = arith.constant 0 : i32
    return %c0_i32, %c0_i32_0 : i32, i32
  }
  func.func @transform_12(%arg0: i32) -> (i32, i32) {
    %c0_i32 = arith.constant 0 : i32
    %c0_i32_0 = arith.constant 0 : i32
    %c0_i32_1 = arith.constant 0 : i32
    return %c0_i32, %c0_i32_0 : i32, i32
  }
}

</mosaic_0001>

<llo_original>
// kernel: _lambda_.4
$region0: #{_lambda_.4}
  #allocation0 [shape = 'u32[]', space=smem, size = 0x4, offset = 0x4, fixed_abs, tag = 'smem constant byte address 0x4 - core index']
  #allocation1 [shape = 'u32[144,128]{1,0:T(1,128)}', space=vmem, size = 0x12000, scoped, tag = 'internal scratch']
  %s0 = inlined_call_operand.vmem [shape: f32[4,512], index: 0, kind: input, shape index: {}]
  %s1 = inlined_call_operand.vmem [shape: bf16[9,8,4], index: 1, kind: input, shape index: {}]
  %s2 = inlined_call_operand.vmem [shape: f32[8,1], index: 2, kind: input, shape index: {}]
  %s3 = inlined_call_operand.vmem [shape: f32[9,1,256], index: 3, kind: input, shape index: {}]
  %s4 = inlined_call_operand.vmem [shape: bf16[8,512], index: 4, kind: output, shape index: {}]
  %s5 = sld [smem:[#allocation0]]
  $region49: #{_lambda_.4} parent=0
    _
  %s7 = ssub.s32 1, %s5
  %s8 = scalar_select 0, %s7, %s5
  loop: start=0, step=1, limit=4
  $region2: #{_lambda_.4} parent=0 // loop_pre_header
    _
  $region3: #{_lambda_.4} parent=0 // loop_header
    %s10 = sphi 0, %s14
    %p11 = scmp.ge.s32.totalorder %s10, 4
    %s20 = sphi 0, %s22
    %s23 = sphi 0, %s20
    %s24 = sphi 0, %s23
    %s40 = sphi 0, %s24
    %s44 = sphi 0, %s44
    %s46 = sphi 0, %s44
    %s47 = sphi 0, %s46
    %s61 = sphi 0, %s47
    %s65 = sphi 0, %s65
    %s67 = sphi 0, %s65
    %s68 = sphi 0, %s67
    %s82 = sphi 0, %s68
    %s86 = sphi 0, %s86
    %s88 = sphi 0, %s86
    %s89 = sphi 0, %s88
    %s103 = sphi 0, %s89
    %s109 = sphi 0, %s111
    %s112 = sphi 0, %s109
    %s113 = sphi 0, %s112
    %s129 = sphi 0, %s113
  $region4: #{_lambda_.4} parent=0 // loop_header_branch
    %13 = sbr.rel (%p11) target = $region8
  $region5: #{_lambda_.4} parent=0 // loop_body
    %s15 = ssub.s32 %s10, 1
    %s16 = ssub.s32 %s10, 2
    %s17 = sadd.s32 %s10, 1
    %s18 = ssub.s32 %s10, %s17
    %p19 = scmp.eq.s32.totalorder %s18, 0
    %s21 = sadd.s32 %s20, 1
    %s22 = scalar_select %p19, %s20, %s21
    %p25 = pneg %p19
    %p26 = scmp.eq.s32.totalorder %s10, 1
    %p27 = por %p25, %p26
    %p28 = scmp.ne.s32.totalorder %s20, %s23
    %p29 = scmp.eq.s32.totalorder %s10, 0
    %p30 = por %p28, %p29
    %p31 = scmp.ne.s32.totalorder %s20, %s23
    %p32 = scmp.eq.s32.totalorder %s15, 1
    %p33 = por %p31, %p32
    %p34 = scmp.ne.s32.totalorder %s23, %s24
    %p35 = scmp.eq.s32.totalorder %s15, 0
    %p36 = por %p34, %p35
    %p37 = scmp.ne.s32.totalorder %s23, %s24
    %p38 = scmp.eq.s32.totalorder %s16, 1
    %p39 = por %p37, %p38
    %p41 = scmp.ne.s32.totalorder %s24, %s40
    %p42 = scmp.eq.s32.totalorder %s16, 0
    %p43 = por %p41, %p42
    %s45 = sadd.s32 %s44, 1
    %p48 = scmp.eq.s32.totalorder %s10, 1
    %p49 = scmp.ne.s32.totalorder %s44, %s46
    %p50 = scmp.eq.s32.totalorder %s10, 0
    %p51 = por %p49, %p50
    %p52 = scmp.ne.s32.totalorder %s44, %s46
    %p53 = scmp.eq.s32.totalorder %s15, 1
    %p54 = por %p52, %p53
    %p55 = scmp.ne.s32.totalorder %s46, %s47
    %p56 = scmp.eq.s32.totalorder %s15, 0
    %p57 = por %p55, %p56
    %p58 = scmp.ne.s32.totalorder %s46, %s47
    %p59 = scmp.eq.s32.totalorder %s16, 1
    %p60 = por %p58, %p59
    %p62 = scmp.ne.s32.totalorder %s47, %s61
    %p63 = scmp.eq.s32.totalorder %s16, 0
    %p64 = por %p62, %p63
    %s66 = sadd.s32 %s65, 1
    %p69 = scmp.eq.s32.totalorder %s10, 1
    %p70 = scmp.ne.s32.totalorder %s65, %s67
    %p71 = scmp.eq.s32.totalorder %s10, 0
    %p72 = por %p70, %p71
    %p73 = scmp.ne.s32.totalorder %s65, %s67
    %p74 = scmp.eq.s32.totalorder %s15, 1
    %p75 = por %p73, %p74
    %p76 = scmp.ne.s32.totalorder %s67, %s68
    %p77 = scmp.eq.s32.totalorder %s15, 0
    %p78 = por %p76, %p77
    %p79 = scmp.ne.s32.totalorder %s67, %s68
    %p80 = scmp.eq.s32.totalorder %s16, 1
    %p81 = por %p79, %p80
    %p83 = scmp.ne.s32.totalorder %s68, %s82
    %p84 = scmp.eq.s32.totalorder %s16, 0
    %p85 = por %p83, %p84
    %s87 = sadd.s32 %s86, 1
    %p90 = scmp.eq.s32.totalorder %s10, 1
    %p91 = scmp.ne.s32.totalorder %s86, %s88
    %p92 = scmp.eq.s32.totalorder %s10, 0
    %p93 = por %p91, %p92
    %p94 = scmp.ne.s32.totalorder %s86, %s88
    %p95 = scmp.eq.s32.totalorder %s15, 1
    %p96 = por %p94, %p95
    %p97 = scmp.ne.s32.totalorder %s88, %s89
    %p98 = scmp.eq.s32.totalorder %s15, 0
    %p99 = por %p97, %p98
    %p100 = scmp.ne.s32.totalorder %s88, %s89
    %p101 = scmp.eq.s32.totalorder %s16, 1
    %p102 = por %p100, %p101
    %p104 = scmp.ne.s32.totalorder %s89, %s103
    %p105 = scmp.eq.s32.totalorder %s16, 0
    %p106 = por %p104, %p105
    %s107 = ssub.s32 %s10, %s17
    %p108 = scmp.eq.s32.totalorder %s107, 0
    %s110 = sadd.s32 %s109, 1
    %s111 = scalar_select %p108, %s109, %s110
    %p114 = pneg %p108
    %p115 = scmp.eq.s32.totalorder %s10, 1
    %p116 = por %p114, %p115
    %p117 = scmp.ne.s32.totalorder %s109, %s112
    %p118 = scmp.eq.s32.totalorder %s10, 0
    %p119 = por %p117, %p118
    %p120 = scmp.ne.s32.totalorder %s109, %s112
    %p121 = scmp.eq.s32.totalorder %s15, 1
    %p122 = por %p120, %p121
    %p123 = scmp.ne.s32.totalorder %s112, %s113
    %p124 = scmp.eq.s32.totalorder %s15, 0
    %p125 = por %p123, %p124
    %p126 = scmp.ne.s32.totalorder %s112, %s113
    %p127 = scmp.eq.s32.totalorder %s16, 1
    %p128 = por %p126, %p127
    %p130 = scmp.ne.s32.totalorder %s113, %s129
    %p131 = scmp.eq.s32.totalorder %s16, 0
    %p132 = por %p130, %p131
    %p133 = scmp.le.s32.totalorder 1, %s10
    %p134 = scmp.lt.s32.totalorder %s10, 3
    %p135 = pnand %p133, %p134
    %p136 = pneg %p135
    // Predicated region
    $region9: #{_lambda_.4} parent=5 // pred_check
      _
    $region10: #{_lambda_.4} parent=5 // pred_check_branch
      %138 = sbr.rel (%p135) target = $region12
    $region11: #{_lambda_.4} parent=5 // pred_region
      %s139 = ssub.s32 %s10, 1
      // Predicated region
      $region13: #{_lambda_.4} parent=11 // pred_check
        %p140 = pneg %p57
      $region14: #{_lambda_.4} parent=11 // pred_check_branch
        %142 = sbr.rel (%p140) target = $region16
      $region15: #{_lambda_.4} parent=11 // pred_region
        _
      $region16: #{_lambda_.4} parent=11 // pred_fallthru
        _
      // Predicated region
      $region17: #{_lambda_.4} parent=11 // pred_check
        %p143 = pneg %p78
      $region18: #{_lambda_.4} parent=11 // pred_check_branch
        %145 = sbr.rel (%p143) target = $region20
      $region19: #{_lambda_.4} parent=11 // pred_region
        _
      $region20: #{_lambda_.4} parent=11 // pred_fallthru
        _
      // Predicated region
      $region21: #{_lambda_.4} parent=11 // pred_check
        %p146 = pneg %p99
      $region22: #{_lambda_.4} parent=11 // pred_check_branch
        %148 = sbr.rel (%p146) target = $region24
      $region23: #{_lambda_.4} parent=11 // pred_region
        _
      $region24: #{_lambda_.4} parent=11 // pred_fallthru
        _
    $region12: #{_lambda_.4} parent=5 // pred_fallthru
      _
    %p149 = scmp.lt.s32.totalorder %s10, 2
    // Predicated region
    $region25: #{_lambda_.4} parent=5 // pred_check
      %p150 = pneg %p149
    $region26: #{_lambda_.4} parent=5 // pred_check_branch
      %152 = sbr.rel (%p150) target = $region28
    $region27: #{_lambda_.4} parent=5 // pred_region
      // Predicated region
      $region29: #{_lambda_.4} parent=27 // pred_check
        %p153 = pneg %p30
      $region30: #{_lambda_.4} parent=27 // pred_check_branch
        %155 = sbr.rel (%p153) target = $region32
      $region31: #{_lambda_.4} parent=27 // pred_region
        %s156 = smul.u32 2, %s10
        %p157 = scmp.lt.s32.totalorder %s156, 3
        %s158 = scalar_select %p157, %s156, 3
        %s159 = smul.addr %s158, 4
        %s160 = scalar_lea.vmem %s0, %s159
        %s161 = smul.u32 2, %s10
      $region32: #{_lambda_.4} parent=27 // pred_fallthru
        _
    $region28: #{_lambda_.4} parent=5 // pred_fallthru
      _
    %p162 = scmp.le.s32.totalorder 1, %s10
    %p163 = scmp.lt.s32.totalorder %s10, 3
    %p164 = pnand %p162, %p163
    %p165 = pneg %p164
    // Predicated region
    $region33: #{_lambda_.4} parent=5 // pred_check
      _
    $region34: #{_lambda_.4} parent=5 // pred_check_branch
      %167 = sbr.rel (%p164) target = $region36
    $region35: #{_lambda_.4} parent=5 // pred_region
      %s168 = ssub.s32 %s10, 1
      %s169 = smul.u32 2, %s15
      %p170 = scmp.lt.s32.totalorder %s169, 3
      %s171 = scalar_select %p170, %s169, 3
      %s172 = smul.addr %s171, 4
      %s173 = scalar_lea.vmem %s0, %s172
      %p174 = pneg %p36
      %p175 = pneg %p33
      %p176 = pneg %p57
      %p177 = pneg %p54
      %p178 = pneg %p78
      %p179 = pneg %p75
      %p180 = pneg %p99
      %p181 = pneg %p96
      %p182 = pneg %p125
      %p183 = pneg %p122
      %s184 = smul.u32 2, %s15
      %p185 = scmp.lt.s32.totalorder %s184, 3
      %s186 = scalar_select %p185, %s184, 3
      %s187 = smul.addr %s186, 4
      %s188 = scalar_lea.vmem %s4, %s187
      %s189 = smul.u32 2, %s15
      %p190 = scmp.lt.s32.totalorder %s189, 3
      %s191 = scalar_select %p190, %s189, 3
      %s192 = smul.addr %s191, 4
      %s193 = scalar_lea.vmem %s0, %s192
      %s194 = smul.u32 2, %s15
      %s195 = smul.u32 2, %s15
      %p196 = scmp.lt.s32.totalorder %s195, 3
      %s197 = scalar_select %p196, %s195, 3
      %s198 = smul.addr %s197, 4
      %s199 = scalar_lea.vmem %s4, %s198
      %s200 = smul.u32 2, %s15
      %v202 = vld [vmem:[%s193] sm:$0xff]
      %v203 = vld [vmem:[%s3] sm:$0x3]
      %v205 = vcombine.high %v202, %v202
      %207 = vrot.lane.b32.xlu0 %v202, 17
      %v208 = vpop.permute.xlu0 %207
      %209 = vrot.lane.b32.xlu0 %v205, 17
      %v210 = vpop.permute.xlu0 %209
      %v211 = vlaneseq
      %v212 = vand.u32 %v211, 127
      %vm213 = vcmp.lt.s32.totalorder %v212, 17
      %v214 = vsel %vm213, %v208, %v210
      %v215 = vsel %vm213, %v210, %v208
      %v217 = vlaneseq
      %v218 = vshrl.u32 %v217, 7
      %v219 = vsub.s32 0, %v218
      %v220 = vrot.slane %v203, %v219
      %v221 = vlaneseq
      %v222 = vshrl.u32 %v221, 7
      %v223 = vsub.s32 1, %v222
      %v224 = vrot.slane %v203, %v223
      %v227 = vmul.f32 %v215, %v220
      %v228 = vmul.f32 %v214, %v224
      %v229 = vld [vmem:[%s1] sm:$0xf]
      %v230 = vpack.c.bf16 %v227, %v227
      %v231 = vpack.c.bf16 %v228, %v228
      %s232 = scalar_lea.vmem %s3, 2
      %v233 = vld [vmem:[%s232] sm:$0x3]
      %234 = vrot.lane.b32.xlu0 %v202, 16
      %v235 = vpop.permute.xlu0 %234
      %236 = vrot.lane.b32.xlu0 %v205, 16
      %v237 = vpop.permute.xlu0 %236
      %vm238 = vcmp.lt.s32.totalorder %v212, 16
      %v239 = vsel %vm238, %v235, %v237
      %v240 = vsel %vm238, %v237, %v235
      %v242 = vlaneseq
      %v243 = vshrl.u32 %v242, 7
      %v244 = vsub.s32 0, %v243
      %v245 = vrot.slane %v233, %v244
      %v246 = vlaneseq
      %v247 = vshrl.u32 %v246, 7
      %v248 = vsub.s32 1, %v247
      %v249 = vrot.slane %v233, %v248
      %v252 = vmul.f32 %v240, %v245
      %v253 = vmul.f32 %v239, %v249
      %s254 = scalar_lea.vmem %s1, 4
      %v255 = vld [vmem:[%s254] sm:$0xf]
      %v256 = vpack.c.bf16 %v252, %v252
      %v257 = vpack.c.bf16 %v253, %v253
      %vm258 = vcmask 31744
      %v260 = vsel %vm258, %v255, 0
      %vm262 = vcmask 1041408
      %v264 = vsel %vm262, %v256, 0
      %v267 = vsel %vm262, %v257, 0
      %269 = vmatprep.subr.bf16.mxu0 %v267
      %270 = vmatpush1.bf16.msra.mxu0 %v264
      %271 = vmatprep.subr.bf16.mxu0 0
      %272 = vmatpush1.bf16.msra.mxu0 0
      %273 = vmatprep.subr.bf16.mxu0 0
      %274 = vmatpush1.bf16.msra.mxu0 0
      %275 = vmatprep.subr.bf16.mxu0 0
      %276 = vmatpush1.bf16.msra.mxu0 0
      %277 = vmatprep.subr.bf16.mxu0 0
      %278 = vmatpush1.bf16.msra.mxu0 0
      %279 = vmatprep.subr.bf16.mxu0 0
      %280 = vmatpush1.bf16.msra.mxu0 0
      %281 = vmatprep.subr.bf16.mxu0 0
      %282 = vmatpush1.bf16.msra.mxu0 0
      %283 = vmatprep.subr.bf16.mxu0 0
      %284 = vmatpush1.bf16.msra.mxu0 0
      %285 = vmatprep.subr.bf16.mxu0 0
      %286 = vmatpush1.bf16.msra.mxu0 0
      %287 = vmatprep.subr.bf16.mxu0 0
      %288 = vmatpush1.bf16.msra.mxu0 0
      %289 = vmatprep.subr.bf16.mxu0 0
      %290 = vmatpush1.bf16.msra.mxu0 0
      %291 = vmatprep.subr.bf16.mxu0 0
      %292 = vmatpush1.bf16.msra.mxu0 0
      %293 = vmatprep.subr.bf16.mxu0 0
      %294 = vmatpush1.bf16.msra.mxu0 0
      %295 = vmatprep.subr.bf16.mxu0 0
      %296 = vmatpush1.bf16.msra.mxu0 0
      %297 = vmatprep.subr.bf16.mxu0 0
      %298 = vmatpush1.bf16.msra.mxu0 0
      %299 = vmatprep.subr.bf16.mxu0 0
      %300 = vmatpush1.bf16.msra.mxu0 0
      %301 = vmatprep.mubr.bf16.mxu0 0
      %302 = vmatmul.mubr.bf16.gmra.mrb[0].mxu0 %v260
      %v303 = vpop.f32.mrb[0].mxu0
      %v304 = vadd.f32 0.0, %v303
      %v305 = vpop.f32.mrb[0].mxu0
      %v306 = vadd.f32 0.0, %v305
      %v307 = vpop.f32.mrb[0].mxu0
      %v308 = vpop.f32.mrb[0].mxu0
      %309 = vdwg.mxu0
      %v311 = vsel %vm258, %v229, 0
      %v314 = vsel %vm262, %v230, 0
      %v317 = vsel %vm262, %v231, 0
      %319 = vmatprep.subr.bf16.mxu0 %v317
      %320 = vmatpush1.bf16.msra.mxu0 %v314
      %321 = vmatprep.subr.bf16.mxu0 0
      %322 = vmatpush1.bf16.msra.mxu0 0
      %323 = vmatprep.subr.bf16.mxu0 0
      %324 = vmatpush1.bf16.msra.mxu0 0
      %325 = vmatprep.subr.bf16.mxu0 0
      %326 = vmatpush1.bf16.msra.mxu0 0
      %327 = vmatprep.subr.bf16.mxu0 0
      %328 = vmatpush1.bf16.msra.mxu0 0
      %329 = vmatprep.subr.bf16.mxu0 0
      %330 = vmatpush1.bf16.msra.mxu0 0
      %331 = vmatprep.subr.bf16.mxu0 0
      %332 = vmatpush1.bf16.msra.mxu0 0
      %333 = vmatprep.subr.bf16.mxu0 0
      %334 = vmatpush1.bf16.msra.mxu0 0
      %335 = vmatprep.subr.bf16.mxu0 0
      %336 = vmatpush1.bf16.msra.mxu0 0
      %337 = vmatprep.subr.bf16.mxu0 0
      %338 = vmatpush1.bf16.msra.mxu0 0
      %339 = vmatprep.subr.bf16.mxu0 0
      %340 = vmatpush1.bf16.msra.mxu0 0
      %341 = vmatprep.subr.bf16.mxu0 0
      %342 = vmatpush1.bf16.msra.mxu0 0
      %343 = vmatprep.subr.bf16.mxu0 0
      %344 = vmatpush1.bf16.msra.mxu0 0
      %345 = vmatprep.subr.bf16.mxu0 0
      %346 = vmatpush1.bf16.msra.mxu0 0
      %347 = vmatprep.subr.bf16.mxu0 0
      %348 = vmatpush1.bf16.msra.mxu0 0
      %349 = vmatprep.subr.bf16.mxu0 0
      %350 = vmatpush1.bf16.msra.mxu0 0
      %351 = vmatprep.mubr.bf16.mxu0 0
      %352 = vmatmul.mubr.bf16.gmra.mrb[0].mxu0 %v311
      %v353 = vpop.f32.mrb[0].mxu0
      %v354 = vadd.f32 %v304, %v353
      %v355 = vpop.f32.mrb[0].mxu0
      %v356 = vadd.f32 %v306, %v355
      %v357 = vpop.f32.mrb[0].mxu0
      %v358 = vpop.f32.mrb[0].mxu0
      %359 = vdwg.mxu0
      %s360 = scalar_lea.vmem %s3, 4
      %v361 = vld [vmem:[%s360] sm:$0x3]
      %362 = vrot.lane.b32.xlu0 %v202, 15
      %v363 = vpop.permute.xlu0 %362
      %364 = vrot.lane.b32.xlu0 %v205, 15
      %v365 = vpop.permute.xlu0 %364
      %vm366 = vcmp.lt.s32.totalorder %v212, 15
      %v367 = vsel %vm366, %v363, %v365
      %v368 = vsel %vm366, %v365, %v363
      %v370 = vlaneseq
      %v371 = vshrl.u32 %v370, 7
      %v372 = vsub.s32 0, %v371
      %v373 = vrot.slane %v361, %v372
      %v374 = vlaneseq
      %v375 = vshrl.u32 %v374, 7
      %v376 = vsub.s32 1, %v375
      %v377 = vrot.slane %v361, %v376
      %v380 = vmul.f32 %v368, %v373
      %v381 = vmul.f32 %v367, %v377
      %s382 = scalar_lea.vmem %s1, 8
      %v383 = vld [vmem:[%s382] sm:$0xf]
      %v384 = vpack.c.bf16 %v380, %v380
      %v385 = vpack.c.bf16 %v381, %v381
      %v387 = vsel %vm258, %v383, 0
      %v390 = vsel %vm262, %v384, 0
      %v393 = vsel %vm262, %v385, 0
      %395 = vmatprep.subr.bf16.mxu0 %v393
      %396 = vmatpush1.bf16.msra.mxu0 %v390
      %397 = vmatprep.subr.bf16.mxu0 0
      %398 = vmatpush1.bf16.msra.mxu0 0
      %399 = vmatprep.subr.bf16.mxu0 0
      %400 = vmatpush1.bf16.msra.mxu0 0
      %401 = vmatprep.subr.bf16.mxu0 0
      %402 = vmatpush1.bf16.msra.mxu0 0
      %403 = vmatprep.subr.bf16.mxu0 0
      %404 = vmatpush1.bf16.msra.mxu0 0
      %405 = vmatprep.subr.bf16.mxu0 0
      %406 = vmatpush1.bf16.msra.mxu0 0
      %407 = vmatprep.subr.bf16.mxu0 0
      %408 = vmatpush1.bf16.msra.mxu0 0
      %409 = vmatprep.subr.bf16.mxu0 0
      %410 = vmatpush1.bf16.msra.mxu0 0
      %411 = vmatprep.subr.bf16.mxu0 0
      %412 = vmatpush1.bf16.msra.mxu0 0
      %413 = vmatprep.subr.bf16.mxu0 0
      %414 = vmatpush1.bf16.msra.mxu0 0
      %415 = vmatprep.subr.bf16.mxu0 0
      %416 = vmatpush1.bf16.msra.mxu0 0
      %417 = vmatprep.subr.bf16.mxu0 0
      %418 = vmatpush1.bf16.msra.mxu0 0
      %419 = vmatprep.subr.bf16.mxu0 0
      %420 = vmatpush1.bf16.msra.mxu0 0
      %421 = vmatprep.subr.bf16.mxu0 0
      %422 = vmatpush1.bf16.msra.mxu0 0
      %423 = vmatprep.subr.bf16.mxu0 0
      %424 = vmatpush1.bf16.msra.mxu0 0
      %425 = vmatprep.subr.bf16.mxu0 0
      %426 = vmatpush1.bf16.msra.mxu0 0
      %427 = vmatprep.mubr.bf16.mxu0 0
      %428 = vmatmul.mubr.bf16.gmra.mrb[0].mxu0 %v387
      %v429 = vpop.f32.mrb[0].mxu0
      %v430 = vadd.f32 0.0, %v429
      %v431 = vpop.f32.mrb[0].mxu0
      %v432 = vadd.f32 0.0, %v431
      %v433 = vpop.f32.mrb[0].mxu0
      %v434 = vpop.f32.mrb[0].mxu0
      %435 = vdwg.mxu0
      %v436 = vadd.f32 %v354, %v430
      %v437 = vadd.f32 %v356, %v432
      %s438 = scalar_lea.vmem %s3, 6
      %v439 = vld [vmem:[%s438] sm:$0x3]
      %440 = vrot.lane.b32.xlu0 %v202, 1
      %v441 = vpop.permute.xlu0 %440
      %442 = vrot.lane.b32.xlu0 %v205, 1
      %v443 = vpop.permute.xlu0 %442
      %vm444 = vcmp.lt.s32.totalorder %v212, 1
      %v445 = vsel %vm444, %v441, %v443
      %v446 = vsel %vm444, %v443, %v441
      %v448 = vlaneseq
      %v449 = vshrl.u32 %v448, 7
      %v450 = vsub.s32 0, %v449
      %v451 = vrot.slane %v439, %v450
      %v452 = vlaneseq
      %v453 = vshrl.u32 %v452, 7
      %v454 = vsub.s32 1, %v453
      %v455 = vrot.slane %v439, %v454
      %v458 = vmul.f32 %v446, %v451
      %v459 = vmul.f32 %v445, %v455
      %s460 = scalar_lea.vmem %s1, 12
      %v461 = vld [vmem:[%s460] sm:$0xf]
      %v462 = vpack.c.bf16 %v458, %v458
      %v463 = vpack.c.bf16 %v459, %v459
      %v465 = vsel %vm258, %v461, 0
      %v468 = vsel %vm262, %v462, 0
      %v471 = vsel %vm262, %v463, 0
      %473 = vmatprep.subr.bf16.mxu0 %v471
      %474 = vmatpush1.bf16.msra.mxu0 %v468
      %475 = vmatprep.subr.bf16.mxu0 0
      %476 = vmatpush1.bf16.msra.mxu0 0
      %477 = vmatprep.subr.bf16.mxu0 0
      %478 = vmatpush1.bf16.msra.mxu0 0
      %479 = vmatprep.subr.bf16.mxu0 0
      %480 = vmatpush1.bf16.msra.mxu0 0
      %481 = vmatprep.subr.bf16.mxu0 0
      %482 = vmatpush1.bf16.msra.mxu0 0
      %483 = vmatprep.subr.bf16.mxu0 0
      %484 = vmatpush1.bf16.msra.mxu0 0
      %485 = vmatprep.subr.bf16.mxu0 0
      %486 = vmatpush1.bf16.msra.mxu0 0
      %487 = vmatprep.subr.bf16.mxu0 0
      %488 = vmatpush1.bf16.msra.mxu0 0
      %489 = vmatprep.subr.bf16.mxu0 0
      %490 = vmatpush1.bf16.msra.mxu0 0
      %491 = vmatprep.subr.bf16.mxu0 0
      %492 = vmatpush1.bf16.msra.mxu0 0
      %493 = vmatprep.subr.bf16.mxu0 0
      %494 = vmatpush1.bf16.msra.mxu0 0
      %495 = vmatprep.subr.bf16.mxu0 0
      %496 = vmatpush1.bf16.msra.mxu0 0
      %497 = vmatprep.subr.bf16.mxu0 0
      %498 = vmatpush1.bf16.msra.mxu0 0
      %499 = vmatprep.subr.bf16.mxu0 0
      %500 = vmatpush1.bf16.msra.mxu0 0
      %501 = vmatprep.subr.bf16.mxu0 0
      %502 = vmatpush1.bf16.msra.mxu0 0
      %503 = vmatprep.subr.bf16.mxu0 0
      %504 = vmatpush1.bf16.msra.mxu0 0
      %505 = vmatprep.mubr.bf16.mxu0 0
      %506 = vmatmul.mubr.bf16.gmra.mrb[0].mxu0 %v465
      %v507 = vpop.f32.mrb[0].mxu0
      %v508 = vadd.f32 0.0, %v507
      %v509 = vpop.f32.mrb[0].mxu0
      %v510 = vadd.f32 0.0, %v509
      %v511 = vpop.f32.mrb[0].mxu0
      %v512 = vpop.f32.mrb[0].mxu0
      %513 = vdwg.mxu0
      %v514 = vadd.f32 %v436, %v508
      %v515 = vadd.f32 %v437, %v510
      %s516 = scalar_lea.vmem %s1, 16
      %v517 = vld [vmem:[%s516] sm:$0xf]
      %v518 = vpack.c.bf16 %v202, %v202
      %v519 = vpack.c.bf16 %v205, %v205
      %v521 = vsel %vm258, %v517, 0
      %v524 = vsel %vm262, %v518, 0
      %v527 = vsel %vm262, %v519, 0
      %529 = vmatprep.subr.bf16.mxu0 %v527
      %530 = vmatpush1.bf16.msra.mxu0 %v524
      %531 = vmatprep.subr.bf16.mxu0 0
      %532 = vmatpush1.bf16.msra.mxu0 0
      %533 = vmatprep.subr.bf16.mxu0 0
      %534 = vmatpush1.bf16.msra.mxu0 0
      %535 = vmatprep.subr.bf16.mxu0 0
      %536 = vmatpush1.bf16.msra.mxu0 0
      %537 = vmatprep.subr.bf16.mxu0 0
      %538 = vmatpush1.bf16.msra.mxu0 0
      %539 = vmatprep.subr.bf16.mxu0 0
      %540 = vmatpush1.bf16.msra.mxu0 0
      %541 = vmatprep.subr.bf16.mxu0 0
      %542 = vmatpush1.bf16.msra.mxu0 0
      %543 = vmatprep.subr.bf16.mxu0 0
      %544 = vmatpush1.bf16.msra.mxu0 0
      %545 = vmatprep.subr.bf16.mxu0 0
      %546 = vmatpush1.bf16.msra.mxu0 0
      %547 = vmatprep.subr.bf16.mxu0 0
      %548 = vmatpush1.bf16.msra.mxu0 0
      %549 = vmatprep.subr.bf16.mxu0 0
      %550 = vmatpush1.bf16.msra.mxu0 0
      %551 = vmatprep.subr.bf16.mxu0 0
      %552 = vmatpush1.bf16.msra.mxu0 0
      %553 = vmatprep.subr.bf16.mxu0 0
      %554 = vmatpush1.bf16.msra.mxu0 0
      %555 = vmatprep.subr.bf16.mxu0 0
      %556 = vmatpush1.bf16.msra.mxu0 0
      %557 = vmatprep.subr.bf16.mxu0 0
      %558 = vmatpush1.bf16.msra.mxu0 0
      %559 = vmatprep.subr.bf16.mxu0 0
      %560 = vmatpush1.bf16.msra.mxu0 0
      %561 = vmatprep.mubr.bf16.mxu0 0
      %562 = vmatmul.mubr.bf16.gmra.mrb[0].mxu0 %v521
      %v563 = vpop.f32.mrb[0].mxu0
      %v564 = vadd.f32 0.0, %v563
      %v565 = vpop.f32.mrb[0].mxu0
      %v566 = vadd.f32 0.0, %v565
      %v567 = vpop.f32.mrb[0].mxu0
      %v568 = vpop.f32.mrb[0].mxu0
      %569 = vdwg.mxu0
      %v570 = vadd.f32 %v514, %v564
      %v571 = vadd.f32 %v515, %v566
      %s572 = scalar_lea.vmem %s3, 10
      %v573 = vld [vmem:[%s572] sm:$0x3]
      %574 = vrot.lane.b32.xlu0 %v202, 127
      %v575 = vpop.permute.xlu0 %574
      %576 = vrot.lane.b32.xlu0 %v205, 127
      %v577 = vpop.permute.xlu0 %576
      %vm578 = vcmp.lt.s32.totalorder %v212, 127
      %v579 = vsel %vm578, %v575, %v577
      %v580 = vsel %vm578, %v577, %v575
      %v582 = vlaneseq
      %v583 = vshrl.u32 %v582, 7
      %v584 = vsub.s32 0, %v583
      %v585 = vrot.slane %v573, %v584
      %v586 = vlaneseq
      %v587 = vshrl.u32 %v586, 7
      %v588 = vsub.s32 1, %v587
      %v589 = vrot.slane %v573, %v588
      %v592 = vmul.f32 %v579, %v585
      %v593 = vmul.f32 %v580, %v589
      %s594 = scalar_lea.vmem %s1, 20
      %v595 = vld [vmem:[%s594] sm:$0xf]
      %v596 = vpack.c.bf16 %v592, %v592
      %v597 = vpack.c.bf16 %v593, %v593
      %v599 = vsel %vm258, %v595, 0
      %v602 = vsel %vm262, %v596, 0
      %v605 = vsel %vm262, %v597, 0
      %607 = vmatprep.subr.bf16.mxu0 %v605
      %608 = vmatpush1.bf16.msra.mxu0 %v602
      %609 = vmatprep.subr.bf16.mxu0 0
      %610 = vmatpush1.bf16.msra.mxu0 0
      %611 = vmatprep.subr.bf16.mxu0 0
      %612 = vmatpush1.bf16.msra.mxu0 0
      %613 = vmatprep.subr.bf16.mxu0 0
      %614 = vmatpush1.bf16.msra.mxu0 0
      %615 = vmatprep.subr.bf16.mxu0 0
      %616 = vmatpush1.bf16.msra.mxu0 0
      %617 = vmatprep.subr.bf16.mxu0 0
      %618 = vmatpush1.bf16.msra.mxu0 0
      %619 = vmatprep.subr.bf16.mxu0 0
      %620 = vmatpush1.bf16.msra.mxu0 0
      %621 = vmatprep.subr.bf16.mxu0 0
      %622 = vmatpush1.bf16.msra.mxu0 0
      %623 = vmatprep.subr.bf16.mxu0 0
      %624 = vmatpush1.bf16.msra.mxu0 0
      %625 = vmatprep.subr.bf16.mxu0 0
      %626 = vmatpush1.bf16.msra.mxu0 0
      %627 = vmatprep.subr.bf16.mxu0 0
      %628 = vmatpush1.bf16.msra.mxu0 0
      %629 = vmatprep.subr.bf16.mxu0 0
      %630 = vmatpush1.bf16.msra.mxu0 0
      %631 = vmatprep.subr.bf16.mxu0 0
      %632 = vmatpush1.bf16.msra.mxu0 0
      %633 = vmatprep.subr.bf16.mxu0 0
      %634 = vmatpush1.bf16.msra.mxu0 0
      %635 = vmatprep.subr.bf16.mxu0 0
      %636 = vmatpush1.bf16.msra.mxu0 0
      %637 = vmatprep.subr.bf16.mxu0 0
      %638 = vmatpush1.bf16.msra.mxu0 0
      %639 = vmatprep.mubr.bf16.mxu0 0
      %640 = vmatmul.mubr.bf16.gmra.mrb[0].mxu0 %v599
      %v641 = vpop.f32.mrb[0].mxu0
      %v642 = vadd.f32 0.0, %v641
      %v643 = vpop.f32.mrb[0].mxu0
      %v644 = vadd.f32 0.0, %v643
      %v645 = vpop.f32.mrb[0].mxu0
      %v646 = vpop.f32.mrb[0].mxu0
      %647 = vdwg.mxu0
      %v648 = vadd.f32 %v570, %v642
      %v649 = vadd.f32 %v571, %v644
      %s650 = scalar_lea.vmem %s3, 12
      %v651 = vld [vmem:[%s650] sm:$0x3]
      %652 = vrot.lane.b32.xlu0 %v202, 113
      %v653 = vpop.permute.xlu0 %652
      %654 = vrot.lane.b32.xlu0 %v205, 113
      %v655 = vpop.permute.xlu0 %654
      %vm656 = vcmp.lt.s32.totalorder %v212, 113
      %v657 = vsel %vm656, %v653, %v655
      %v658 = vsel %vm656, %v655, %v653
      %v660 = vlaneseq
      %v661 = vshrl.u32 %v660, 7
      %v662 = vsub.s32 0, %v661
      %v663 = vrot.slane %v651, %v662
      %v664 = vlaneseq
      %v665 = vshrl.u32 %v664, 7
      %v666 = vsub.s32 1, %v665
      %v667 = vrot.slane %v651, %v666
      %v670 = vmul.f32 %v657, %v663
      %v671 = vmul.f32 %v658, %v667
      %s672 = scalar_lea.vmem %s1, 24
      %v673 = vld [vmem:[%s672] sm:$0xf]
      %v674 = vpack.c.bf16 %v670, %v670
      %v675 = vpack.c.bf16 %v671, %v671
      %v677 = vsel %vm258, %v673, 0
      %v680 = vsel %vm262, %v674, 0
      %v683 = vsel %vm262, %v675, 0
      %685 = vmatprep.subr.bf16.mxu0 %v683
      %686 = vmatpush1.bf16.msra.mxu0 %v680
      %687 = vmatprep.subr.bf16.mxu0 0
      %688 = vmatpush1.bf16.msra.mxu0 0
      %689 = vmatprep.subr.bf16.mxu0 0
      %690 = vmatpush1.bf16.msra.mxu0 0
      %691 = vmatprep.subr.bf16.mxu0 0
      %692 = vmatpush1.bf16.msra.mxu0 0
      %693 = vmatprep.subr.bf16.mxu0 0
      %694 = vmatpush1.bf16.msra.mxu0 0
      %695 = vmatprep.subr.bf16.mxu0 0
      %696 = vmatpush1.bf16.msra.mxu0 0
      %697 = vmatprep.subr.bf16.mxu0 0
      %698 = vmatpush1.bf16.msra.mxu0 0
      %699 = vmatprep.subr.bf16.mxu0 0
      %700 = vmatpush1.bf16.msra.mxu0 0
      %701 = vmatprep.subr.bf16.mxu0 0
      %702 = vmatpush1.bf16.msra.mxu0 0
      %703 = vmatprep.subr.bf16.mxu0 0
      %704 = vmatpush1.bf16.msra.mxu0 0
      %705 = vmatprep.subr.bf16.mxu0 0
      %706 = vmatpush1.bf16.msra.mxu0 0
      %707 = vmatprep.subr.bf16.mxu0 0
      %708 = vmatpush1.bf16.msra.mxu0 0
      %709 = vmatprep.subr.bf16.mxu0 0
      %710 = vmatpush1.bf16.msra.mxu0 0
      %711 = vmatprep.subr.bf16.mxu0 0
      %712 = vmatpush1.bf16.msra.mxu0 0
      %713 = vmatprep.subr.bf16.mxu0 0
      %714 = vmatpush1.bf16.msra.mxu0 0
      %715 = vmatprep.subr.bf16.mxu0 0
      %716 = vmatpush1.bf16.msra.mxu0 0
      %717 = vmatprep.mubr.bf16.mxu0 0
      %718 = vmatmul.mubr.bf16.gmra.mrb[0].mxu0 %v677
      %v719 = vpop.f32.mrb[0].mxu0
      %v720 = vadd.f32 0.0, %v719
      %v721 = vpop.f32.mrb[0].mxu0
      %v722 = vadd.f32 0.0, %v721
      %v723 = vpop.f32.mrb[0].mxu0
      %v724 = vpop.f32.mrb[0].mxu0
      %725 = vdwg.mxu0
      %v726 = vadd.f32 %v648, %v720
      %v727 = vadd.f32 %v649, %v722
      %s728 = scalar_lea.vmem %s3, 14
      %v729 = vld [vmem:[%s728] sm:$0x3]
      %730 = vrot.lane.b32.xlu0 %v202, 112
      %v731 = vpop.permute.xlu0 %730
      %732 = vrot.lane.b32.xlu0 %v205, 112
      %v733 = vpop.permute.xlu0 %732
      %vm734 = vcmp.lt.s32.totalorder %v212, 112
      %v735 = vsel %vm734, %v731, %v733
      %v736 = vsel %vm734, %v733, %v731
      %v738 = vlaneseq
      %v739 = vshrl.u32 %v738, 7
      %v740 = vsub.s32 0, %v739
      %v741 = vrot.slane %v729, %v740
      %v742 = vlaneseq
      %v743 = vshrl.u32 %v742, 7
      %v744 = vsub.s32 1, %v743
      %v745 = vrot.slane %v729, %v744
      %v748 = vmul.f32 %v735, %v741
      %v749 = vmul.f32 %v736, %v745
      %s750 = scalar_lea.vmem %s1, 28
      %v751 = vld [vmem:[%s750] sm:$0xf]
      %v752 = vpack.c.bf16 %v748, %v748
      %v753 = vpack.c.bf16 %v749, %v749
      %v755 = vsel %vm258, %v751, 0
      %v758 = vsel %vm262, %v752, 0
      %v761 = vsel %vm262, %v753, 0
      %763 = vmatprep.subr.bf16.mxu0 %v761
      %764 = vmatpush1.bf16.msra.mxu0 %v758
      %765 = vmatprep.subr.bf16.mxu0 0
      %766 = vmatpush1.bf16.msra.mxu0 0
      %767 = vmatprep.subr.bf16.mxu0 0
      %768 = vmatpush1.bf16.msra.mxu0 0
      %769 = vmatprep.subr.bf16.mxu0 0
      %770 = vmatpush1.bf16.msra.mxu0 0
      %771 = vmatprep.subr.bf16.mxu0 0
      %772 = vmatpush1.bf16.msra.mxu0 0
      %773 = vmatprep.subr.bf16.mxu0 0
      %774 = vmatpush1.bf16.msra.mxu0 0
      %775 = vmatprep.subr.bf16.mxu0 0
      %776 = vmatpush1.bf16.msra.mxu0 0
      %777 = vmatprep.subr.bf16.mxu0 0
      %778 = vmatpush1.bf16.msra.mxu0 0
      %779 = vmatprep.subr.bf16.mxu0 0
      %780 = vmatpush1.bf16.msra.mxu0 0
      %781 = vmatprep.subr.bf16.mxu0 0
      %782 = vmatpush1.bf16.msra.mxu0 0
      %783 = vmatprep.subr.bf16.mxu0 0
      %784 = vmatpush1.bf16.msra.mxu0 0
      %785 = vmatprep.subr.bf16.mxu0 0
      %786 = vmatpush1.bf16.msra.mxu0 0
      %787 = vmatprep.subr.bf16.mxu0 0
      %788 = vmatpush1.bf16.msra.mxu0 0
      %789 = vmatprep.subr.bf16.mxu0 0
      %790 = vmatpush1.bf16.msra.mxu0 0
      %791 = vmatprep.subr.bf16.mxu0 0
      %792 = vmatpush1.bf16.msra.mxu0 0
      %793 = vmatprep.subr.bf16.mxu0 0
      %794 = vmatpush1.bf16.msra.mxu0 0
      %795 = vmatprep.mubr.bf16.mxu0 0
      %796 = vmatmul.mubr.bf16.gmra.mrb[0].mxu0 %v755
      %v797 = vpop.f32.mrb[0].mxu0
      %v798 = vadd.f32 0.0, %v797
      %v799 = vpop.f32.mrb[0].mxu0
      %v800 = vadd.f32 0.0, %v799
      %v801 = vpop.f32.mrb[0].mxu0
      %v802 = vpop.f32.mrb[0].mxu0
      %803 = vdwg.mxu0
      %v804 = vadd.f32 %v726, %v798
      %v805 = vadd.f32 %v727, %v800
      %s806 = scalar_lea.vmem %s3, 16
      %v807 = vld [vmem:[%s806] sm:$0x3]
      %808 = vrot.lane.b32.xlu0 %v202, 111
      %v809 = vpop.permute.xlu0 %808
      %810 = vrot.lane.b32.xlu0 %v205, 111
      %v811 = vpop.permute.xlu0 %810
      %vm812 = vcmp.lt.s32.totalorder %v212, 111
      %v813 = vsel %vm812, %v809, %v811
      %v814 = vsel %vm812, %v811, %v809
      %v816 = vlaneseq
      %v817 = vshrl.u32 %v816, 7
      %v818 = vsub.s32 0, %v817
      %v819 = vrot.slane %v807, %v818
      %v820 = vlaneseq
      %v821 = vshrl.u32 %v820, 7
      %v822 = vsub.s32 1, %v821
      %v823 = vrot.slane %v807, %v822
      %v826 = vmul.f32 %v813, %v819
      %v827 = vmul.f32 %v814, %v823
      %s828 = scalar_lea.vmem %s1, 32
      %v829 = vld [vmem:[%s828] sm:$0xf]
      %v830 = vpack.c.bf16 %v826, %v826
      %v831 = vpack.c.bf16 %v827, %v827
      %v833 = vsel %vm258, %v829, 0
      %v836 = vsel %vm262, %v830, 0
      %v839 = vsel %vm262, %v831, 0
      %841 = vmatprep.subr.bf16.mxu0 %v839
      %842 = vmatpush1.bf16.msra.mxu0 %v836
      %843 = vmatprep.subr.bf16.mxu0 0
      %844 = vmatpush1.bf16.msra.mxu0 0
      %845 = vmatprep.subr.bf16.mxu0 0
      %846 = vmatpush1.bf16.msra.mxu0 0
      %847 = vmatprep.subr.bf16.mxu0 0
      %848 = vmatpush1.bf16.msra.mxu0 0
      %849 = vmatprep.subr.bf16.mxu0 0
      %850 = vmatpush1.bf16.msra.mxu0 0
      %851 = vmatprep.subr.bf16.mxu0 0
      %852 = vmatpush1.bf16.msra.mxu0 0
      %853 = vmatprep.subr.bf16.mxu0 0
      %854 = vmatpush1.bf16.msra.mxu0 0
      %855 = vmatprep.subr.bf16.mxu0 0
      %856 = vmatpush1.bf16.msra.mxu0 0
      %857 = vmatprep.subr.bf16.mxu0 0
      %858 = vmatpush1.bf16.msra.mxu0 0
      %859 = vmatprep.subr.bf16.mxu0 0
      %860 = vmatpush1.bf16.msra.mxu0 0
      %861 = vmatprep.subr.bf16.mxu0 0
      %862 = vmatpush1.bf16.msra.mxu0 0
      %863 = vmatprep.subr.bf16.mxu0 0
      %864 = vmatpush1.bf16.msra.mxu0 0
      %865 = vmatprep.subr.bf16.mxu0 0
      %866 = vmatpush1.bf16.msra.mxu0 0
      %867 = vmatprep.subr.bf16.mxu0 0
      %868 = vmatpush1.bf16.msra.mxu0 0
      %869 = vmatprep.subr.bf16.mxu0 0
      %870 = vmatpush1.bf16.msra.mxu0 0
      %871 = vmatprep.subr.bf16.mxu0 0
      %872 = vmatpush1.bf16.msra.mxu0 0
      %873 = vmatprep.mubr.bf16.mxu0 0
      %874 = vmatmul.mubr.bf16.gmra.mrb[0].mxu0 %v833
      %v875 = vpop.f32.mrb[0].mxu0
      %v876 = vadd.f32 0.0, %v875
      %v877 = vpop.f32.mrb[0].mxu0
      %v878 = vadd.f32 0.0, %v877
      %v879 = vpop.f32.mrb[0].mxu0
      %v880 = vpop.f32.mrb[0].mxu0
      %881 = vdwg.mxu0
      %v882 = vadd.f32 %v804, %v876
      %v883 = vadd.f32 %v805, %v878
      %v884 = vld [vmem:[%s2] sm:$0xff]
      %886 = vset.pattern.permute.xlu0 0
      %887 = vperm.xlu0 %886, %v884
      %v888 = vpop.permute.xlu0 %887
      %v890 = vadd.f32 %v882, %v888
      %v891 = vadd.f32 %v883, %v888
      %v892 = vmul.f32 %v890, 0.1
      %v893 = vmul.f32 %v891, 0.1
      %v894 = vmax.f32 %v890, %v892
      %v895 = vmax.f32 %v891, %v893
      %896 = vrot.lane.b32.xlu0 %v894, 127
      %v897 = vpop.permute.xlu0 %896
      %898 = vrot.lane.b32.xlu0 %v895, 127
      %v899 = vpop.permute.xlu0 %898
      %v900 = vsel %vm578, %v897, %v899
      %v901 = vsel %vm578, %v899, %v897
      %v902 = vmul.f32 %v900, %v585
      %v903 = vmul.f32 %v901, %v589
      %904 = vrot.lane.b32.xlu0 %v894, 112
      %v905 = vpop.permute.xlu0 %904
      %906 = vrot.lane.b32.xlu0 %v895, 112
      %v907 = vpop.permute.xlu0 %906
      %v908 = vsel %vm734, %v905, %v907
      %v909 = vsel %vm734, %v907, %v905
      %v910 = vmul.f32 %v908, %v741
      %v911 = vmul.f32 %v909, %v745
      %912 = vrot.lane.b32.xlu0 %v894, 111
      %v913 = vpop.permute.xlu0 %912
      %914 = vrot.lane.b32.xlu0 %v895, 111
      %v915 = vpop.permute.xlu0 %914
      %v916 = vsel %vm812, %v913, %v915
      %v917 = vsel %vm812, %v915, %v913
      %v918 = vmul.f32 %v916, %v819
      %v919 = vmul.f32 %v917, %v823
      %v920 = vmax.f32 %v894, %v902
      %v921 = vmax.f32 %v895, %v903
      %v922 = vmax.f32 %v910, %v918
      %v923 = vmax.f32 %v911, %v919
      %v924 = vmax.f32 %v920, %v922
      %v925 = vmax.f32 %v921, %v923
      %v926 = vpack.c.bf16 %v924, %v924
      %v927 = vpack.c.bf16 %v925, %v925
      %v930 = vunpack.c.l.b16 %v926
      %v931 = vunpack.c.l.b16 %v927
      %v932 = vpack.c.b16 %v931, %v930
      %934 = vst [vmem:[%s199] sm:$0xff] %v932
      %s935 = smul.u32 2, %s15
      %p936 = scmp.lt.s32.totalorder %s935, 3
      %s937 = scalar_select %p936, %s935, 3
      %s938 = smul.addr %s937, 4
      %s939 = scalar_lea.vmem %s4, %s938
      // Predicated region
      $region37: #{_lambda_.4} parent=35 // pred_check
        %p940 = pneg %p122
      $region38: #{_lambda_.4} parent=35 // pred_check_branch
        %942 = sbr.rel (%p940) target = $region40
      $region39: #{_lambda_.4} parent=35 // pred_region
        %s943 = smul.u32 2, %s15
      $region40: #{_lambda_.4} parent=35 // pred_fallthru
        _
    $region36: #{_lambda_.4} parent=5 // pred_fallthru
      _
    %p944 = scmp.le.s32.totalorder 2, %s10
    // Predicated region
    $region41: #{_lambda_.4} parent=5 // pred_check
      %p945 = pneg %p944
    $region42: #{_lambda_.4} parent=5 // pred_check_branch
      %947 = sbr.rel (%p945) target = $region44
    $region43: #{_lambda_.4} parent=5 // pred_region
      %s948 = ssub.s32 %s10, 2
      // Predicated region
      $region45: #{_lambda_.4} parent=43 // pred_check
        %p949 = pneg %p128
      $region46: #{_lambda_.4} parent=43 // pred_check_branch
        %951 = sbr.rel (%p949) target = $region48
      $region47: #{_lambda_.4} parent=43 // pred_region
        %s952 = smul.u32 2, %s16
        %p953 = scmp.lt.s32.totalorder %s952, 3
        %s954 = scalar_select %p953, %s952, 3
        %s955 = smul.addr %s954, 4
        %s956 = scalar_lea.vmem %s4, %s955
      $region48: #{_lambda_.4} parent=43 // pred_fallthru
        _
    $region44: #{_lambda_.4} parent=5 // pred_fallthru
      _
  $region6: #{_lambda_.4} parent=0 // loop_footer
    %s14 = sadd.s32 1, %s10
  $region7: #{_lambda_.4} parent=0 // loop_footer_branch
    %9 = sbr.rel target = $region3
  $region8: #{_lambda_.4} parent=0 // loop_exit
    _

// kernel: _lambda_.5
$region0: #{_lambda_.5}
  #allocation0 [shape = 'u32[]', space=smem, size = 0x4, offset = 0x4, fixed_abs, tag = 'smem constant byte address 0x4 - core index']
  #allocation1 [shape = 'u32[144,128]{1,0:T(1,128)}', space=vmem, size = 0x12000, scoped, tag = 'internal scratch']
  %s0 = inlined_call_operand.vmem [shape: bf16[72,128], index: 0, kind: input, shape index: {}]
  %s1 = inlined_call_operand.vmem [shape: bf16[16,72], index: 1, kind: input, shape index: {}]
  %s2 = inlined_call_operand.vmem [shape: f32[16,1], index: 2, kind: input, shape index: {}]
  %s3 = inlined_call_operand.vmem [shape: bf16[8,16], index: 3, kind: input, shape index: {}]
  %s4 = inlined_call_operand.vmem [shape: f32[8,1], index: 4, kind: input, shape index: {}]
  %s5 = inlined_call_operand.vmem [shape: bf16[9,16,8], index: 5, kind: input, shape index: {}]
  %s6 = inlined_call_operand.vmem [shape: f32[16,1], index: 6, kind: input, shape index: {}]
  %s7 = inlined_call_operand.vmem [shape: f32[9,1,128], index: 7, kind: input, shape index: {}]
  %s8 = inlined_call_operand.vmem [shape: bf16[16,128], index: 8, kind: output, shape index: {}]
  %s9 = sld [smem:[#allocation0]]
  $region42: #{_lambda_.5} parent=0
    _
  %s11 = ssub.s32 1, %s9
  %s12 = scalar_select 0, %s11, %s9
  // Predicated region
  $region2: #{_lambda_.5} parent=0 // pred_check
    _
  $region3: #{_lambda_.5} parent=0 // pred_check_branch
    %14 = sbr.rel (0) target = $region5
  $region4: #{_lambda_.5} parent=0 // pred_region
    _
  $region5: #{_lambda_.5} parent=0 // pred_fallthru
    _
  // Predicated region
  $region6: #{_lambda_.5} parent=0 // pred_check
    _
  $region7: #{_lambda_.5} parent=0 // pred_check_branch
    %16 = sbr.rel (0) target = $region9
  $region8: #{_lambda_.5} parent=0 // pred_region
    _
  $region9: #{_lambda_.5} parent=0 // pred_fallthru
    _
  // Predicated region
  $region10: #{_lambda_.5} parent=0 // pred_check
    _
  $region11: #{_lambda_.5} parent=0 // pred_check_branch
    %18 = sbr.rel (0) target = $region13
  $region12: #{_lambda_.5} parent=0 // pred_region
    _
  $region13: #{_lambda_.5} parent=0 // pred_fallthru
    _
  // Predicated region
  $region14: #{_lambda_.5} parent=0 // pred_check
    _
  $region15: #{_lambda_.5} parent=0 // pred_check_branch
    %20 = sbr.rel (0) target = $region17
  $region16: #{_lambda_.5} parent=0 // pred_region
    _
  $region17: #{_lambda_.5} parent=0 // pred_fallthru
    _
  // Predicated region
  $region18: #{_lambda_.5} parent=0 // pred_check
    _
  $region19: #{_lambda_.5} parent=0 // pred_check_branch
    %22 = sbr.rel (0) target = $region21
  $region20: #{_lambda_.5} parent=0 // pred_region
    _
  $region21: #{_lambda_.5} parent=0 // pred_fallthru
    _
  // Predicated region
  $region22: #{_lambda_.5} parent=0 // pred_check
    _
  $region23: #{_lambda_.5} parent=0 // pred_check_branch
    %24 = sbr.rel (0) target = $region25
  $region24: #{_lambda_.5} parent=0 // pred_region
    _
  $region25: #{_lambda_.5} parent=0 // pred_fallthru
    _
  // Predicated region
  $region26: #{_lambda_.5} parent=0 // pred_check
    _
  $region27: #{_lambda_.5} parent=0 // pred_check_branch
    %26 = sbr.rel (0) target = $region29
  $region28: #{_lambda_.5} parent=0 // pred_region
    _
  $region29: #{_lambda_.5} parent=0 // pred_fallthru
    _
  // Predicated region
  $region30: #{_lambda_.5} parent=0 // pred_check
    _
  $region31: #{_lambda_.5} parent=0 // pred_check_branch
    %28 = sbr.rel (0) target = $region33
  $region32: #{_lambda_.5} parent=0 // pred_region
    _
  $region33: #{_lambda_.5} parent=0 // pred_fallthru
    _
  %v30 = vld [vmem:[%s1] sm:$0xf]
  %v31 = vld [vmem:[%s1 + $0x4] sm:$0xf]
  %v32 = vld [vmem:[%s0] sm:$0xf]
  %v33 = vld [vmem:[%s0 + $0x4] sm:$0xf]
  %v34 = vld [vmem:[%s0 + $0x8] sm:$0xf]
  %v35 = vld [vmem:[%s0 + $0xc] sm:$0xf]
  %v36 = vld [vmem:[%s0 + $0x10] sm:$0xf]
  %v37 = vld [vmem:[%s0 + $0x14] sm:$0xf]
  %v38 = vld [vmem:[%s0 + $0x18] sm:$0xf]
  %v39 = vld [vmem:[%s0 + $0x1c] sm:$0xf]
  %v40 = vld [vmem:[%s0 + $0x20] sm:$0xf]
  %v41 = vld [vmem:[%s2] sm:$0xff]
  %v42 = vld [vmem:[%s2 + $0x8] sm:$0xff]
  %44 = vset.pattern.permute.xlu0 0
  %45 = vperm.xlu0 %44, %v41
  %v46 = vpop.permute.xlu0 %45
  %49 = vset.pattern.permute.xlu0 0
  %50 = vperm.xlu0 %49, %v42
  %v51 = vpop.permute.xlu0 %50
  %v55 = vunpack.c.l.b16 %v30
  %v56 = vunpack.c.l.b16 %v31
  %v57 = vpack.c.b16 %v56, %v55
  %v67 = vunpack.c.l.b16 %v32
  %v68 = vunpack.c.l.b16 %v33
  %v69 = vunpack.c.l.b16 %v34
  %v70 = vunpack.c.l.b16 %v35
  %v71 = vunpack.c.l.b16 %v36
  %v72 = vunpack.c.l.b16 %v37
  %v73 = vunpack.c.l.b16 %v38
  %v74 = vunpack.c.l.b16 %v39
  %v75 = vunpack.c.l.b16 %v40
  %v76 = vpack.c.b16 %v68, %v67
  %v77 = vpack.c.b16 %v70, %v69
  %v78 = vpack.c.b16 %v72, %v71
  %v79 = vpack.c.b16 %v74, %v73
  %v80 = vpack.c.b16 %v75, %v75
  %vm85 = vcmask 588800
  %v87 = vsel %vm85, %v57, 0
  %vm89 = vcmask 1043456
  %v91 = vsel %vm89, %v80, 0
  %93 = vmatprep.subr.bf16.mxu0 0
  %94 = vmatpush1.bf16.msra.mxu0 %v76
  %95 = vmatprep.subr.bf16.mxu0 0
  %96 = vmatpush1.bf16.msra.mxu0 %v77
  %97 = vmatprep.subr.bf16.mxu0 0
  %98 = vmatpush1.bf16.msra.mxu0 %v78
  %99 = vmatprep.subr.bf16.mxu0 0
  %100 = vmatpush1.bf16.msra.mxu0 %v79
  %101 = vmatprep.subr.bf16.mxu0 0
  %102 = vmatpush1.bf16.msra.mxu0 %v91
  %103 = vmatprep.subr.bf16.mxu0 0
  %104 = vmatpush1.bf16.msra.mxu0 0
  %105 = vmatprep.subr.bf16.mxu0 0
  %106 = vmatpush1.bf16.msra.mxu0 0
  %107 = vmatprep.subr.bf16.mxu0 0
  %108 = vmatpush1.bf16.msra.mxu0 0
  %109 = vmatprep.subr.bf16.mxu0 0
  %110 = vmatpush1.bf16.msra.mxu0 0
  %111 = vmatprep.subr.bf16.mxu0 0
  %112 = vmatpush1.bf16.msra.mxu0 0
  %113 = vmatprep.subr.bf16.mxu0 0
  %114 = vmatpush1.bf16.msra.mxu0 0
  %115 = vmatprep.subr.bf16.mxu0 0
  %116 = vmatpush1.bf16.msra.mxu0 0
  %117 = vmatprep.subr.bf16.mxu0 0
  %118 = vmatpush1.bf16.msra.mxu0 0
  %119 = vmatprep.subr.bf16.mxu0 0
  %120 = vmatpush1.bf16.msra.mxu0 0
  %121 = vmatprep.subr.bf16.mxu0 0
  %122 = vmatpush1.bf16.msra.mxu0 0
  %123 = vmatprep.subr.bf16.mxu0 0
  %124 = vmatpush1.bf16.msra.mxu0 0
  %125 = vmatprep.mubr.bf16.mxu0 0
  %126 = vmatmul.mubr.bf16.gmra.mrb[0].mxu0 %v87
  %v127 = vpop.f32.mrb[0].mxu0
  %v128 = vadd.f32 %v46, %v127
  %v129 = vpop.f32.mrb[0].mxu0
  %v130 = vpop.f32.mrb[0].mxu0
  %v131 = vadd.f32 %v51, %v130
  %v132 = vpop.f32.mrb[0].mxu0
  %133 = vdwg.mxu0
  %v134 = vmul.f32 %v128, 0.1
  %v135 = vmul.f32 %v131, 0.1
  %v136 = vmax.f32 %v128, %v134
  %v137 = vmax.f32 %v131, %v135
  %v138 = vld [vmem:[%s3] sm:$0xf]
  %v139 = vpack.c.bf16 %v137, %v136
  %v140 = vld [vmem:[%s4] sm:$0xff]
  %142 = vset.pattern.permute.xlu0 0
  %143 = vperm.xlu0 %142, %v140
  %v144 = vpop.permute.xlu0 %143
  %vm146 = vcmask 130048
  %v148 = vsel %vm146, %v138, 0
  %150 = vmatprep.subr.bf16.mxu0 0
  %151 = vmatpush1.bf16.msra.mxu0 %v139
  %152 = vmatprep.subr.bf16.mxu0 0
  %153 = vmatpush1.bf16.msra.mxu0 0
  %154 = vmatprep.subr.bf16.mxu0 0
  %155 = vmatpush1.bf16.msra.mxu0 0
  %156 = vmatprep.subr.bf16.mxu0 0
  %157 = vmatpush1.bf16.msra.mxu0 0
  %158 = vmatprep.subr.bf16.mxu0 0
  %159 = vmatpush1.bf16.msra.mxu0 0
  %160 = vmatprep.subr.bf16.mxu0 0
  %161 = vmatpush1.bf16.msra.mxu0 0
  %162 = vmatprep.subr.bf16.mxu0 0
  %163 = vmatpush1.bf16.msra.mxu0 0
  %164 = vmatprep.subr.bf16.mxu0 0
  %165 = vmatpush1.bf16.msra.mxu0 0
  %166 = vmatprep.subr.bf16.mxu0 0
  %167 = vmatpush1.bf16.msra.mxu0 0
  %168 = vmatprep.subr.bf16.mxu0 0
  %169 = vmatpush1.bf16.msra.mxu0 0
  %170 = vmatprep.subr.bf16.mxu0 0
  %171 = vmatpush1.bf16.msra.mxu0 0
  %172 = vmatprep.subr.bf16.mxu0 0
  %173 = vmatpush1.bf16.msra.mxu0 0
  %174 = vmatprep.subr.bf16.mxu0 0
  %175 = vmatpush1.bf16.msra.mxu0 0
  %176 = vmatprep.subr.bf16.mxu0 0
  %177 = vmatpush1.bf16.msra.mxu0 0
  %178 = vmatprep.subr.bf16.mxu0 0
  %179 = vmatpush1.bf16.msra.mxu0 0
  %180 = vmatprep.subr.bf16.mxu0 0
  %181 = vmatpush1.bf16.msra.mxu0 0
  %182 = vmatprep.mubr.bf16.mxu0 0
  %183 = vmatmul.mubr.bf16.gmra.mrb[0].mxu0 %v148
  %v184 = vpop.f32.mrb[0].mxu0
  %v185 = vadd.f32 %v144, %v184
  %v186 = vpop.f32.mrb[0].mxu0
  %v187 = vpop.f32.mrb[0].mxu0
  %v188 = vpop.f32.mrb[0].mxu0
  %189 = vdwg.mxu0
  %v190 = vmul.f32 %v185, 0.1
  %v191 = vmax.f32 %v185, %v190
  %v192 = vld [vmem:[%s7] sm:$0x1]
  %193 = vrot.lane.b32.xlu0 %v191, 9
  %v194 = vpop.permute.xlu0 %193
  %v196 = vlaneseq
  %v197 = vshrl.u32 %v196, 7
  %v198 = vsub.s32 0, %v197
  %v199 = vrot.slane %v192, %v198
  %v201 = vmul.f32 %v194, %v199
  %v202 = vld [vmem:[%s5] sm:$0xf]
  %v203 = vld [vmem:[%s5 + $0x4] sm:$0xf]
  %v204 = vpack.c.bf16 %v201, %v201
  %s205 = scalar_lea.vmem %s7, 1
  %v206 = vld [vmem:[%s205] sm:$0x1]
  %207 = vrot.lane.b32.xlu0 %v191, 8
  %v208 = vpop.permute.xlu0 %207
  %v210 = vlaneseq
  %v211 = vshrl.u32 %v210, 7
  %v212 = vsub.s32 0, %v211
  %v213 = vrot.slane %v206, %v212
  %v215 = vmul.f32 %v208, %v213
  %s216 = scalar_lea.vmem %s5, 8
  %v217 = vld [vmem:[%s216] sm:$0xf]
  %v218 = vld [vmem:[%s216 + $0x4] sm:$0xf]
  %v219 = vpack.c.bf16 %v215, %v215
  %v222 = vunpack.c.l.b16 %v217
  %v223 = vunpack.c.l.b16 %v218
  %v224 = vpack.c.b16 %v223, %v222
  %vm225 = vcmask 64512
  %v227 = vsel %vm225, %v224, 0
  %v230 = vsel %vm89, %v219, 0
  %232 = vmatprep.subr.bf16.mxu0 0
  %233 = vmatpush1.bf16.msra.mxu0 %v230
  %234 = vmatprep.subr.bf16.mxu0 0
  %235 = vmatpush1.bf16.msra.mxu0 0
  %236 = vmatprep.subr.bf16.mxu0 0
  %237 = vmatpush1.bf16.msra.mxu0 0
  %238 = vmatprep.subr.bf16.mxu0 0
  %239 = vmatpush1.bf16.msra.mxu0 0
  %240 = vmatprep.subr.bf16.mxu0 0
  %241 = vmatpush1.bf16.msra.mxu0 0
  %242 = vmatprep.subr.bf16.mxu0 0
  %243 = vmatpush1.bf16.msra.mxu0 0
  %244 = vmatprep.subr.bf16.mxu0 0
  %245 = vmatpush1.bf16.msra.mxu0 0
  %246 = vmatprep.subr.bf16.mxu0 0
  %247 = vmatpush1.bf16.msra.mxu0 0
  %248 = vmatprep.subr.bf16.mxu0 0
  %249 = vmatpush1.bf16.msra.mxu0 0
  %250 = vmatprep.subr.bf16.mxu0 0
  %251 = vmatpush1.bf16.msra.mxu0 0
  %252 = vmatprep.subr.bf16.mxu0 0
  %253 = vmatpush1.bf16.msra.mxu0 0
  %254 = vmatprep.subr.bf16.mxu0 0
  %255 = vmatpush1.bf16.msra.mxu0 0
  %256 = vmatprep.subr.bf16.mxu0 0
  %257 = vmatpush1.bf16.msra.mxu0 0
  %258 = vmatprep.subr.bf16.mxu0 0
  %259 = vmatpush1.bf16.msra.mxu0 0
  %260 = vmatprep.subr.bf16.mxu0 0
  %261 = vmatpush1.bf16.msra.mxu0 0
  %262 = vmatprep.subr.bf16.mxu0 0
  %263 = vmatpush1.bf16.msra.mxu0 0
  %264 = vmatprep.mubr.bf16.mxu0 0
  %265 = vmatmul.mubr.bf16.gmra.mrb[0].mxu0 %v227
  %v266 = vpop.f32.mrb[0].mxu0
  %v267 = vadd.f32 0.0, %v266
  %v268 = vpop.f32.mrb[0].mxu0
  %v269 = vpop.f32.mrb[0].mxu0
  %v270 = vadd.f32 0.0, %v269
  %v271 = vpop.f32.mrb[0].mxu0
  %272 = vdwg.mxu0
  %v275 = vunpack.c.l.b16 %v202
  %v276 = vunpack.c.l.b16 %v203
  %v277 = vpack.c.b16 %v276, %v275
  %v279 = vsel %vm225, %v277, 0
  %v282 = vsel %vm89, %v204, 0
  %284 = vmatprep.subr.bf16.mxu0 0
  %285 = vmatpush1.bf16.msra.mxu0 %v282
  %286 = vmatprep.subr.bf16.mxu0 0
  %287 = vmatpush1.bf16.msra.mxu0 0
  %288 = vmatprep.subr.bf16.mxu0 0
  %289 = vmatpush1.bf16.msra.mxu0 0
  %290 = vmatprep.subr.bf16.mxu0 0
  %291 = vmatpush1.bf16.msra.mxu0 0
  %292 = vmatprep.subr.bf16.mxu0 0
  %293 = vmatpush1.bf16.msra.mxu0 0
  %294 = vmatprep.subr.bf16.mxu0 0
  %295 = vmatpush1.bf16.msra.mxu0 0
  %296 = vmatprep.subr.bf16.mxu0 0
  %297 = vmatpush1.bf16.msra.mxu0 0
  %298 = vmatprep.subr.bf16.mxu0 0
  %299 = vmatpush1.bf16.msra.mxu0 0
  %300 = vmatprep.subr.bf16.mxu0 0
  %301 = vmatpush1.bf16.msra.mxu0 0
  %302 = vmatprep.subr.bf16.mxu0 0
  %303 = vmatpush1.bf16.msra.mxu0 0
  %304 = vmatprep.subr.bf16.mxu0 0
  %305 = vmatpush1.bf16.msra.mxu0 0
  %306 = vmatprep.subr.bf16.mxu0 0
  %307 = vmatpush1.bf16.msra.mxu0 0
  %308 = vmatprep.subr.bf16.mxu0 0
  %309 = vmatpush1.bf16.msra.mxu0 0
  %310 = vmatprep.subr.bf16.mxu0 0
  %311 = vmatpush1.bf16.msra.mxu0 0
  %312 = vmatprep.subr.bf16.mxu0 0
  %313 = vmatpush1.bf16.msra.mxu0 0
  %314 = vmatprep.subr.bf16.mxu0 0
  %315 = vmatpush1.bf16.msra.mxu0 0
  %316 = vmatprep.mubr.bf16.mxu0 0
  %317 = vmatmul.mubr.bf16.gmra.mrb[0].mxu0 %v279
  %v318 = vpop.f32.mrb[0].mxu0
  %v319 = vadd.f32 %v267, %v318
  %v320 = vpop.f32.mrb[0].mxu0
  %v321 = vpop.f32.mrb[0].mxu0
  %v322 = vadd.f32 %v270, %v321
  %v323 = vpop.f32.mrb[0].mxu0
  %324 = vdwg.mxu0
  %s325 = scalar_lea.vmem %s7, 2
  %v326 = vld [vmem:[%s325] sm:$0x1]
  %327 = vrot.lane.b32.xlu0 %v191, 7
  %v328 = vpop.permute.xlu0 %327
  %v330 = vlaneseq
  %v331 = vshrl.u32 %v330, 7
  %v332 = vsub.s32 0, %v331
  %v333 = vrot.slane %v326, %v332
  %v335 = vmul.f32 %v328, %v333
  %s336 = scalar_lea.vmem %s5, 16
  %v337 = vld [vmem:[%s336] sm:$0xf]
  %v338 = vld [vmem:[%s336 + $0x4] sm:$0xf]
  %v339 = vpack.c.bf16 %v335, %v335
  %v342 = vunpack.c.l.b16 %v337
  %v343 = vunpack.c.l.b16 %v338
  %v344 = vpack.c.b16 %v343, %v342
  %v346 = vsel %vm225, %v344, 0
  %v349 = vsel %vm89, %v339, 0
  %351 = vmatprep.subr.bf16.mxu0 0
  %352 = vmatpush1.bf16.msra.mxu0 %v349
  %353 = vmatprep.subr.bf16.mxu0 0
  %354 = vmatpush1.bf16.msra.mxu0 0
  %355 = vmatprep.subr.bf16.mxu0 0
  %356 = vmatpush1.bf16.msra.mxu0 0
  %357 = vmatprep.subr.bf16.mxu0 0
  %358 = vmatpush1.bf16.msra.mxu0 0
  %359 = vmatprep.subr.bf16.mxu0 0
  %360 = vmatpush1.bf16.msra.mxu0 0
  %361 = vmatprep.subr.bf16.mxu0 0
  %362 = vmatpush1.bf16.msra.mxu0 0
  %363 = vmatprep.subr.bf16.mxu0 0
  %364 = vmatpush1.bf16.msra.mxu0 0
  %365 = vmatprep.subr.bf16.mxu0 0
  %366 = vmatpush1.bf16.msra.mxu0 0
  %367 = vmatprep.subr.bf16.mxu0 0
  %368 = vmatpush1.bf16.msra.mxu0 0
  %369 = vmatprep.subr.bf16.mxu0 0
  %370 = vmatpush1.bf16.msra.mxu0 0
  %371 = vmatprep.subr.bf16.mxu0 0
  %372 = vmatpush1.bf16.msra.mxu0 0
  %373 = vmatprep.subr.bf16.mxu0 0
  %374 = vmatpush1.bf16.msra.mxu0 0
  %375 = vmatprep.subr.bf16.mxu0 0
  %376 = vmatpush1.bf16.msra.mxu0 0
  %377 = vmatprep.subr.bf16.mxu0 0
  %378 = vmatpush1.bf16.msra.mxu0 0
  %379 = vmatprep.subr.bf16.mxu0 0
  %380 = vmatpush1.bf16.msra.mxu0 0
  %381 = vmatprep.subr.bf16.mxu0 0
  %382 = vmatpush1.bf16.msra.mxu0 0
  %383 = vmatprep.mubr.bf16.mxu0 0
  %384 = vmatmul.mubr.bf16.gmra.mrb[0].mxu0 %v346
  %v385 = vpop.f32.mrb[0].mxu0
  %v386 = vadd.f32 0.0, %v385
  %v387 = vpop.f32.mrb[0].mxu0
  %v388 = vpop.f32.mrb[0].mxu0
  %v389 = vadd.f32 0.0, %v388
  %v390 = vpop.f32.mrb[0].mxu0
  %391 = vdwg.mxu0
  %v392 = vadd.f32 %v319, %v386
  %v393 = vadd.f32 %v322, %v389
  %s394 = scalar_lea.vmem %s7, 3
  %v395 = vld [vmem:[%s394] sm:$0x1]
  %396 = vrot.lane.b32.xlu0 %v191, 1
  %v397 = vpop.permute.xlu0 %396
  %v399 = vlaneseq
  %v400 = vshrl.u32 %v399, 7
  %v401 = vsub.s32 0, %v400
  %v402 = vrot.slane %v395, %v401
  %v404 = vmul.f32 %v397, %v402
  %s405 = scalar_lea.vmem %s5, 24
  %v406 = vld [vmem:[%s405] sm:$0xf]
  %v407 = vld [vmem:[%s405 + $0x4] sm:$0xf]
  %v408 = vpack.c.bf16 %v404, %v404
  %v411 = vunpack.c.l.b16 %v406
  %v412 = vunpack.c.l.b16 %v407
  %v413 = vpack.c.b16 %v412, %v411
  %v415 = vsel %vm225, %v413, 0
  %v418 = vsel %vm89, %v408, 0
  %420 = vmatprep.subr.bf16.mxu0 0
  %421 = vmatpush1.bf16.msra.mxu0 %v418
  %422 = vmatprep.subr.bf16.mxu0 0
  %423 = vmatpush1.bf16.msra.mxu0 0
  %424 = vmatprep.subr.bf16.mxu0 0
  %425 = vmatpush1.bf16.msra.mxu0 0
  %426 = vmatprep.subr.bf16.mxu0 0
  %427 = vmatpush1.bf16.msra.mxu0 0
  %428 = vmatprep.subr.bf16.mxu0 0
  %429 = vmatpush1.bf16.msra.mxu0 0
  %430 = vmatprep.subr.bf16.mxu0 0
  %431 = vmatpush1.bf16.msra.mxu0 0
  %432 = vmatprep.subr.bf16.mxu0 0
  %433 = vmatpush1.bf16.msra.mxu0 0
  %434 = vmatprep.subr.bf16.mxu0 0
  %435 = vmatpush1.bf16.msra.mxu0 0
  %436 = vmatprep.subr.bf16.mxu0 0
  %437 = vmatpush1.bf16.msra.mxu0 0
  %438 = vmatprep.subr.bf16.mxu0 0
  %439 = vmatpush1.bf16.msra.mxu0 0
  %440 = vmatprep.subr.bf16.mxu0 0
  %441 = vmatpush1.bf16.msra.mxu0 0
  %442 = vmatprep.subr.bf16.mxu0 0
  %443 = vmatpush1.bf16.msra.mxu0 0
  %444 = vmatprep.subr.bf16.mxu0 0
  %445 = vmatpush1.bf16.msra.mxu0 0
  %446 = vmatprep.subr.bf16.mxu0 0
  %447 = vmatpush1.bf16.msra.mxu0 0
  %448 = vmatprep.subr.bf16.mxu0 0
  %449 = vmatpush1.bf16.msra.mxu0 0
  %450 = vmatprep.subr.bf16.mxu0 0
  %451 = vmatpush1.bf16.msra.mxu0 0
  %452 = vmatprep.mubr.bf16.mxu0 0
  %453 = vmatmul.mubr.bf16.gmra.mrb[0].mxu0 %v415
  %v454 = vpop.f32.mrb[0].mxu0
  %v455 = vadd.f32 0.0, %v454
  %v456 = vpop.f32.mrb[0].mxu0
  %v457 = vpop.f32.mrb[0].mxu0
  %v458 = vadd.f32 0.0, %v457
  %v459 = vpop.f32.mrb[0].mxu0
  %460 = vdwg.mxu0
  %v461 = vadd.f32 %v392, %v455
  %v462 = vadd.f32 %v393, %v458
  %s463 = scalar_lea.vmem %s5, 32
  %v464 = vld [vmem:[%s463] sm:$0xf]
  %v465 = vld [vmem:[%s463 + $0x4] sm:$0xf]
  %v466 = vpack.c.bf16 %v191, %v191
  %v469 = vunpack.c.l.b16 %v464
  %v470 = vunpack.c.l.b16 %v465
  %v471 = vpack.c.b16 %v470, %v469
  %v473 = vsel %vm225, %v471, 0
  %v476 = vsel %vm89, %v466, 0
  %478 = vmatprep.subr.bf16.mxu0 0
  %479 = vmatpush1.bf16.msra.mxu0 %v476
  %480 = vmatprep.subr.bf16.mxu0 0
  %481 = vmatpush1.bf16.msra.mxu0 0
  %482 = vmatprep.subr.bf16.mxu0 0
  %483 = vmatpush1.bf16.msra.mxu0 0
  %484 = vmatprep.subr.bf16.mxu0 0
  %485 = vmatpush1.bf16.msra.mxu0 0
  %486 = vmatprep.subr.bf16.mxu0 0
  %487 = vmatpush1.bf16.msra.mxu0 0
  %488 = vmatprep.subr.bf16.mxu0 0
  %489 = vmatpush1.bf16.msra.mxu0 0
  %490 = vmatprep.subr.bf16.mxu0 0
  %491 = vmatpush1.bf16.msra.mxu0 0
  %492 = vmatprep.subr.bf16.mxu0 0
  %493 = vmatpush1.bf16.msra.mxu0 0
  %494 = vmatprep.subr.bf16.mxu0 0
  %495 = vmatpush1.bf16.msra.mxu0 0
  %496 = vmatprep.subr.bf16.mxu0 0
  %497 = vmatpush1.bf16.msra.mxu0 0
  %498 = vmatprep.subr.bf16.mxu0 0
  %499 = vmatpush1.bf16.msra.mxu0 0
  %500 = vmatprep.subr.bf16.mxu0 0
  %501 = vmatpush1.bf16.msra.mxu0 0
  %502 = vmatprep.subr.bf16.mxu0 0
  %503 = vmatpush1.bf16.msra.mxu0 0
  %504 = vmatprep.subr.bf16.mxu0 0
  %505 = vmatpush1.bf16.msra.mxu0 0
  %506 = vmatprep.subr.bf16.mxu0 0
  %507 = vmatpush1.bf16.msra.mxu0 0
  %508 = vmatprep.subr.bf16.mxu0 0
  %509 = vmatpush1.bf16.msra.mxu0 0
  %510 = vmatprep.mubr.bf16.mxu0 0
  %511 = vmatmul.mubr.bf16.gmra.mrb[0].mxu0 %v473
  %v512 = vpop.f32.mrb[0].mxu0
  %v513 = vadd.f32 0.0, %v512
  %v514 = vpop.f32.mrb[0].mxu0
  %v515 = vpop.f32.mrb[0].mxu0
  %v516 = vadd.f32 0.0, %v515
  %v517 = vpop.f32.mrb[0].mxu0
  %518 = vdwg.mxu0
  %v519 = vadd.f32 %v461, %v513
  %v520 = vadd.f32 %v462, %v516
  %s521 = scalar_lea.vmem %s7, 5
  %v522 = vld [vmem:[%s521] sm:$0x1]
  %523 = vrot.lane.b32.xlu0 %v191, 127
  %v524 = vpop.permute.xlu0 %523
  %v526 = vlaneseq
  %v527 = vshrl.u32 %v526, 7
  %v528 = vsub.s32 0, %v527
  %v529 = vrot.slane %v522, %v528
  %v531 = vmul.f32 %v524, %v529
  %s532 = scalar_lea.vmem %s5, 40
  %v533 = vld [vmem:[%s532] sm:$0xf]
  %v534 = vld [vmem:[%s532 + $0x4] sm:$0xf]
  %v535 = vpack.c.bf16 %v531, %v531
  %v538 = vunpack.c.l.b16 %v533
  %v539 = vunpack.c.l.b16 %v534
  %v540 = vpack.c.b16 %v539, %v538
  %v542 = vsel %vm225, %v540, 0
  %v545 = vsel %vm89, %v535, 0
  %547 = vmatprep.subr.bf16.mxu0 0
  %548 = vmatpush1.bf16.msra.mxu0 %v545
  %549 = vmatprep.subr.bf16.mxu0 0
  %550 = vmatpush1.bf16.msra.mxu0 0
  %551 = vmatprep.subr.bf16.mxu0 0
  %552 = vmatpush1.bf16.msra.mxu0 0
  %553 = vmatprep.subr.bf16.mxu0 0
  %554 = vmatpush1.bf16.msra.mxu0 0
  %555 = vmatprep.subr.bf16.mxu0 0
  %556 = vmatpush1.bf16.msra.mxu0 0
  %557 = vmatprep.subr.bf16.mxu0 0
  %558 = vmatpush1.bf16.msra.mxu0 0
  %559 = vmatprep.subr.bf16.mxu0 0
  %560 = vmatpush1.bf16.msra.mxu0 0
  %561 = vmatprep.subr.bf16.mxu0 0
  %562 = vmatpush1.bf16.msra.mxu0 0
  %563 = vmatprep.subr.bf16.mxu0 0
  %564 = vmatpush1.bf16.msra.mxu0 0
  %565 = vmatprep.subr.bf16.mxu0 0
  %566 = vmatpush1.bf16.msra.mxu0 0
  %567 = vmatprep.subr.bf16.mxu0 0
  %568 = vmatpush1.bf16.msra.mxu0 0
  %569 = vmatprep.subr.bf16.mxu0 0
  %570 = vmatpush1.bf16.msra.mxu0 0
  %571 = vmatprep.subr.bf16.mxu0 0
  %572 = vmatpush1.bf16.msra.mxu0 0
  %573 = vmatprep.subr.bf16.mxu0 0
  %574 = vmatpush1.bf16.msra.mxu0 0
  %575 = vmatprep.subr.bf16.mxu0 0
  %576 = vmatpush1.bf16.msra.mxu0 0
  %577 = vmatprep.subr.bf16.mxu0 0
  %578 = vmatpush1.bf16.msra.mxu0 0
  %579 = vmatprep.mubr.bf16.mxu0 0
  %580 = vmatmul.mubr.bf16.gmra.mrb[0].mxu0 %v542
  %v581 = vpop.f32.mrb[0].mxu0
  %v582 = vadd.f32 0.0, %v581
  %v583 = vpop.f32.mrb[0].mxu0
  %v584 = vpop.f32.mrb[0].mxu0
  %v585 = vadd.f32 0.0, %v584
  %v586 = vpop.f32.mrb[0].mxu0
  %587 = vdwg.mxu0
  %v588 = vadd.f32 %v519, %v582
  %v589 = vadd.f32 %v520, %v585
  %s590 = scalar_lea.vmem %s7, 6
  %v591 = vld [vmem:[%s590] sm:$0x1]
  %592 = vrot.lane.b32.xlu0 %v191, 121
  %v593 = vpop.permute.xlu0 %592
  %v595 = vlaneseq
  %v596 = vshrl.u32 %v595, 7
  %v597 = vsub.s32 0, %v596
  %v598 = vrot.slane %v591, %v597
  %v600 = vmul.f32 %v593, %v598
  %s601 = scalar_lea.vmem %s5, 48
  %v602 = vld [vmem:[%s601] sm:$0xf]
  %v603 = vld [vmem:[%s601 + $0x4] sm:$0xf]
  %v604 = vpack.c.bf16 %v600, %v600
  %v607 = vunpack.c.l.b16 %v602
  %v608 = vunpack.c.l.b16 %v603
  %v609 = vpack.c.b16 %v608, %v607
  %v611 = vsel %vm225, %v609, 0
  %v614 = vsel %vm89, %v604, 0
  %616 = vmatprep.subr.bf16.mxu0 0
  %617 = vmatpush1.bf16.msra.mxu0 %v614
  %618 = vmatprep.subr.bf16.mxu0 0
  %619 = vmatpush1.bf16.msra.mxu0 0
  %620 = vmatprep.subr.bf16.mxu0 0
  %621 = vmatpush1.bf16.msra.mxu0 0
  %622 = vmatprep.subr.bf16.mxu0 0
  %623 = vmatpush1.bf16.msra.mxu0 0
  %624 = vmatprep.subr.bf16.mxu0 0
  %625 = vmatpush1.bf16.msra.mxu0 0
  %626 = vmatprep.subr.bf16.mxu0 0
  %627 = vmatpush1.bf16.msra.mxu0 0
  %628 = vmatprep.subr.bf16.mxu0 0
  %629 = vmatpush1.bf16.msra.mxu0 0
  %630 = vmatprep.subr.bf16.mxu0 0
  %631 = vmatpush1.bf16.msra.mxu0 0
  %632 = vmatprep.subr.bf16.mxu0 0
  %633 = vmatpush1.bf16.msra.mxu0 0
  %634 = vmatprep.subr.bf16.mxu0 0
  %635 = vmatpush1.bf16.msra.mxu0 0
  %636 = vmatprep.subr.bf16.mxu0 0
  %637 = vmatpush1.bf16.msra.mxu0 0
  %638 = vmatprep.subr.bf16.mxu0 0
  %639 = vmatpush1.bf16.msra.mxu0 0
  %640 = vmatprep.subr.bf16.mxu0 0
  %641 = vmatpush1.bf16.msra.mxu0 0
  %642 = vmatprep.subr.bf16.mxu0 0
  %643 = vmatpush1.bf16.msra.mxu0 0
  %644 = vmatprep.subr.bf16.mxu0 0
  %645 = vmatpush1.bf16.msra.mxu0 0
  %646 = vmatprep.subr.bf16.mxu0 0
  %647 = vmatpush1.bf16.msra.mxu0 0
  %648 = vmatprep.mubr.bf16.mxu0 0
  %649 = vmatmul.mubr.bf16.gmra.mrb[0].mxu0 %v611
  %v650 = vpop.f32.mrb[0].mxu0
  %v651 = vadd.f32 0.0, %v650
  %v652 = vpop.f32.mrb[0].mxu0
  %v653 = vpop.f32.mrb[0].mxu0
  %v654 = vadd.f32 0.0, %v653
  %v655 = vpop.f32.mrb[0].mxu0
  %656 = vdwg.mxu0
  %v657 = vadd.f32 %v588, %v651
  %v658 = vadd.f32 %v589, %v654
  %s659 = scalar_lea.vmem %s7, 7
  %v660 = vld [vmem:[%s659] sm:$0x1]
  %661 = vrot.lane.b32.xlu0 %v191, 120
  %v662 = vpop.permute.xlu0 %661
  %v664 = vlaneseq
  %v665 = vshrl.u32 %v664, 7
  %v666 = vsub.s32 0, %v665
  %v667 = vrot.slane %v660, %v666
  %v669 = vmul.f32 %v662, %v667
  %s670 = scalar_lea.vmem %s5, 56
  %v671 = vld [vmem:[%s670] sm:$0xf]
  %v672 = vld [vmem:[%s670 + $0x4] sm:$0xf]
  %v673 = vpack.c.bf16 %v669, %v669
  %v676 = vunpack.c.l.b16 %v671
  %v677 = vunpack.c.l.b16 %v672
  %v678 = vpack.c.b16 %v677, %v676
  %v680 = vsel %vm225, %v678, 0
  %v683 = vsel %vm89, %v673, 0
  %685 = vmatprep.subr.bf16.mxu0 0
  %686 = vmatpush1.bf16.msra.mxu0 %v683
  %687 = vmatprep.subr.bf16.mxu0 0
  %688 = vmatpush1.bf16.msra.mxu0 0
  %689 = vmatprep.subr.bf16.mxu0 0
  %690 = vmatpush1.bf16.msra.mxu0 0
  %691 = vmatprep.subr.bf16.mxu0 0
  %692 = vmatpush1.bf16.msra.mxu0 0
  %693 = vmatprep.subr.bf16.mxu0 0
  %694 = vmatpush1.bf16.msra.mxu0 0
  %695 = vmatprep.subr.bf16.mxu0 0
  %696 = vmatpush1.bf16.msra.mxu0 0
  %697 = vmatprep.subr.bf16.mxu0 0
  %698 = vmatpush1.bf16.msra.mxu0 0
  %699 = vmatprep.subr.bf16.mxu0 0
  %700 = vmatpush1.bf16.msra.mxu0 0
  %701 = vmatprep.subr.bf16.mxu0 0
  %702 = vmatpush1.bf16.msra.mxu0 0
  %703 = vmatprep.subr.bf16.mxu0 0
  %704 = vmatpush1.bf16.msra.mxu0 0
  %705 = vmatprep.subr.bf16.mxu0 0
  %706 = vmatpush1.bf16.msra.mxu0 0
  %707 = vmatprep.subr.bf16.mxu0 0
  %708 = vmatpush1.bf16.msra.mxu0 0
  %709 = vmatprep.subr.bf16.mxu0 0
  %710 = vmatpush1.bf16.msra.mxu0 0
  %711 = vmatprep.subr.bf16.mxu0 0
  %712 = vmatpush1.bf16.msra.mxu0 0
  %713 = vmatprep.subr.bf16.mxu0 0
  %714 = vmatpush1.bf16.msra.mxu0 0
  %715 = vmatprep.subr.bf16.mxu0 0
  %716 = vmatpush1.bf16.msra.mxu0 0
  %717 = vmatprep.mubr.bf16.mxu0 0
  %718 = vmatmul.mubr.bf16.gmra.mrb[0].mxu0 %v680
  %v719 = vpop.f32.mrb[0].mxu0
  %v720 = vadd.f32 0.0, %v719
  %v721 = vpop.f32.mrb[0].mxu0
  %v722 = vpop.f32.mrb[0].mxu0
  %v723 = vadd.f32 0.0, %v722
  %v724 = vpop.f32.mrb[0].mxu0
  %725 = vdwg.mxu0
  %v726 = vadd.f32 %v657, %v720
  %v727 = vadd.f32 %v658, %v723
  %s728 = scalar_lea.vmem %s7, 8
  %v729 = vld [vmem:[%s728] sm:$0x1]
  %730 = vrot.lane.b32.xlu0 %v191, 119
  %v731 = vpop.permute.xlu0 %730
  %v733 = vlaneseq
  %v734 = vshrl.u32 %v733, 7
  %v735 = vsub.s32 0, %v734
  %v736 = vrot.slane %v729, %v735
  %v738 = vmul.f32 %v731, %v736
  %s739 = scalar_lea.vmem %s5, 64
  %v740 = vld [vmem:[%s739] sm:$0xf]
  %v741 = vld [vmem:[%s739 + $0x4] sm:$0xf]
  %v742 = vpack.c.bf16 %v738, %v738
  %v745 = vunpack.c.l.b16 %v740
  %v746 = vunpack.c.l.b16 %v741
  %v747 = vpack.c.b16 %v746, %v745
  %v749 = vsel %vm225, %v747, 0
  %v752 = vsel %vm89, %v742, 0
  %754 = vmatprep.subr.bf16.mxu0 0
  %755 = vmatpush1.bf16.msra.mxu0 %v752
  %756 = vmatprep.subr.bf16.mxu0 0
  %757 = vmatpush1.bf16.msra.mxu0 0
  %758 = vmatprep.subr.bf16.mxu0 0
  %759 = vmatpush1.bf16.msra.mxu0 0
  %760 = vmatprep.subr.bf16.mxu0 0
  %761 = vmatpush1.bf16.msra.mxu0 0
  %762 = vmatprep.subr.bf16.mxu0 0
  %763 = vmatpush1.bf16.msra.mxu0 0
  %764 = vmatprep.subr.bf16.mxu0 0
  %765 = vmatpush1.bf16.msra.mxu0 0
  %766 = vmatprep.subr.bf16.mxu0 0
  %767 = vmatpush1.bf16.msra.mxu0 0
  %768 = vmatprep.subr.bf16.mxu0 0
  %769 = vmatpush1.bf16.msra.mxu0 0
  %770 = vmatprep.subr.bf16.mxu0 0
  %771 = vmatpush1.bf16.msra.mxu0 0
  %772 = vmatprep.subr.bf16.mxu0 0
  %773 = vmatpush1.bf16.msra.mxu0 0
  %774 = vmatprep.subr.bf16.mxu0 0
  %775 = vmatpush1.bf16.msra.mxu0 0
  %776 = vmatprep.subr.bf16.mxu0 0
  %777 = vmatpush1.bf16.msra.mxu0 0
  %778 = vmatprep.subr.bf16.mxu0 0
  %779 = vmatpush1.bf16.msra.mxu0 0
  %780 = vmatprep.subr.bf16.mxu0 0
  %781 = vmatpush1.bf16.msra.mxu0 0
  %782 = vmatprep.subr.bf16.mxu0 0
  %783 = vmatpush1.bf16.msra.mxu0 0
  %784 = vmatprep.subr.bf16.mxu0 0
  %785 = vmatpush1.bf16.msra.mxu0 0
  %786 = vmatprep.mubr.bf16.mxu0 0
  %787 = vmatmul.mubr.bf16.gmra.mrb[0].mxu0 %v749
  %v788 = vpop.f32.mrb[0].mxu0
  %v789 = vadd.f32 0.0, %v788
  %v790 = vpop.f32.mrb[0].mxu0
  %v791 = vpop.f32.mrb[0].mxu0
  %v792 = vadd.f32 0.0, %v791
  %v793 = vpop.f32.mrb[0].mxu0
  %794 = vdwg.mxu0
  %v795 = vadd.f32 %v726, %v789
  %v796 = vadd.f32 %v727, %v792
  %v797 = vld [vmem:[%s6] sm:$0xff]
  %v798 = vld [vmem:[%s6 + $0x8] sm:$0xff]
  %800 = vset.pattern.permute.xlu0 0
  %801 = vperm.xlu0 %800, %v797
  %v802 = vpop.permute.xlu0 %801
  %805 = vset.pattern.permute.xlu0 0
  %806 = vperm.xlu0 %805, %v798
  %v807 = vpop.permute.xlu0 %806
  %v809 = vadd.f32 %v795, %v802
  %v810 = vadd.f32 %v796, %v807
  %v811 = vmul.f32 %v809, 0.1
  %v812 = vmul.f32 %v810, 0.1
  %v813 = vmax.f32 %v809, %v811
  %v814 = vmax.f32 %v810, %v812
  %v815 = vadd.f32 %v813, %v136
  %v816 = vadd.f32 %v814, %v137
  %v817 = vpack.c.bf16 %v816, %v815
  %v819 = vunpack.c.l.b16 %v817
  %v820 = vunpack.c.h.b16 %v817
  %v821 = vpack.c.b16 %v819, %v819
  %v822 = vpack.c.b16 %v820, %v820
  %825 = vst [vmem:[%s8] sm:$0xf] %v821
  %826 = vst [vmem:[%s8 + $0x4] sm:$0xf] %v822
  // Predicated region
  $region34: #{_lambda_.5} parent=0 // pred_check
    _
  $region35: #{_lambda_.5} parent=0 // pred_check_branch
    %828 = sbr.rel (0) target = $region37
  $region36: #{_lambda_.5} parent=0 // pred_region
    _
  $region37: #{_lambda_.5} parent=0 // pred_fallthru
    _
  // Predicated region
  $region38: #{_lambda_.5} parent=0 // pred_check
    _
  $region39: #{_lambda_.5} parent=0 // pred_check_branch
    %830 = sbr.rel (0) target = $region41
  $region40: #{_lambda_.5} parent=0 // pred_region
    _
  $region41: #{_lambda_.5} parent=0 // pred_fallthru
    _

// kernel: tile.38
$region0: #{tile.38}
  #allocation0 [shape = 's32[1]{0}', space=sflag, size = 0x4, scoped, tag = 'scoped memory for tile.38']
  %s0 = inlined_call_operand.vmem [shape: f32[8], index: 0, kind: input, shape index: {}]
  %s1 = inlined_call_operand.vmem [shape: f32[2,8], index: 1, kind: output, shape index: {}]
  // Predicated region
  $region2: #{tile.38} parent=0 // pred_check
    _
  $region3: #{tile.38} parent=0 // pred_check_branch
    %3 = sbr.rel (0) target = $region5
  $region4: #{tile.38} parent=0 // pred_region
    _
  $region5: #{tile.38} parent=0 // pred_fallthru
    _
  %v4 = vld [vmem:[%s0] ss:$0 sm:$0xff]
  %5 = vst [vmem:[%s1] sm:$0x3] %v4

// kernel: _lambda_.6
$region0: #{_lambda_.6}
  #allocation0 [shape = 'u32[]', space=smem, size = 0x4, offset = 0x4, fixed_abs, tag = 'smem constant byte address 0x4 - core index']
  #allocation1 [shape = 'u32[144,128]{1,0:T(1,128)}', space=vmem, size = 0x12000, scoped, tag = 'internal scratch']
  %s0 = inlined_call_operand.vmem [shape: bf16[144,32], index: 0, kind: input, shape index: {}]
  %s1 = inlined_call_operand.vmem [shape: bf16[16,144], index: 1, kind: input, shape index: {}]
  %s2 = inlined_call_operand.vmem [shape: f32[16,1], index: 2, kind: input, shape index: {}]
  %s3 = inlined_call_operand.vmem [shape: bf16[16,16], index: 3, kind: input, shape index: {}]
  %s4 = inlined_call_operand.vmem [shape: f32[16,1], index: 4, kind: input, shape index: {}]
  %s5 = inlined_call_operand.vmem [shape: bf16[8,16], index: 5, kind: input, shape index: {}]
  %s6 = inlined_call_operand.vmem [shape: f32[8,1], index: 6, kind: input, shape index: {}]
  %s7 = inlined_call_operand.vmem [shape: f32[16,1], index: 7, kind: input, shape index: {}]
  %s8 = inlined_call_operand.vmem [shape: f32[16,1], index: 8, kind: input, shape index: {}]
  %s9 = inlined_call_operand.vmem [shape: f32[16,1], index: 9, kind: input, shape index: {}]
  %s10 = inlined_call_operand.vmem [shape: f32[16,32], index: 10, kind: input, shape index: {}]
  %s11 = inlined_call_operand.vmem [shape: f32[16,32], index: 11, kind: output, shape index: {0}]
  %s12 = inlined_call_operand.vmem [shape: bf16[8,32], index: 12, kind: output, shape index: {1}]
  %13 = xla_tuple %s11, %s12
  %s14 = sld [smem:[#allocation0]]
  $region62: #{_lambda_.6} parent=0
    _
  %s16 = ssub.s32 1, %s14
  %s17 = scalar_select 0, %s16, %s14
  // Predicated region
  $region2: #{_lambda_.6} parent=0 // pred_check
    _
  $region3: #{_lambda_.6} parent=0 // pred_check_branch
    %19 = sbr.rel (0) target = $region5
  $region4: #{_lambda_.6} parent=0 // pred_region
    _
  $region5: #{_lambda_.6} parent=0 // pred_fallthru
    _
  // Predicated region
  $region6: #{_lambda_.6} parent=0 // pred_check
    _
  $region7: #{_lambda_.6} parent=0 // pred_check_branch
    %21 = sbr.rel (0) target = $region9
  $region8: #{_lambda_.6} parent=0 // pred_region
    _
  $region9: #{_lambda_.6} parent=0 // pred_fallthru
    _
  // Predicated region
  $region10: #{_lambda_.6} parent=0 // pred_check
    _
  $region11: #{_lambda_.6} parent=0 // pred_check_branch
    %23 = sbr.rel (0) target = $region13
  $region12: #{_lambda_.6} parent=0 // pred_region
    _
  $region13: #{_lambda_.6} parent=0 // pred_fallthru
    _
  // Predicated region
  $region14: #{_lambda_.6} parent=0 // pred_check
    _
  $region15: #{_lambda_.6} parent=0 // pred_check_branch
    %25 = sbr.rel (0) target = $region17
  $region16: #{_lambda_.6} parent=0 // pred_region
    _
  $region17: #{_lambda_.6} parent=0 // pred_fallthru
    _
  // Predicated region
  $region18: #{_lambda_.6} parent=0 // pred_check
    _
  $region19: #{_lambda_.6} parent=0 // pred_check_branch
    %27 = sbr.rel (0) target = $region21
  $region20: #{_lambda_.6} parent=0 // pred_region
    _
  $region21: #{_lambda_.6} parent=0 // pred_fallthru
    _
  // Predicated region
  $region22: #{_lambda_.6} parent=0 // pred_check
    _
  $region23: #{_lambda_.6} parent=0 // pred_check_branch
    %29 = sbr.rel (0) target = $region25
  $region24: #{_lambda_.6} parent=0 // pred_region
    _
  $region25: #{_lambda_.6} parent=0 // pred_fallthru
    _
  // Predicated region
  $region26: #{_lambda_.6} parent=0 // pred_check
    _
  $region27: #{_lambda_.6} parent=0 // pred_check_branch
    %31 = sbr.rel (0) target = $region29
  $region28: #{_lambda_.6} parent=0 // pred_region
    _
  $region29: #{_lambda_.6} parent=0 // pred_fallthru
    _
  // Predicated region
  $region30: #{_lambda_.6} parent=0 // pred_check
    _
  $region31: #{_lambda_.6} parent=0 // pred_check_branch
    %33 = sbr.rel (0) target = $region33
  $region32: #{_lambda_.6} parent=0 // pred_region
    _
  $region33: #{_lambda_.6} parent=0 // pred_fallthru
    _
  // Predicated region
  $region34: #{_lambda_.6} parent=0 // pred_check
    _
  $region35: #{_lambda_.6} parent=0 // pred_check_branch
    %35 = sbr.rel (0) target = $region37
  $region36: #{_lambda_.6} parent=0 // pred_region
    _
  $region37: #{_lambda_.6} parent=0 // pred_fallthru
    _
  // Predicated region
  $region38: #{_lambda_.6} parent=0 // pred_check
    _
  $region39: #{_lambda_.6} parent=0 // pred_check_branch
    %37 = sbr.rel (0) target = $region41
  $region40: #{_lambda_.6} parent=0 // pred_region
    _
  $region41: #{_lambda_.6} parent=0 // pred_fallthru
    _
  // Predicated region
  $region42: #{_lambda_.6} parent=0 // pred_check
    _
  $region43: #{_lambda_.6} parent=0 // pred_check_branch
    %39 = sbr.rel (0) target = $region45
  $region44: #{_lambda_.6} parent=0 // pred_region
    _
  $region45: #{_lambda_.6} parent=0 // pred_fallthru
    _
  %v41 = vld [vmem:[%s1] sm:$0xff]
  %v42 = vld [vmem:[%s1 + $0x8] sm:$0xff]
  %v43 = vld [vmem:[%s0] sm:$0xf]
  %v44 = vld [vmem:[%s0 + $0x4] sm:$0xf]
  %v45 = vld [vmem:[%s0 + $0x8] sm:$0xf]
  %v46 = vld [vmem:[%s0 + $0xc] sm:$0xf]
  %v47 = vld [vmem:[%s0 + $0x10] sm:$0xf]
  %v48 = vld [vmem:[%s0 + $0x14] sm:$0xf]
  %v49 = vld [vmem:[%s0 + $0x18] sm:$0xf]
  %v50 = vld [vmem:[%s0 + $0x1c] sm:$0xf]
  %v51 = vld [vmem:[%s0 + $0x20] sm:$0xf]
  %v52 = vld [vmem:[%s0 + $0x24] sm:$0xf]
  %v53 = vld [vmem:[%s0 + $0x28] sm:$0xf]
  %v54 = vld [vmem:[%s0 + $0x2c] sm:$0xf]
  %v55 = vld [vmem:[%s0 + $0x30] sm:$0xf]
  %v56 = vld [vmem:[%s0 + $0x34] sm:$0xf]
  %v57 = vld [vmem:[%s0 + $0x38] sm:$0xf]
  %v58 = vld [vmem:[%s0 + $0x3c] sm:$0xf]
  %v59 = vld [vmem:[%s0 + $0x40] sm:$0xf]
  %v60 = vld [vmem:[%s0 + $0x44] sm:$0xf]
  %v61 = vld [vmem:[%s2] sm:$0xff]
  %v62 = vld [vmem:[%s2 + $0x8] sm:$0xff]
  %64 = vset.pattern.permute.xlu0 0
  %65 = vperm.xlu0 %64, %v61
  %v66 = vpop.permute.xlu0 %65
  %69 = vset.pattern.permute.xlu0 0
  %70 = vperm.xlu0 %69, %v62
  %v71 = vpop.permute.xlu0 %70
  %v75 = vunpack.c.l.b16 %v41
  %v76 = vunpack.c.h.b16 %v41
  %v77 = vunpack.c.l.b16 %v42
  %v78 = vunpack.c.h.b16 %v42
  %v79 = vpack.c.b16 %v77, %v75
  %v80 = vpack.c.b16 %v78, %v76
  %v100 = vunpack.c.l.b16 %v43
  %v101 = vunpack.c.l.b16 %v44
  %v102 = vunpack.c.l.b16 %v45
  %v103 = vunpack.c.l.b16 %v46
  %v104 = vunpack.c.l.b16 %v47
  %v105 = vunpack.c.l.b16 %v48
  %v106 = vunpack.c.l.b16 %v49
  %v107 = vunpack.c.l.b16 %v50
  %v108 = vunpack.c.l.b16 %v51
  %v109 = vunpack.c.l.b16 %v52
  %v110 = vunpack.c.l.b16 %v53
  %v111 = vunpack.c.l.b16 %v54
  %v112 = vunpack.c.l.b16 %v55
  %v113 = vunpack.c.l.b16 %v56
  %v114 = vunpack.c.l.b16 %v57
  %v115 = vunpack.c.l.b16 %v58
  %v116 = vunpack.c.l.b16 %v59
  %v117 = vunpack.c.l.b16 %v60
  %v118 = vpack.c.b16 %v101, %v100
  %v119 = vpack.c.b16 %v103, %v102
  %v120 = vpack.c.b16 %v105, %v104
  %v121 = vpack.c.b16 %v107, %v106
  %v122 = vpack.c.b16 %v109, %v108
  %v123 = vpack.c.b16 %v111, %v110
  %v124 = vpack.c.b16 %v113, %v112
  %v125 = vpack.c.b16 %v115, %v114
  %v126 = vpack.c.b16 %v117, %v116
  %vm136 = vcmask 130048
  %v138 = vsel %vm136, %v80, 0
  %140 = vmatprep.subr.bf16.mxu0 0
  %141 = vmatpush1.bf16.msra.mxu0 %v118
  %142 = vmatprep.subr.bf16.mxu0 0
  %143 = vmatpush1.bf16.msra.mxu0 %v119
  %144 = vmatprep.subr.bf16.mxu0 0
  %145 = vmatpush1.bf16.msra.mxu0 %v120
  %146 = vmatprep.subr.bf16.mxu0 0
  %147 = vmatpush1.bf16.msra.mxu0 %v121
  %148 = vmatprep.subr.bf16.mxu0 0
  %149 = vmatpush1.bf16.msra.mxu0 %v122
  %150 = vmatprep.subr.bf16.mxu0 0
  %151 = vmatpush1.bf16.msra.mxu0 %v123
  %152 = vmatprep.subr.bf16.mxu0 0
  %153 = vmatpush1.bf16.msra.mxu0 %v124
  %154 = vmatprep.subr.bf16.mxu0 0
  %155 = vmatpush1.bf16.msra.mxu0 %v125
  %156 = vmatprep.subr.bf16.mxu0 0
  %157 = vmatpush1.bf16.msra.mxu0 %v126
  %158 = vmatprep.subr.bf16.mxu0 0
  %159 = vmatpush1.bf16.msra.mxu0 0
  %160 = vmatprep.subr.bf16.mxu0 0
  %161 = vmatpush1.bf16.msra.mxu0 0
  %162 = vmatprep.subr.bf16.mxu0 0
  %163 = vmatpush1.bf16.msra.mxu0 0
  %164 = vmatprep.subr.bf16.mxu0 0
  %165 = vmatpush1.bf16.msra.mxu0 0
  %166 = vmatprep.subr.bf16.mxu0 0
  %167 = vmatpush1.bf16.msra.mxu0 0
  %168 = vmatprep.subr.bf16.mxu0 0
  %169 = vmatpush1.bf16.msra.mxu0 0
  %170 = vmatprep.subr.bf16.mxu0 0
  %171 = vmatpush1.bf16.msra.mxu0 0
  %172 = vmatprep.mubr.bf16.mxu0 %v138
  %173 = vmatmul.mubr.bf16.gmra.mrb[0].mxu0 %v79
  %v174 = vpop.f32.mrb[0].mxu0
  %v175 = vadd.f32 %v66, %v174
  %v176 = vpop.f32.mrb[0].mxu0
  %v177 = vpop.f32.mrb[0].mxu0
  %v178 = vadd.f32 %v71, %v177
  %v179 = vpop.f32.mrb[0].mxu0
  %180 = vdwg.mxu0
  %v181 = vmul.f32 %v175, 0.1
  %v182 = vmul.f32 %v178, 0.1
  %v183 = vmax.f32 %v175, %v181
  %v184 = vmax.f32 %v178, %v182
  %v185 = vld [vmem:[%s3] sm:$0xf]
  %v186 = vld [vmem:[%s3 + $0x4] sm:$0xf]
  %v187 = vpack.c.bf16 %v184, %v183
  %v188 = vld [vmem:[%s4] sm:$0xff]
  %v189 = vld [vmem:[%s4 + $0x8] sm:$0xff]
  %191 = vset.pattern.permute.xlu0 0
  %192 = vperm.xlu0 %191, %v188
  %v193 = vpop.permute.xlu0 %192
  %196 = vset.pattern.permute.xlu0 0
  %197 = vperm.xlu0 %196, %v189
  %v198 = vpop.permute.xlu0 %197
  %v202 = vunpack.c.l.b16 %v185
  %v203 = vunpack.c.l.b16 %v186
  %v204 = vpack.c.b16 %v203, %v202
  %v206 = vsel %vm136, %v204, 0
  %208 = vmatprep.subr.bf16.mxu0 0
  %209 = vmatpush1.bf16.msra.mxu0 %v187
  %210 = vmatprep.subr.bf16.mxu0 0
  %211 = vmatpush1.bf16.msra.mxu0 0
  %212 = vmatprep.subr.bf16.mxu0 0
  %213 = vmatpush1.bf16.msra.mxu0 0
  %214 = vmatprep.subr.bf16.mxu0 0
  %215 = vmatpush1.bf16.msra.mxu0 0
  %216 = vmatprep.subr.bf16.mxu0 0
  %217 = vmatpush1.bf16.msra.mxu0 0
  %218 = vmatprep.subr.bf16.mxu0 0
  %219 = vmatpush1.bf16.msra.mxu0 0
  %220 = vmatprep.subr.bf16.mxu0 0
  %221 = vmatpush1.bf16.msra.mxu0 0
  %222 = vmatprep.subr.bf16.mxu0 0
  %223 = vmatpush1.bf16.msra.mxu0 0
  %224 = vmatprep.subr.bf16.mxu0 0
  %225 = vmatpush1.bf16.msra.mxu0 0
  %226 = vmatprep.subr.bf16.mxu0 0
  %227 = vmatpush1.bf16.msra.mxu0 0
  %228 = vmatprep.subr.bf16.mxu0 0
  %229 = vmatpush1.bf16.msra.mxu0 0
  %230 = vmatprep.subr.bf16.mxu0 0
  %231 = vmatpush1.bf16.msra.mxu0 0
  %232 = vmatprep.subr.bf16.mxu0 0
  %233 = vmatpush1.bf16.msra.mxu0 0
  %234 = vmatprep.subr.bf16.mxu0 0
  %235 = vmatpush1.bf16.msra.mxu0 0
  %236 = vmatprep.subr.bf16.mxu0 0
  %237 = vmatpush1.bf16.msra.mxu0 0
  %238 = vmatprep.subr.bf16.mxu0 0
  %239 = vmatpush1.bf16.msra.mxu0 0
  %240 = vmatprep.mubr.bf16.mxu0 0
  %241 = vmatmul.mubr.bf16.gmra.mrb[0].mxu0 %v206
  %v242 = vpop.f32.mrb[0].mxu0
  %v243 = vadd.f32 %v193, %v242
  %v244 = vpop.f32.mrb[0].mxu0
  %v245 = vpop.f32.mrb[0].mxu0
  %v246 = vadd.f32 %v198, %v245
  %v247 = vpop.f32.mrb[0].mxu0
  %248 = vdwg.mxu0
  %v249 = vmul.f32 %v243, 0.1
  %v250 = vmul.f32 %v246, 0.1
  %v251 = vmax.f32 %v243, %v249
  %v252 = vmax.f32 %v246, %v250
  %v253 = vsub.f32 0.0, %v251
  %v254 = vsub.f32 0.0, %v252
  %v255 = vmul.f32 %v253, 1.442695
  %v256 = vpow.pop %v255
  %v257 = vmul.f32 %v254, 1.442695
  %v258 = vpow.pop %v257
  %v259 = vadd.f32 %v256, 1.0
  %v260 = vadd.f32 %v258, 1.0
  %v261 = vrcp.pop %v259
  %v262 = vmul.f32 1.0, %v261
  %v263 = vrcp.pop %v260
  %v264 = vmul.f32 1.0, %v263
  %v265 = vld [vmem:[%s7] sm:$0xff]
  %v266 = vld [vmem:[%s7 + $0x8] sm:$0xff]
  %268 = vset.pattern.permute.xlu0 0
  %269 = vperm.xlu0 %268, %v265
  %v270 = vpop.permute.xlu0 %269
  %273 = vset.pattern.permute.xlu0 0
  %274 = vperm.xlu0 %273, %v266
  %v275 = vpop.permute.xlu0 %274
  %v277 = vmul.f32 %v262, %v270
  %v278 = vmul.f32 %v264, %v275
  %v279 = vld [vmem:[%s8] sm:$0xff]
  %v280 = vld [vmem:[%s8 + $0x8] sm:$0xff]
  %282 = vset.pattern.permute.xlu0 0
  %283 = vperm.xlu0 %282, %v279
  %v284 = vpop.permute.xlu0 %283
  %287 = vset.pattern.permute.xlu0 0
  %288 = vperm.xlu0 %287, %v280
  %v289 = vpop.permute.xlu0 %288
  %v291 = vmul.f32 %v251, %v284
  %v292 = vmul.f32 %v252, %v289
  %v293 = vmul.f32 %v291, 1.442695
  %v294 = vpow.pop %v293
  %v295 = vmul.f32 %v292, 1.442695
  %v296 = vpow.pop %v295
  %v297 = vld [vmem:[%s9] sm:$0xff]
  %v298 = vld [vmem:[%s9 + $0x8] sm:$0xff]
  %300 = vset.pattern.permute.xlu0 0
  %301 = vperm.xlu0 %300, %v297
  %v302 = vpop.permute.xlu0 %301
  %305 = vset.pattern.permute.xlu0 0
  %306 = vperm.xlu0 %305, %v298
  %v307 = vpop.permute.xlu0 %306
  %v309 = vmul.f32 %v294, %v302
  %v310 = vmul.f32 %v296, %v307
  %v311 = vadd.f32 %v277, %v309
  %v312 = vadd.f32 %v278, %v310
  %v313 = vld [vmem:[%s10] sm:$0xff]
  %v314 = vld [vmem:[%s10 + $0x8] sm:$0xff]
  %v315 = vadd.f32 %v311, %v313
  %v316 = vadd.f32 %v312, %v314
  %vm317 = vcmask 261120
  %318 = vst.msk [vmem:[%s11] sm:$0xff] %vm317, %v315
  %319 = vst.msk [vmem:[%s11 + $0x8] sm:$0xff] %vm317, %v316
  %v320 = vld [vmem:[%s5] sm:$0xf]
  %v321 = vld [vmem:[%s6] sm:$0xff]
  %323 = vset.pattern.permute.xlu0 0
  %324 = vperm.xlu0 %323, %v321
  %v325 = vpop.permute.xlu0 %324
  %v328 = vsel %vm136, %v320, 0
  %330 = vmatprep.subr.bf16.mxu0 0
  %331 = vmatpush1.bf16.msra.mxu0 %v187
  %332 = vmatprep.subr.bf16.mxu0 0
  %333 = vmatpush1.bf16.msra.mxu0 0
  %334 = vmatprep.subr.bf16.mxu0 0
  %335 = vmatpush1.bf16.msra.mxu0 0
  %336 = vmatprep.subr.bf16.mxu0 0
  %337 = vmatpush1.bf16.msra.mxu0 0
  %338 = vmatprep.subr.bf16.mxu0 0
  %339 = vmatpush1.bf16.msra.mxu0 0
  %340 = vmatprep.subr.bf16.mxu0 0
  %341 = vmatpush1.bf16.msra.mxu0 0
  %342 = vmatprep.subr.bf16.mxu0 0
  %343 = vmatpush1.bf16.msra.mxu0 0
  %344 = vmatprep.subr.bf16.mxu0 0
  %345 = vmatpush1.bf16.msra.mxu0 0
  %346 = vmatprep.subr.bf16.mxu0 0
  %347 = vmatpush1.bf16.msra.mxu0 0
  %348 = vmatprep.subr.bf16.mxu0 0
  %349 = vmatpush1.bf16.msra.mxu0 0
  %350 = vmatprep.subr.bf16.mxu0 0
  %351 = vmatpush1.bf16.msra.mxu0 0
  %352 = vmatprep.subr.bf16.mxu0 0
  %353 = vmatpush1.bf16.msra.mxu0 0
  %354 = vmatprep.subr.bf16.mxu0 0
  %355 = vmatpush1.bf16.msra.mxu0 0
  %356 = vmatprep.subr.bf16.mxu0 0
  %357 = vmatpush1.bf16.msra.mxu0 0
  %358 = vmatprep.subr.bf16.mxu0 0
  %359 = vmatpush1.bf16.msra.mxu0 0
  %360 = vmatprep.subr.bf16.mxu0 0
  %361 = vmatpush1.bf16.msra.mxu0 0
  %362 = vmatprep.mubr.bf16.mxu0 0
  %363 = vmatmul.mubr.bf16.gmra.mrb[0].mxu0 %v328
  %v364 = vpop.f32.mrb[0].mxu0
  %v365 = vadd.f32 %v325, %v364
  %v366 = vpop.f32.mrb[0].mxu0
  %v367 = vpop.f32.mrb[0].mxu0
  %v368 = vpop.f32.mrb[0].mxu0
  %369 = vdwg.mxu0
  %v370 = vmul.f32 %v365, 0.1
  %v371 = vmax.f32 %v365, %v370
  %v372 = vpack.c.bf16 %v371, %v371
  %vm373 = vcmask 257024
  %374 = vst.msk [vmem:[%s12] sm:$0xf] %vm373, %v372
  // Predicated region
  $region46: #{_lambda_.6} parent=0 // pred_check
    _
  $region47: #{_lambda_.6} parent=0 // pred_check_branch
    %376 = sbr.rel (0) target = $region49
  $region48: #{_lambda_.6} parent=0 // pred_region
    _
  $region49: #{_lambda_.6} parent=0 // pred_fallthru
    _
  // Predicated region
  $region50: #{_lambda_.6} parent=0 // pred_check
    _
  $region51: #{_lambda_.6} parent=0 // pred_check_branch
    %378 = sbr.rel (0) target = $region53
  $region52: #{_lambda_.6} parent=0 // pred_region
    _
  $region53: #{_lambda_.6} parent=0 // pred_fallthru
    _
  // Predicated region
  $region54: #{_lambda_.6} parent=0 // pred_check
    _
  $region55: #{_lambda_.6} parent=0 // pred_check_branch
    %380 = sbr.rel (0) target = $region57
  $region56: #{_lambda_.6} parent=0 // pred_region
    _
  $region57: #{_lambda_.6} parent=0 // pred_fallthru
    _
  // Predicated region
  $region58: #{_lambda_.6} parent=0 // pred_check
    _
  $region59: #{_lambda_.6} parent=0 // pred_check_branch
    %382 = sbr.rel (0) target = $region61
  $region60: #{_lambda_.6} parent=0 // pred_region
    _
  $region61: #{_lambda_.6} parent=0 // pred_fallthru
    _

// kernel: _lambda_.7
$region0: #{_lambda_.7}
  #allocation0 [shape = 'u32[]', space=smem, size = 0x4, offset = 0x4, fixed_abs, tag = 'smem constant byte address 0x4 - core index']
  #allocation1 [shape = 'u32[144,128]{1,0:T(1,128)}', space=vmem, size = 0x12000, scoped, tag = 'internal scratch']
  %s0 = inlined_call_operand.vmem [shape: bf16[8,128], index: 0, kind: input, shape index: {}]
  %s1 = inlined_call_operand.vmem [shape: bf16[16,128], index: 1, kind: input, shape index: {}]
  %s2 = inlined_call_operand.vmem [shape: bf16[9,16,8], index: 2, kind: input, shape index: {}]
  %s3 = inlined_call_operand.vmem [shape: bf16[9,16,16], index: 3, kind: input, shape index: {}]
  %s4 = inlined_call_operand.vmem [shape: f32[16,1], index: 4, kind: input, shape index: {}]
  %s5 = inlined_call_operand.vmem [shape: bf16[16,16], index: 5, kind: input, shape index: {}]
  %s6 = inlined_call_operand.vmem [shape: f32[16,1], index: 6, kind: input, shape index: {}]
  %s7 = inlined_call_operand.vmem [shape: f32[9,1,128], index: 7, kind: input, shape index: {}]
  %s8 = inlined_call_operand.vmem [shape: f32[16,1], index: 8, kind: input, shape index: {}]
  %s9 = inlined_call_operand.vmem [shape: f32[16,1], index: 9, kind: input, shape index: {}]
  %s10 = inlined_call_operand.vmem [shape: f32[16,1], index: 10, kind: input, shape index: {}]
  %s11 = inlined_call_operand.vmem [shape: f32[16,128], index: 11, kind: input, shape index: {}]
  %s12 = inlined_call_operand.vmem [shape: f32[16,128], index: 12, kind: output, shape index: {}]
  %s13 = sld [smem:[#allocation0]]
  $region58: #{_lambda_.7} parent=0
    _
  %s15 = ssub.s32 1, %s13
  %s16 = scalar_select 0, %s15, %s13
  // Predicated region
  $region2: #{_lambda_.7} parent=0 // pred_check
    _
  $region3: #{_lambda_.7} parent=0 // pred_check_branch
    %18 = sbr.rel (0) target = $region5
  $region4: #{_lambda_.7} parent=0 // pred_region
    _
  $region5: #{_lambda_.7} parent=0 // pred_fallthru
    _
  // Predicated region
  $region6: #{_lambda_.7} parent=0 // pred_check
    _
  $region7: #{_lambda_.7} parent=0 // pred_check_branch
    %20 = sbr.rel (0) target = $region9
  $region8: #{_lambda_.7} parent=0 // pred_region
    _
  $region9: #{_lambda_.7} parent=0 // pred_fallthru
    _
  // Predicated region
  $region10: #{_lambda_.7} parent=0 // pred_check
    _
  $region11: #{_lambda_.7} parent=0 // pred_check_branch
    %22 = sbr.rel (0) target = $region13
  $region12: #{_lambda_.7} parent=0 // pred_region
    _
  $region13: #{_lambda_.7} parent=0 // pred_fallthru
    _
  // Predicated region
  $region14: #{_lambda_.7} parent=0 // pred_check
    _
  $region15: #{_lambda_.7} parent=0 // pred_check_branch
    %24 = sbr.rel (0) target = $region17
  $region16: #{_lambda_.7} parent=0 // pred_region
    _
  $region17: #{_lambda_.7} parent=0 // pred_fallthru
    _
  // Predicated region
  $region18: #{_lambda_.7} parent=0 // pred_check
    _
  $region19: #{_lambda_.7} parent=0 // pred_check_branch
    %26 = sbr.rel (0) target = $region21
  $region20: #{_lambda_.7} parent=0 // pred_region
    _
  $region21: #{_lambda_.7} parent=0 // pred_fallthru
    _
  // Predicated region
  $region22: #{_lambda_.7} parent=0 // pred_check
    _
  $region23: #{_lambda_.7} parent=0 // pred_check_branch
    %28 = sbr.rel (0) target = $region25
  $region24: #{_lambda_.7} parent=0 // pred_region
    _
  $region25: #{_lambda_.7} parent=0 // pred_fallthru
    _
  // Predicated region
  $region26: #{_lambda_.7} parent=0 // pred_check
    _
  $region27: #{_lambda_.7} parent=0 // pred_check_branch
    %30 = sbr.rel (0) target = $region29
  $region28: #{_lambda_.7} parent=0 // pred_region
    _
  $region29: #{_lambda_.7} parent=0 // pred_fallthru
    _
  // Predicated region
  $region30: #{_lambda_.7} parent=0 // pred_check
    _
  $region31: #{_lambda_.7} parent=0 // pred_check_branch
    %32 = sbr.rel (0) target = $region33
  $region32: #{_lambda_.7} parent=0 // pred_region
    _
  $region33: #{_lambda_.7} parent=0 // pred_fallthru
    _
  // Predicated region
  $region34: #{_lambda_.7} parent=0 // pred_check
    _
  $region35: #{_lambda_.7} parent=0 // pred_check_branch
    %34 = sbr.rel (0) target = $region37
  $region36: #{_lambda_.7} parent=0 // pred_region
    _
  $region37: #{_lambda_.7} parent=0 // pred_fallthru
    _
  // Predicated region
  $region38: #{_lambda_.7} parent=0 // pred_check
    _
  $region39: #{_lambda_.7} parent=0 // pred_check_branch
    %36 = sbr.rel (0) target = $region41
  $region40: #{_lambda_.7} parent=0 // pred_region
    _
  $region41: #{_lambda_.7} parent=0 // pred_fallthru
    _
  // Predicated region
  $region42: #{_lambda_.7} parent=0 // pred_check
    _
  $region43: #{_lambda_.7} parent=0 // pred_check_branch
    %38 = sbr.rel (0) target = $region45
  $region44: #{_lambda_.7} parent=0 // pred_region
    _
  $region45: #{_lambda_.7} parent=0 // pred_fallthru
    _
  // Predicated region
  $region46: #{_lambda_.7} parent=0 // pred_check
    _
  $region47: #{_lambda_.7} parent=0 // pred_check_branch
    %40 = sbr.rel (0) target = $region49
  $region48: #{_lambda_.7} parent=0 // pred_region
    _
  $region49: #{_lambda_.7} parent=0 // pred_fallthru
    _
  %v42 = vld [vmem:[%s0] sm:$0xf]
  %v43 = vunpack.c.l.bf16 %v42
  %v44 = vld [vmem:[%s1] sm:$0xf]
  %v45 = vld [vmem:[%s1 + $0x4] sm:$0xf]
  %v46 = vunpack.c.l.bf16 %v44
  %v47 = vunpack.c.l.bf16 %v45
  %v48 = vld [vmem:[%s7] sm:$0x1]
  %49 = vrot.lane.b32.xlu0 %v43, 9
  %v50 = vpop.permute.xlu0 %49
  %v52 = vlaneseq
  %v53 = vshrl.u32 %v52, 7
  %v54 = vsub.s32 0, %v53
  %v55 = vrot.slane %v48, %v54
  %v57 = vmul.f32 %v50, %v55
  %v58 = vld [vmem:[%s2] sm:$0xf]
  %v59 = vld [vmem:[%s2 + $0x4] sm:$0xf]
  %v60 = vpack.c.bf16 %v57, %v57
  %s61 = scalar_lea.vmem %s7, 1
  %v62 = vld [vmem:[%s61] sm:$0x1]
  %63 = vrot.lane.b32.xlu0 %v43, 8
  %v64 = vpop.permute.xlu0 %63
  %v66 = vlaneseq
  %v67 = vshrl.u32 %v66, 7
  %v68 = vsub.s32 0, %v67
  %v69 = vrot.slane %v62, %v68
  %v71 = vmul.f32 %v64, %v69
  %s72 = scalar_lea.vmem %s2, 8
  %v73 = vld [vmem:[%s72] sm:$0xf]
  %v74 = vld [vmem:[%s72 + $0x4] sm:$0xf]
  %v75 = vpack.c.bf16 %v71, %v71
  %v78 = vunpack.c.l.b16 %v73
  %v79 = vunpack.c.l.b16 %v74
  %v80 = vpack.c.b16 %v79, %v78
  %vm81 = vcmask 64512
  %v83 = vsel %vm81, %v80, 0
  %vm85 = vcmask 1043456
  %v87 = vsel %vm85, %v75, 0
  %89 = vmatprep.subr.bf16.mxu0 0
  %90 = vmatpush1.bf16.msra.mxu0 %v87
  %91 = vmatprep.subr.bf16.mxu0 0
  %92 = vmatpush1.bf16.msra.mxu0 0
  %93 = vmatprep.subr.bf16.mxu0 0
  %94 = vmatpush1.bf16.msra.mxu0 0
  %95 = vmatprep.subr.bf16.mxu0 0
  %96 = vmatpush1.bf16.msra.mxu0 0
  %97 = vmatprep.subr.bf16.mxu0 0
  %98 = vmatpush1.bf16.msra.mxu0 0
  %99 = vmatprep.subr.bf16.mxu0 0
  %100 = vmatpush1.bf16.msra.mxu0 0
  %101 = vmatprep.subr.bf16.mxu0 0
  %102 = vmatpush1.bf16.msra.mxu0 0
  %103 = vmatprep.subr.bf16.mxu0 0
  %104 = vmatpush1.bf16.msra.mxu0 0
  %105 = vmatprep.subr.bf16.mxu0 0
  %106 = vmatpush1.bf16.msra.mxu0 0
  %107 = vmatprep.subr.bf16.mxu0 0
  %108 = vmatpush1.bf16.msra.mxu0 0
  %109 = vmatprep.subr.bf16.mxu0 0
  %110 = vmatpush1.bf16.msra.mxu0 0
  %111 = vmatprep.subr.bf16.mxu0 0
  %112 = vmatpush1.bf16.msra.mxu0 0
  %113 = vmatprep.subr.bf16.mxu0 0
  %114 = vmatpush1.bf16.msra.mxu0 0
  %115 = vmatprep.subr.bf16.mxu0 0
  %116 = vmatpush1.bf16.msra.mxu0 0
  %117 = vmatprep.subr.bf16.mxu0 0
  %118 = vmatpush1.bf16.msra.mxu0 0
  %119 = vmatprep.subr.bf16.mxu0 0
  %120 = vmatpush1.bf16.msra.mxu0 0
  %121 = vmatprep.mubr.bf16.mxu0 0
  %122 = vmatmul.mubr.bf16.gmra.mrb[0].mxu0 %v83
  %v123 = vpop.f32.mrb[0].mxu0
  %v124 = vadd.f32 0.0, %v123
  %v125 = vpop.f32.mrb[0].mxu0
  %v126 = vpop.f32.mrb[0].mxu0
  %v127 = vadd.f32 0.0, %v126
  %v128 = vpop.f32.mrb[0].mxu0
  %129 = vdwg.mxu0
  %v132 = vunpack.c.l.b16 %v58
  %v133 = vunpack.c.l.b16 %v59
  %v134 = vpack.c.b16 %v133, %v132
  %v136 = vsel %vm81, %v134, 0
  %v139 = vsel %vm85, %v60, 0
  %141 = vmatprep.subr.bf16.mxu0 0
  %142 = vmatpush1.bf16.msra.mxu0 %v139
  %143 = vmatprep.subr.bf16.mxu0 0
  %144 = vmatpush1.bf16.msra.mxu0 0
  %145 = vmatprep.subr.bf16.mxu0 0
  %146 = vmatpush1.bf16.msra.mxu0 0
  %147 = vmatprep.subr.bf16.mxu0 0
  %148 = vmatpush1.bf16.msra.mxu0 0
  %149 = vmatprep.subr.bf16.mxu0 0
  %150 = vmatpush1.bf16.msra.mxu0 0
  %151 = vmatprep.subr.bf16.mxu0 0
  %152 = vmatpush1.bf16.msra.mxu0 0
  %153 = vmatprep.subr.bf16.mxu0 0
  %154 = vmatpush1.bf16.msra.mxu0 0
  %155 = vmatprep.subr.bf16.mxu0 0
  %156 = vmatpush1.bf16.msra.mxu0 0
  %157 = vmatprep.subr.bf16.mxu0 0
  %158 = vmatpush1.bf16.msra.mxu0 0
  %159 = vmatprep.subr.bf16.mxu0 0
  %160 = vmatpush1.bf16.msra.mxu0 0
  %161 = vmatprep.subr.bf16.mxu0 0
  %162 = vmatpush1.bf16.msra.mxu0 0
  %163 = vmatprep.subr.bf16.mxu0 0
  %164 = vmatpush1.bf16.msra.mxu0 0
  %165 = vmatprep.subr.bf16.mxu0 0
  %166 = vmatpush1.bf16.msra.mxu0 0
  %167 = vmatprep.subr.bf16.mxu0 0
  %168 = vmatpush1.bf16.msra.mxu0 0
  %169 = vmatprep.subr.bf16.mxu0 0
  %170 = vmatpush1.bf16.msra.mxu0 0
  %171 = vmatprep.subr.bf16.mxu0 0
  %172 = vmatpush1.bf16.msra.mxu0 0
  %173 = vmatprep.mubr.bf16.mxu0 0
  %174 = vmatmul.mubr.bf16.gmra.mrb[0].mxu0 %v136
  %v175 = vpop.f32.mrb[0].mxu0
  %v176 = vadd.f32 %v124, %v175
  %v177 = vpop.f32.mrb[0].mxu0
  %v178 = vpop.f32.mrb[0].mxu0
  %v179 = vadd.f32 %v127, %v178
  %v180 = vpop.f32.mrb[0].mxu0
  %181 = vdwg.mxu0
  %s182 = scalar_lea.vmem %s7, 2
  %v183 = vld [vmem:[%s182] sm:$0x1]
  %184 = vrot.lane.b32.xlu0 %v43, 7
  %v185 = vpop.permute.xlu0 %184
  %v187 = vlaneseq
  %v188 = vshrl.u32 %v187, 7
  %v189 = vsub.s32 0, %v188
  %v190 = vrot.slane %v183, %v189
  %v192 = vmul.f32 %v185, %v190
  %s193 = scalar_lea.vmem %s2, 16
  %v194 = vld [vmem:[%s193] sm:$0xf]
  %v195 = vld [vmem:[%s193 + $0x4] sm:$0xf]
  %v196 = vpack.c.bf16 %v192, %v192
  %v199 = vunpack.c.l.b16 %v194
  %v200 = vunpack.c.l.b16 %v195
  %v201 = vpack.c.b16 %v200, %v199
  %v203 = vsel %vm81, %v201, 0
  %v206 = vsel %vm85, %v196, 0
  %208 = vmatprep.subr.bf16.mxu0 0
  %209 = vmatpush1.bf16.msra.mxu0 %v206
  %210 = vmatprep.subr.bf16.mxu0 0
  %211 = vmatpush1.bf16.msra.mxu0 0
  %212 = vmatprep.subr.bf16.mxu0 0
  %213 = vmatpush1.bf16.msra.mxu0 0
  %214 = vmatprep.subr.bf16.mxu0 0
  %215 = vmatpush1.bf16.msra.mxu0 0
  %216 = vmatprep.subr.bf16.mxu0 0
  %217 = vmatpush1.bf16.msra.mxu0 0
  %218 = vmatprep.subr.bf16.mxu0 0
  %219 = vmatpush1.bf16.msra.mxu0 0
  %220 = vmatprep.subr.bf16.mxu0 0
  %221 = vmatpush1.bf16.msra.mxu0 0
  %222 = vmatprep.subr.bf16.mxu0 0
  %223 = vmatpush1.bf16.msra.mxu0 0
  %224 = vmatprep.subr.bf16.mxu0 0
  %225 = vmatpush1.bf16.msra.mxu0 0
  %226 = vmatprep.subr.bf16.mxu0 0
  %227 = vmatpush1.bf16.msra.mxu0 0
  %228 = vmatprep.subr.bf16.mxu0 0
  %229 = vmatpush1.bf16.msra.mxu0 0
  %230 = vmatprep.subr.bf16.mxu0 0
  %231 = vmatpush1.bf16.msra.mxu0 0
  %232 = vmatprep.subr.bf16.mxu0 0
  %233 = vmatpush1.bf16.msra.mxu0 0
  %234 = vmatprep.subr.bf16.mxu0 0
  %235 = vmatpush1.bf16.msra.mxu0 0
  %236 = vmatprep.subr.bf16.mxu0 0
  %237 = vmatpush1.bf16.msra.mxu0 0
  %238 = vmatprep.subr.bf16.mxu0 0
  %239 = vmatpush1.bf16.msra.mxu0 0
  %240 = vmatprep.mubr.bf16.mxu0 0
  %241 = vmatmul.mubr.bf16.gmra.mrb[0].mxu0 %v203
  %v242 = vpop.f32.mrb[0].mxu0
  %v243 = vadd.f32 0.0, %v242
  %v244 = vpop.f32.mrb[0].mxu0
  %v245 = vpop.f32.mrb[0].mxu0
  %v246 = vadd.f32 0.0, %v245
  %v247 = vpop.f32.mrb[0].mxu0
  %248 = vdwg.mxu0
  %v249 = vadd.f32 %v176, %v243
  %v250 = vadd.f32 %v179, %v246
  %s251 = scalar_lea.vmem %s7, 3
  %v252 = vld [vmem:[%s251] sm:$0x1]
  %253 = vrot.lane.b32.xlu0 %v43, 1
  %v254 = vpop.permute.xlu0 %253
  %v256 = vlaneseq
  %v257 = vshrl.u32 %v256, 7
  %v258 = vsub.s32 0, %v257
  %v259 = vrot.slane %v252, %v258
  %v261 = vmul.f32 %v254, %v259
  %s262 = scalar_lea.vmem %s2, 24
  %v263 = vld [vmem:[%s262] sm:$0xf]
  %v264 = vld [vmem:[%s262 + $0x4] sm:$0xf]
  %v265 = vpack.c.bf16 %v261, %v261
  %v268 = vunpack.c.l.b16 %v263
  %v269 = vunpack.c.l.b16 %v264
  %v270 = vpack.c.b16 %v269, %v268
  %v272 = vsel %vm81, %v270, 0
  %v275 = vsel %vm85, %v265, 0
  %277 = vmatprep.subr.bf16.mxu0 0
  %278 = vmatpush1.bf16.msra.mxu0 %v275
  %279 = vmatprep.subr.bf16.mxu0 0
  %280 = vmatpush1.bf16.msra.mxu0 0
  %281 = vmatprep.subr.bf16.mxu0 0
  %282 = vmatpush1.bf16.msra.mxu0 0
  %283 = vmatprep.subr.bf16.mxu0 0
  %284 = vmatpush1.bf16.msra.mxu0 0
  %285 = vmatprep.subr.bf16.mxu0 0
  %286 = vmatpush1.bf16.msra.mxu0 0
  %287 = vmatprep.subr.bf16.mxu0 0
  %288 = vmatpush1.bf16.msra.mxu0 0
  %289 = vmatprep.subr.bf16.mxu0 0
  %290 = vmatpush1.bf16.msra.mxu0 0
  %291 = vmatprep.subr.bf16.mxu0 0
  %292 = vmatpush1.bf16.msra.mxu0 0
  %293 = vmatprep.subr.bf16.mxu0 0
  %294 = vmatpush1.bf16.msra.mxu0 0
  %295 = vmatprep.subr.bf16.mxu0 0
  %296 = vmatpush1.bf16.msra.mxu0 0
  %297 = vmatprep.subr.bf16.mxu0 0
  %298 = vmatpush1.bf16.msra.mxu0 0
  %299 = vmatprep.subr.bf16.mxu0 0
  %300 = vmatpush1.bf16.msra.mxu0 0
  %301 = vmatprep.subr.bf16.mxu0 0
  %302 = vmatpush1.bf16.msra.mxu0 0
  %303 = vmatprep.subr.bf16.mxu0 0
  %304 = vmatpush1.bf16.msra.mxu0 0
  %305 = vmatprep.subr.bf16.mxu0 0
  %306 = vmatpush1.bf16.msra.mxu0 0
  %307 = vmatprep.subr.bf16.mxu0 0
  %308 = vmatpush1.bf16.msra.mxu0 0
  %309 = vmatprep.mubr.bf16.mxu0 0
  %310 = vmatmul.mubr.bf16.gmra.mrb[0].mxu0 %v272
  %v311 = vpop.f32.mrb[0].mxu0
  %v312 = vadd.f32 0.0, %v311
  %v313 = vpop.f32.mrb[0].mxu0
  %v314 = vpop.f32.mrb[0].mxu0
  %v315 = vadd.f32 0.0, %v314
  %v316 = vpop.f32.mrb[0].mxu0
  %317 = vdwg.mxu0
  %v318 = vadd.f32 %v249, %v312
  %v319 = vadd.f32 %v250, %v315
  %s320 = scalar_lea.vmem %s2, 32
  %v321 = vld [vmem:[%s320] sm:$0xf]
  %v322 = vld [vmem:[%s320 + $0x4] sm:$0xf]
  %v325 = vunpack.c.l.b16 %v321
  %v326 = vunpack.c.l.b16 %v322
  %v327 = vpack.c.b16 %v326, %v325
  %v329 = vsel %vm81, %v327, 0
  %v332 = vsel %vm85, %v42, 0
  %334 = vmatprep.subr.bf16.mxu0 0
  %335 = vmatpush1.bf16.msra.mxu0 %v332
  %336 = vmatprep.subr.bf16.mxu0 0
  %337 = vmatpush1.bf16.msra.mxu0 0
  %338 = vmatprep.subr.bf16.mxu0 0
  %339 = vmatpush1.bf16.msra.mxu0 0
  %340 = vmatprep.subr.bf16.mxu0 0
  %341 = vmatpush1.bf16.msra.mxu0 0
  %342 = vmatprep.subr.bf16.mxu0 0
  %343 = vmatpush1.bf16.msra.mxu0 0
  %344 = vmatprep.subr.bf16.mxu0 0
  %345 = vmatpush1.bf16.msra.mxu0 0
  %346 = vmatprep.subr.bf16.mxu0 0
  %347 = vmatpush1.bf16.msra.mxu0 0
  %348 = vmatprep.subr.bf16.mxu0 0
  %349 = vmatpush1.bf16.msra.mxu0 0
  %350 = vmatprep.subr.bf16.mxu0 0
  %351 = vmatpush1.bf16.msra.mxu0 0
  %352 = vmatprep.subr.bf16.mxu0 0
  %353 = vmatpush1.bf16.msra.mxu0 0
  %354 = vmatprep.subr.bf16.mxu0 0
  %355 = vmatpush1.bf16.msra.mxu0 0
  %356 = vmatprep.subr.bf16.mxu0 0
  %357 = vmatpush1.bf16.msra.mxu0 0
  %358 = vmatprep.subr.bf16.mxu0 0
  %359 = vmatpush1.bf16.msra.mxu0 0
  %360 = vmatprep.subr.bf16.mxu0 0
  %361 = vmatpush1.bf16.msra.mxu0 0
  %362 = vmatprep.subr.bf16.mxu0 0
  %363 = vmatpush1.bf16.msra.mxu0 0
  %364 = vmatprep.subr.bf16.mxu0 0
  %365 = vmatpush1.bf16.msra.mxu0 0
  %366 = vmatprep.mubr.bf16.mxu0 0
  %367 = vmatmul.mubr.bf16.gmra.mrb[0].mxu0 %v329
  %v368 = vpop.f32.mrb[0].mxu0
  %v369 = vadd.f32 0.0, %v368
  %v370 = vpop.f32.mrb[0].mxu0
  %v371 = vpop.f32.mrb[0].mxu0
  %v372 = vadd.f32 0.0, %v371
  %v373 = vpop.f32.mrb[0].mxu0
  %374 = vdwg.mxu0
  %v375 = vadd.f32 %v318, %v369
  %v376 = vadd.f32 %v319, %v372
  %s377 = scalar_lea.vmem %s7, 5
  %v378 = vld [vmem:[%s377] sm:$0x1]
  %379 = vrot.lane.b32.xlu0 %v43, 127
  %v380 = vpop.permute.xlu0 %379
  %v382 = vlaneseq
  %v383 = vshrl.u32 %v382, 7
  %v384 = vsub.s32 0, %v383
  %v385 = vrot.slane %v378, %v384
  %v387 = vmul.f32 %v380, %v385
  %s388 = scalar_lea.vmem %s2, 40
  %v389 = vld [vmem:[%s388] sm:$0xf]
  %v390 = vld [vmem:[%s388 + $0x4] sm:$0xf]
  %v391 = vpack.c.bf16 %v387, %v387
  %v394 = vunpack.c.l.b16 %v389
  %v395 = vunpack.c.l.b16 %v390
  %v396 = vpack.c.b16 %v395, %v394
  %v398 = vsel %vm81, %v396, 0
  %v401 = vsel %vm85, %v391, 0
  %403 = vmatprep.subr.bf16.mxu0 0
  %404 = vmatpush1.bf16.msra.mxu0 %v401
  %405 = vmatprep.subr.bf16.mxu0 0
  %406 = vmatpush1.bf16.msra.mxu0 0
  %407 = vmatprep.subr.bf16.mxu0 0
  %408 = vmatpush1.bf16.msra.mxu0 0
  %409 = vmatprep.subr.bf16.mxu0 0
  %410 = vmatpush1.bf16.msra.mxu0 0
  %411 = vmatprep.subr.bf16.mxu0 0
  %412 = vmatpush1.bf16.msra.mxu0 0
  %413 = vmatprep.subr.bf16.mxu0 0
  %414 = vmatpush1.bf16.msra.mxu0 0
  %415 = vmatprep.subr.bf16.mxu0 0
  %416 = vmatpush1.bf16.msra.mxu0 0
  %417 = vmatprep.subr.bf16.mxu0 0
  %418 = vmatpush1.bf16.msra.mxu0 0
  %419 = vmatprep.subr.bf16.mxu0 0
  %420 = vmatpush1.bf16.msra.mxu0 0
  %421 = vmatprep.subr.bf16.mxu0 0
  %422 = vmatpush1.bf16.msra.mxu0 0
  %423 = vmatprep.subr.bf16.mxu0 0
  %424 = vmatpush1.bf16.msra.mxu0 0
  %425 = vmatprep.subr.bf16.mxu0 0
  %426 = vmatpush1.bf16.msra.mxu0 0
  %427 = vmatprep.subr.bf16.mxu0 0
  %428 = vmatpush1.bf16.msra.mxu0 0
  %429 = vmatprep.subr.bf16.mxu0 0
  %430 = vmatpush1.bf16.msra.mxu0 0
  %431 = vmatprep.subr.bf16.mxu0 0
  %432 = vmatpush1.bf16.msra.mxu0 0
  %433 = vmatprep.subr.bf16.mxu0 0
  %434 = vmatpush1.bf16.msra.mxu0 0
  %435 = vmatprep.mubr.bf16.mxu0 0
  %436 = vmatmul.mubr.bf16.gmra.mrb[0].mxu0 %v398
  %v437 = vpop.f32.mrb[0].mxu0
  %v438 = vadd.f32 0.0, %v437
  %v439 = vpop.f32.mrb[0].mxu0
  %v440 = vpop.f32.mrb[0].mxu0
  %v441 = vadd.f32 0.0, %v440
  %v442 = vpop.f32.mrb[0].mxu0
  %443 = vdwg.mxu0
  %v444 = vadd.f32 %v375, %v438
  %v445 = vadd.f32 %v376, %v441
  %s446 = scalar_lea.vmem %s7, 6
  %v447 = vld [vmem:[%s446] sm:$0x1]
  %448 = vrot.lane.b32.xlu0 %v43, 121
  %v449 = vpop.permute.xlu0 %448
  %v451 = vlaneseq
  %v452 = vshrl.u32 %v451, 7
  %v453 = vsub.s32 0, %v452
  %v454 = vrot.slane %v447, %v453
  %v456 = vmul.f32 %v449, %v454
  %s457 = scalar_lea.vmem %s2, 48
  %v458 = vld [vmem:[%s457] sm:$0xf]
  %v459 = vld [vmem:[%s457 + $0x4] sm:$0xf]
  %v460 = vpack.c.bf16 %v456, %v456
  %v463 = vunpack.c.l.b16 %v458
  %v464 = vunpack.c.l.b16 %v459
  %v465 = vpack.c.b16 %v464, %v463
  %v467 = vsel %vm81, %v465, 0
  %v470 = vsel %vm85, %v460, 0
  %472 = vmatprep.subr.bf16.mxu0 0
  %473 = vmatpush1.bf16.msra.mxu0 %v470
  %474 = vmatprep.subr.bf16.mxu0 0
  %475 = vmatpush1.bf16.msra.mxu0 0
  %476 = vmatprep.subr.bf16.mxu0 0
  %477 = vmatpush1.bf16.msra.mxu0 0
  %478 = vmatprep.subr.bf16.mxu0 0
  %479 = vmatpush1.bf16.msra.mxu0 0
  %480 = vmatprep.subr.bf16.mxu0 0
  %481 = vmatpush1.bf16.msra.mxu0 0
  %482 = vmatprep.subr.bf16.mxu0 0
  %483 = vmatpush1.bf16.msra.mxu0 0
  %484 = vmatprep.subr.bf16.mxu0 0
  %485 = vmatpush1.bf16.msra.mxu0 0
  %486 = vmatprep.subr.bf16.mxu0 0
  %487 = vmatpush1.bf16.msra.mxu0 0
  %488 = vmatprep.subr.bf16.mxu0 0
  %489 = vmatpush1.bf16.msra.mxu0 0
  %490 = vmatprep.subr.bf16.mxu0 0
  %491 = vmatpush1.bf16.msra.mxu0 0
  %492 = vmatprep.subr.bf16.mxu0 0
  %493 = vmatpush1.bf16.msra.mxu0 0
  %494 = vmatprep.subr.bf16.mxu0 0
  %495 = vmatpush1.bf16.msra.mxu0 0
  %496 = vmatprep.subr.bf16.mxu0 0
  %497 = vmatpush1.bf16.msra.mxu0 0
  %498 = vmatprep.subr.bf16.mxu0 0
  %499 = vmatpush1.bf16.msra.mxu0 0
  %500 = vmatprep.subr.bf16.mxu0 0
  %501 = vmatpush1.bf16.msra.mxu0 0
  %502 = vmatprep.subr.bf16.mxu0 0
  %503 = vmatpush1.bf16.msra.mxu0 0
  %504 = vmatprep.mubr.bf16.mxu0 0
  %505 = vmatmul.mubr.bf16.gmra.mrb[0].mxu0 %v467
  %v506 = vpop.f32.mrb[0].mxu0
  %v507 = vadd.f32 0.0, %v506
  %v508 = vpop.f32.mrb[0].mxu0
  %v509 = vpop.f32.mrb[0].mxu0
  %v510 = vadd.f32 0.0, %v509
  %v511 = vpop.f32.mrb[0].mxu0
  %512 = vdwg.mxu0
  %v513 = vadd.f32 %v444, %v507
  %v514 = vadd.f32 %v445, %v510
  %s515 = scalar_lea.vmem %s7, 7
  %v516 = vld [vmem:[%s515] sm:$0x1]
  %517 = vrot.lane.b32.xlu0 %v43, 120
  %v518 = vpop.permute.xlu0 %517
  %v520 = vlaneseq
  %v521 = vshrl.u32 %v520, 7
  %v522 = vsub.s32 0, %v521
  %v523 = vrot.slane %v516, %v522
  %v525 = vmul.f32 %v518, %v523
  %s526 = scalar_lea.vmem %s2, 56
  %v527 = vld [vmem:[%s526] sm:$0xf]
  %v528 = vld [vmem:[%s526 + $0x4] sm:$0xf]
  %v529 = vpack.c.bf16 %v525, %v525
  %v532 = vunpack.c.l.b16 %v527
  %v533 = vunpack.c.l.b16 %v528
  %v534 = vpack.c.b16 %v533, %v532
  %v536 = vsel %vm81, %v534, 0
  %v539 = vsel %vm85, %v529, 0
  %541 = vmatprep.subr.bf16.mxu0 0
  %542 = vmatpush1.bf16.msra.mxu0 %v539
  %543 = vmatprep.subr.bf16.mxu0 0
  %544 = vmatpush1.bf16.msra.mxu0 0
  %545 = vmatprep.subr.bf16.mxu0 0
  %546 = vmatpush1.bf16.msra.mxu0 0
  %547 = vmatprep.subr.bf16.mxu0 0
  %548 = vmatpush1.bf16.msra.mxu0 0
  %549 = vmatprep.subr.bf16.mxu0 0
  %550 = vmatpush1.bf16.msra.mxu0 0
  %551 = vmatprep.subr.bf16.mxu0 0
  %552 = vmatpush1.bf16.msra.mxu0 0
  %553 = vmatprep.subr.bf16.mxu0 0
  %554 = vmatpush1.bf16.msra.mxu0 0
  %555 = vmatprep.subr.bf16.mxu0 0
  %556 = vmatpush1.bf16.msra.mxu0 0
  %557 = vmatprep.subr.bf16.mxu0 0
  %558 = vmatpush1.bf16.msra.mxu0 0
  %559 = vmatprep.subr.bf16.mxu0 0
  %560 = vmatpush1.bf16.msra.mxu0 0
  %561 = vmatprep.subr.bf16.mxu0 0
  %562 = vmatpush1.bf16.msra.mxu0 0
  %563 = vmatprep.subr.bf16.mxu0 0
  %564 = vmatpush1.bf16.msra.mxu0 0
  %565 = vmatprep.subr.bf16.mxu0 0
  %566 = vmatpush1.bf16.msra.mxu0 0
  %567 = vmatprep.subr.bf16.mxu0 0
  %568 = vmatpush1.bf16.msra.mxu0 0
  %569 = vmatprep.subr.bf16.mxu0 0
  %570 = vmatpush1.bf16.msra.mxu0 0
  %571 = vmatprep.subr.bf16.mxu0 0
  %572 = vmatpush1.bf16.msra.mxu0 0
  %573 = vmatprep.mubr.bf16.mxu0 0
  %574 = vmatmul.mubr.bf16.gmra.mrb[0].mxu0 %v536
  %v575 = vpop.f32.mrb[0].mxu0
  %v576 = vadd.f32 0.0, %v575
  %v577 = vpop.f32.mrb[0].mxu0
  %v578 = vpop.f32.mrb[0].mxu0
  %v579 = vadd.f32 0.0, %v578
  %v580 = vpop.f32.mrb[0].mxu0
  %581 = vdwg.mxu0
  %v582 = vadd.f32 %v513, %v576
  %v583 = vadd.f32 %v514, %v579
  %s584 = scalar_lea.vmem %s7, 8
  %v585 = vld [vmem:[%s584] sm:$0x1]
  %586 = vrot.lane.b32.xlu0 %v43, 119
  %v587 = vpop.permute.xlu0 %586
  %v589 = vlaneseq
  %v590 = vshrl.u32 %v589, 7
  %v591 = vsub.s32 0, %v590
  %v592 = vrot.slane %v585, %v591
  %v594 = vmul.f32 %v587, %v592
  %s595 = scalar_lea.vmem %s2, 64
  %v596 = vld [vmem:[%s595] sm:$0xf]
  %v597 = vld [vmem:[%s595 + $0x4] sm:$0xf]
  %v598 = vpack.c.bf16 %v594, %v594
  %v601 = vunpack.c.l.b16 %v596
  %v602 = vunpack.c.l.b16 %v597
  %v603 = vpack.c.b16 %v602, %v601
  %v605 = vsel %vm81, %v603, 0
  %v608 = vsel %vm85, %v598, 0
  %610 = vmatprep.subr.bf16.mxu0 0
  %611 = vmatpush1.bf16.msra.mxu0 %v608
  %612 = vmatprep.subr.bf16.mxu0 0
  %613 = vmatpush1.bf16.msra.mxu0 0
  %614 = vmatprep.subr.bf16.mxu0 0
  %615 = vmatpush1.bf16.msra.mxu0 0
  %616 = vmatprep.subr.bf16.mxu0 0
  %617 = vmatpush1.bf16.msra.mxu0 0
  %618 = vmatprep.subr.bf16.mxu0 0
  %619 = vmatpush1.bf16.msra.mxu0 0
  %620 = vmatprep.subr.bf16.mxu0 0
  %621 = vmatpush1.bf16.msra.mxu0 0
  %622 = vmatprep.subr.bf16.mxu0 0
  %623 = vmatpush1.bf16.msra.mxu0 0
  %624 = vmatprep.subr.bf16.mxu0 0
  %625 = vmatpush1.bf16.msra.mxu0 0
  %626 = vmatprep.subr.bf16.mxu0 0
  %627 = vmatpush1.bf16.msra.mxu0 0
  %628 = vmatprep.subr.bf16.mxu0 0
  %629 = vmatpush1.bf16.msra.mxu0 0
  %630 = vmatprep.subr.bf16.mxu0 0
  %631 = vmatpush1.bf16.msra.mxu0 0
  %632 = vmatprep.subr.bf16.mxu0 0
  %633 = vmatpush1.bf16.msra.mxu0 0
  %634 = vmatprep.subr.bf16.mxu0 0
  %635 = vmatpush1.bf16.msra.mxu0 0
  %636 = vmatprep.subr.bf16.mxu0 0
  %637 = vmatpush1.bf16.msra.mxu0 0
  %638 = vmatprep.subr.bf16.mxu0 0
  %639 = vmatpush1.bf16.msra.mxu0 0
  %640 = vmatprep.subr.bf16.mxu0 0
  %641 = vmatpush1.bf16.msra.mxu0 0
  %642 = vmatprep.mubr.bf16.mxu0 0
  %643 = vmatmul.mubr.bf16.gmra.mrb[0].mxu0 %v605
  %v644 = vpop.f32.mrb[0].mxu0
  %v645 = vadd.f32 0.0, %v644
  %v646 = vpop.f32.mrb[0].mxu0
  %v647 = vpop.f32.mrb[0].mxu0
  %v648 = vadd.f32 0.0, %v647
  %v649 = vpop.f32.mrb[0].mxu0
  %650 = vdwg.mxu0
  %v651 = vadd.f32 %v582, %v645
  %v652 = vadd.f32 %v583, %v648
  %653 = vrot.lane.b32.xlu0 %v46, 9
  %v654 = vpop.permute.xlu0 %653
  %655 = vrot.lane.b32.xlu0 %v47, 9
  %v656 = vpop.permute.xlu0 %655
  %v657 = vmul.f32 %v654, %v55
  %v658 = vmul.f32 %v656, %v55
  %v659 = vld [vmem:[%s3] sm:$0xf]
  %v660 = vld [vmem:[%s3 + $0x4] sm:$0xf]
  %v661 = vpack.c.bf16 %v658, %v657
  %662 = vrot.lane.b32.xlu0 %v46, 8
  %v663 = vpop.permute.xlu0 %662
  %664 = vrot.lane.b32.xlu0 %v47, 8
  %v665 = vpop.permute.xlu0 %664
  %v666 = vmul.f32 %v663, %v69
  %v667 = vmul.f32 %v665, %v69
  %s668 = scalar_lea.vmem %s3, 8
  %v669 = vld [vmem:[%s668] sm:$0xf]
  %v670 = vld [vmem:[%s668 + $0x4] sm:$0xf]
  %v671 = vpack.c.bf16 %v667, %v666
  %v674 = vunpack.c.l.b16 %v669
  %v675 = vunpack.c.l.b16 %v670
  %v676 = vpack.c.b16 %v675, %v674
  %vm677 = vcmask 130048
  %v679 = vsel %vm677, %v676, 0
  %681 = vmatprep.subr.bf16.mxu0 0
  %682 = vmatpush1.bf16.msra.mxu0 %v671
  %683 = vmatprep.subr.bf16.mxu0 0
  %684 = vmatpush1.bf16.msra.mxu0 0
  %685 = vmatprep.subr.bf16.mxu0 0
  %686 = vmatpush1.bf16.msra.mxu0 0
  %687 = vmatprep.subr.bf16.mxu0 0
  %688 = vmatpush1.bf16.msra.mxu0 0
  %689 = vmatprep.subr.bf16.mxu0 0
  %690 = vmatpush1.bf16.msra.mxu0 0
  %691 = vmatprep.subr.bf16.mxu0 0
  %692 = vmatpush1.bf16.msra.mxu0 0
  %693 = vmatprep.subr.bf16.mxu0 0
  %694 = vmatpush1.bf16.msra.mxu0 0
  %695 = vmatprep.subr.bf16.mxu0 0
  %696 = vmatpush1.bf16.msra.mxu0 0
  %697 = vmatprep.subr.bf16.mxu0 0
  %698 = vmatpush1.bf16.msra.mxu0 0
  %699 = vmatprep.subr.bf16.mxu0 0
  %700 = vmatpush1.bf16.msra.mxu0 0
  %701 = vmatprep.subr.bf16.mxu0 0
  %702 = vmatpush1.bf16.msra.mxu0 0
  %703 = vmatprep.subr.bf16.mxu0 0
  %704 = vmatpush1.bf16.msra.mxu0 0
  %705 = vmatprep.subr.bf16.mxu0 0
  %706 = vmatpush1.bf16.msra.mxu0 0
  %707 = vmatprep.subr.bf16.mxu0 0
  %708 = vmatpush1.bf16.msra.mxu0 0
  %709 = vmatprep.subr.bf16.mxu0 0
  %710 = vmatpush1.bf16.msra.mxu0 0
  %711 = vmatprep.subr.bf16.mxu0 0
  %712 = vmatpush1.bf16.msra.mxu0 0
  %713 = vmatprep.mubr.bf16.mxu0 0
  %714 = vmatmul.mubr.bf16.gmra.mrb[0].mxu0 %v679
  %v715 = vpop.f32.mrb[0].mxu0
  %v716 = vadd.f32 0.0, %v715
  %v717 = vpop.f32.mrb[0].mxu0
  %v718 = vpop.f32.mrb[0].mxu0
  %v719 = vadd.f32 0.0, %v718
  %v720 = vpop.f32.mrb[0].mxu0
  %721 = vdwg.mxu0
  %v724 = vunpack.c.l.b16 %v659
  %v725 = vunpack.c.l.b16 %v660
  %v726 = vpack.c.b16 %v725, %v724
  %v728 = vsel %vm677, %v726, 0
  %730 = vmatprep.subr.bf16.mxu0 0
  %731 = vmatpush1.bf16.msra.mxu0 %v661
  %732 = vmatprep.subr.bf16.mxu0 0
  %733 = vmatpush1.bf16.msra.mxu0 0
  %734 = vmatprep.subr.bf16.mxu0 0
  %735 = vmatpush1.bf16.msra.mxu0 0
  %736 = vmatprep.subr.bf16.mxu0 0
  %737 = vmatpush1.bf16.msra.mxu0 0
  %738 = vmatprep.subr.bf16.mxu0 0
  %739 = vmatpush1.bf16.msra.mxu0 0
  %740 = vmatprep.subr.bf16.mxu0 0
  %741 = vmatpush1.bf16.msra.mxu0 0
  %742 = vmatprep.subr.bf16.mxu0 0
  %743 = vmatpush1.bf16.msra.mxu0 0
  %744 = vmatprep.subr.bf16.mxu0 0
  %745 = vmatpush1.bf16.msra.mxu0 0
  %746 = vmatprep.subr.bf16.mxu0 0
  %747 = vmatpush1.bf16.msra.mxu0 0
  %748 = vmatprep.subr.bf16.mxu0 0
  %749 = vmatpush1.bf16.msra.mxu0 0
  %750 = vmatprep.subr.bf16.mxu0 0
  %751 = vmatpush1.bf16.msra.mxu0 0
  %752 = vmatprep.subr.bf16.mxu0 0
  %753 = vmatpush1.bf16.msra.mxu0 0
  %754 = vmatprep.subr.bf16.mxu0 0
  %755 = vmatpush1.bf16.msra.mxu0 0
  %756 = vmatprep.subr.bf16.mxu0 0
  %757 = vmatpush1.bf16.msra.mxu0 0
  %758 = vmatprep.subr.bf16.mxu0 0
  %759 = vmatpush1.bf16.msra.mxu0 0
  %760 = vmatprep.subr.bf16.mxu0 0
  %761 = vmatpush1.bf16.msra.mxu0 0
  %762 = vmatprep.mubr.bf16.mxu0 0
  %763 = vmatmul.mubr.bf16.gmra.mrb[0].mxu0 %v728
  %v764 = vpop.f32.mrb[0].mxu0
  %v765 = vadd.f32 %v716, %v764
  %v766 = vpop.f32.mrb[0].mxu0
  %v767 = vpop.f32.mrb[0].mxu0
  %v768 = vadd.f32 %v719, %v767
  %v769 = vpop.f32.mrb[0].mxu0
  %770 = vdwg.mxu0
  %771 = vrot.lane.b32.xlu0 %v46, 7
  %v772 = vpop.permute.xlu0 %771
  %773 = vrot.lane.b32.xlu0 %v47, 7
  %v774 = vpop.permute.xlu0 %773
  %v775 = vmul.f32 %v772, %v190
  %v776 = vmul.f32 %v774, %v190
  %s777 = scalar_lea.vmem %s3, 16
  %v778 = vld [vmem:[%s777] sm:$0xf]
  %v779 = vld [vmem:[%s777 + $0x4] sm:$0xf]
  %v780 = vpack.c.bf16 %v776, %v775
  %v783 = vunpack.c.l.b16 %v778
  %v784 = vunpack.c.l.b16 %v779
  %v785 = vpack.c.b16 %v784, %v783
  %v787 = vsel %vm677, %v785, 0
  %789 = vmatprep.subr.bf16.mxu0 0
  %790 = vmatpush1.bf16.msra.mxu0 %v780
  %791 = vmatprep.subr.bf16.mxu0 0
  %792 = vmatpush1.bf16.msra.mxu0 0
  %793 = vmatprep.subr.bf16.mxu0 0
  %794 = vmatpush1.bf16.msra.mxu0 0
  %795 = vmatprep.subr.bf16.mxu0 0
  %796 = vmatpush1.bf16.msra.mxu0 0
  %797 = vmatprep.subr.bf16.mxu0 0
  %798 = vmatpush1.bf16.msra.mxu0 0
  %799 = vmatprep.subr.bf16.mxu0 0
  %800 = vmatpush1.bf16.msra.mxu0 0
  %801 = vmatprep.subr.bf16.mxu0 0
  %802 = vmatpush1.bf16.msra.mxu0 0
  %803 = vmatprep.subr.bf16.mxu0 0
  %804 = vmatpush1.bf16.msra.mxu0 0
  %805 = vmatprep.subr.bf16.mxu0 0
  %806 = vmatpush1.bf16.msra.mxu0 0
  %807 = vmatprep.subr.bf16.mxu0 0
  %808 = vmatpush1.bf16.msra.mxu0 0
  %809 = vmatprep.subr.bf16.mxu0 0
  %810 = vmatpush1.bf16.msra.mxu0 0
  %811 = vmatprep.subr.bf16.mxu0 0
  %812 = vmatpush1.bf16.msra.mxu0 0
  %813 = vmatprep.subr.bf16.mxu0 0
  %814 = vmatpush1.bf16.msra.mxu0 0
  %815 = vmatprep.subr.bf16.mxu0 0
  %816 = vmatpush1.bf16.msra.mxu0 0
  %817 = vmatprep.subr.bf16.mxu0 0
  %818 = vmatpush1.bf16.msra.mxu0 0
  %819 = vmatprep.subr.bf16.mxu0 0
  %820 = vmatpush1.bf16.msra.mxu0 0
  %821 = vmatprep.mubr.bf16.mxu0 0
  %822 = vmatmul.mubr.bf16.gmra.mrb[0].mxu0 %v787
  %v823 = vpop.f32.mrb[0].mxu0
  %v824 = vadd.f32 0.0, %v823
  %v825 = vpop.f32.mrb[0].mxu0
  %v826 = vpop.f32.mrb[0].mxu0
  %v827 = vadd.f32 0.0, %v826
  %v828 = vpop.f32.mrb[0].mxu0
  %829 = vdwg.mxu0
  %v830 = vadd.f32 %v765, %v824
  %v831 = vadd.f32 %v768, %v827
  %832 = vrot.lane.b32.xlu0 %v46, 1
  %v833 = vpop.permute.xlu0 %832
  %834 = vrot.lane.b32.xlu0 %v47, 1
  %v835 = vpop.permute.xlu0 %834
  %v836 = vmul.f32 %v833, %v259
  %v837 = vmul.f32 %v835, %v259
  %s838 = scalar_lea.vmem %s3, 24
  %v839 = vld [vmem:[%s838] sm:$0xf]
  %v840 = vld [vmem:[%s838 + $0x4] sm:$0xf]
  %v841 = vpack.c.bf16 %v837, %v836
  %v844 = vunpack.c.l.b16 %v839
  %v845 = vunpack.c.l.b16 %v840
  %v846 = vpack.c.b16 %v845, %v844
  %v848 = vsel %vm677, %v846, 0
  %850 = vmatprep.subr.bf16.mxu0 0
  %851 = vmatpush1.bf16.msra.mxu0 %v841
  %852 = vmatprep.subr.bf16.mxu0 0
  %853 = vmatpush1.bf16.msra.mxu0 0
  %854 = vmatprep.subr.bf16.mxu0 0
  %855 = vmatpush1.bf16.msra.mxu0 0
  %856 = vmatprep.subr.bf16.mxu0 0
  %857 = vmatpush1.bf16.msra.mxu0 0
  %858 = vmatprep.subr.bf16.mxu0 0
  %859 = vmatpush1.bf16.msra.mxu0 0
  %860 = vmatprep.subr.bf16.mxu0 0
  %861 = vmatpush1.bf16.msra.mxu0 0
  %862 = vmatprep.subr.bf16.mxu0 0
  %863 = vmatpush1.bf16.msra.mxu0 0
  %864 = vmatprep.subr.bf16.mxu0 0
  %865 = vmatpush1.bf16.msra.mxu0 0
  %866 = vmatprep.subr.bf16.mxu0 0
  %867 = vmatpush1.bf16.msra.mxu0 0
  %868 = vmatprep.subr.bf16.mxu0 0
  %869 = vmatpush1.bf16.msra.mxu0 0
  %870 = vmatprep.subr.bf16.mxu0 0
  %871 = vmatpush1.bf16.msra.mxu0 0
  %872 = vmatprep.subr.bf16.mxu0 0
  %873 = vmatpush1.bf16.msra.mxu0 0
  %874 = vmatprep.subr.bf16.mxu0 0
  %875 = vmatpush1.bf16.msra.mxu0 0
  %876 = vmatprep.subr.bf16.mxu0 0
  %877 = vmatpush1.bf16.msra.mxu0 0
  %878 = vmatprep.subr.bf16.mxu0 0
  %879 = vmatpush1.bf16.msra.mxu0 0
  %880 = vmatprep.subr.bf16.mxu0 0
  %881 = vmatpush1.bf16.msra.mxu0 0
  %882 = vmatprep.mubr.bf16.mxu0 0
  %883 = vmatmul.mubr.bf16.gmra.mrb[0].mxu0 %v848
  %v884 = vpop.f32.mrb[0].mxu0
  %v885 = vadd.f32 0.0, %v884
  %v886 = vpop.f32.mrb[0].mxu0
  %v887 = vpop.f32.mrb[0].mxu0
  %v888 = vadd.f32 0.0, %v887
  %v889 = vpop.f32.mrb[0].mxu0
  %890 = vdwg.mxu0
  %v891 = vadd.f32 %v830, %v885
  %v892 = vadd.f32 %v831, %v888
  %s893 = scalar_lea.vmem %s3, 32
  %v894 = vld [vmem:[%s893] sm:$0xf]
  %v895 = vld [vmem:[%s893 + $0x4] sm:$0xf]
  %v898 = vunpack.c.l.b16 %v894
  %v899 = vunpack.c.l.b16 %v895
  %v900 = vpack.c.b16 %v899, %v898
  %v903 = vunpack.c.l.b16 %v44
  %v904 = vunpack.c.l.b16 %v45
  %v905 = vpack.c.b16 %v904, %v903
  %v908 = vsel %vm677, %v900, 0
  %910 = vmatprep.subr.bf16.mxu0 0
  %911 = vmatpush1.bf16.msra.mxu0 %v905
  %912 = vmatprep.subr.bf16.mxu0 0
  %913 = vmatpush1.bf16.msra.mxu0 0
  %914 = vmatprep.subr.bf16.mxu0 0
  %915 = vmatpush1.bf16.msra.mxu0 0
  %916 = vmatprep.subr.bf16.mxu0 0
  %917 = vmatpush1.bf16.msra.mxu0 0
  %918 = vmatprep.subr.bf16.mxu0 0
  %919 = vmatpush1.bf16.msra.mxu0 0
  %920 = vmatprep.subr.bf16.mxu0 0
  %921 = vmatpush1.bf16.msra.mxu0 0
  %922 = vmatprep.subr.bf16.mxu0 0
  %923 = vmatpush1.bf16.msra.mxu0 0
  %924 = vmatprep.subr.bf16.mxu0 0
  %925 = vmatpush1.bf16.msra.mxu0 0
  %926 = vmatprep.subr.bf16.mxu0 0
  %927 = vmatpush1.bf16.msra.mxu0 0
  %928 = vmatprep.subr.bf16.mxu0 0
  %929 = vmatpush1.bf16.msra.mxu0 0
  %930 = vmatprep.subr.bf16.mxu0 0
  %931 = vmatpush1.bf16.msra.mxu0 0
  %932 = vmatprep.subr.bf16.mxu0 0
  %933 = vmatpush1.bf16.msra.mxu0 0
  %934 = vmatprep.subr.bf16.mxu0 0
  %935 = vmatpush1.bf16.msra.mxu0 0
  %936 = vmatprep.subr.bf16.mxu0 0
  %937 = vmatpush1.bf16.msra.mxu0 0
  %938 = vmatprep.subr.bf16.mxu0 0
  %939 = vmatpush1.bf16.msra.mxu0 0
  %940 = vmatprep.subr.bf16.mxu0 0
  %941 = vmatpush1.bf16.msra.mxu0 0
  %942 = vmatprep.mubr.bf16.mxu0 0
  %943 = vmatmul.mubr.bf16.gmra.mrb[0].mxu0 %v908
  %v944 = vpop.f32.mrb[0].mxu0
  %v945 = vadd.f32 0.0, %v944
  %v946 = vpop.f32.mrb[0].mxu0
  %v947 = vpop.f32.mrb[0].mxu0
  %v948 = vadd.f32 0.0, %v947
  %v949 = vpop.f32.mrb[0].mxu0
  %950 = vdwg.mxu0
  %v951 = vadd.f32 %v891, %v945
  %v952 = vadd.f32 %v892, %v948
  %953 = vrot.lane.b32.xlu0 %v46, 127
  %v954 = vpop.permute.xlu0 %953
  %955 = vrot.lane.b32.xlu0 %v47, 127
  %v956 = vpop.permute.xlu0 %955
  %v957 = vmul.f32 %v954, %v385
  %v958 = vmul.f32 %v956, %v385
  %s959 = scalar_lea.vmem %s3, 40
  %v960 = vld [vmem:[%s959] sm:$0xf]
  %v961 = vld [vmem:[%s959 + $0x4] sm:$0xf]
  %v962 = vpack.c.bf16 %v958, %v957
  %v965 = vunpack.c.l.b16 %v960
  %v966 = vunpack.c.l.b16 %v961
  %v967 = vpack.c.b16 %v966, %v965
  %v969 = vsel %vm677, %v967, 0
  %971 = vmatprep.subr.bf16.mxu0 0
  %972 = vmatpush1.bf16.msra.mxu0 %v962
  %973 = vmatprep.subr.bf16.mxu0 0
  %974 = vmatpush1.bf16.msra.mxu0 0
  %975 = vmatprep.subr.bf16.mxu0 0
  %976 = vmatpush1.bf16.msra.mxu0 0
  %977 = vmatprep.subr.bf16.mxu0 0
  %978 = vmatpush1.bf16.msra.mxu0 0
  %979 = vmatprep.subr.bf16.mxu0 0
  %980 = vmatpush1.bf16.msra.mxu0 0
  %981 = vmatprep.subr.bf16.mxu0 0
  %982 = vmatpush1.bf16.msra.mxu0 0
  %983 = vmatprep.subr.bf16.mxu0 0
  %984 = vmatpush1.bf16.msra.mxu0 0
  %985 = vmatprep.subr.bf16.mxu0 0
  %986 = vmatpush1.bf16.msra.mxu0 0
  %987 = vmatprep.subr.bf16.mxu0 0
  %988 = vmatpush1.bf16.msra.mxu0 0
  %989 = vmatprep.subr.bf16.mxu0 0
  %990 = vmatpush1.bf16.msra.mxu0 0
  %991 = vmatprep.subr.bf16.mxu0 0
  %992 = vmatpush1.bf16.msra.mxu0 0
  %993 = vmatprep.subr.bf16.mxu0 0
  %994 = vmatpush1.bf16.msra.mxu0 0
  %995 = vmatprep.subr.bf16.mxu0 0
  %996 = vmatpush1.bf16.msra.mxu0 0
  %997 = vmatprep.subr.bf16.mxu0 0
  %998 = vmatpush1.bf16.msra.mxu0 0
  %999 = vmatprep.subr.bf16.mxu0 0
  %1000 = vmatpush1.bf16.msra.mxu0 0
  %1001 = vmatprep.subr.bf16.mxu0 0
  %1002 = vmatpush1.bf16.msra.mxu0 0
  %1003 = vmatprep.mubr.bf16.mxu0 0
  %1004 = vmatmul.mubr.bf16.gmra.mrb[0].mxu0 %v969
  %v1005 = vpop.f32.mrb[0].mxu0
  %v1006 = vadd.f32 0.0, %v1005
  %v1007 = vpop.f32.mrb[0].mxu0
  %v1008 = vpop.f32.mrb[0].mxu0
  %v1009 = vadd.f32 0.0, %v1008
  %v1010 = vpop.f32.mrb[0].mxu0
  %1011 = vdwg.mxu0
  %v1012 = vadd.f32 %v951, %v1006
  %v1013 = vadd.f32 %v952, %v1009
  %1014 = vrot.lane.b32.xlu0 %v46, 121
  %v1015 = vpop.permute.xlu0 %1014
  %1016 = vrot.lane.b32.xlu0 %v47, 121
  %v1017 = vpop.permute.xlu0 %1016
  %v1018 = vmul.f32 %v1015, %v454
  %v1019 = vmul.f32 %v1017, %v454
  %s1020 = scalar_lea.vmem %s3, 48
  %v1021 = vld [vmem:[%s1020] sm:$0xf]
  %v1022 = vld [vmem:[%s1020 + $0x4] sm:$0xf]
  %v1023 = vpack.c.bf16 %v1019, %v1018
  %v1026 = vunpack.c.l.b16 %v1021
  %v1027 = vunpack.c.l.b16 %v1022
  %v1028 = vpack.c.b16 %v1027, %v1026
  %v1030 = vsel %vm677, %v1028, 0
  %1032 = vmatprep.subr.bf16.mxu0 0
  %1033 = vmatpush1.bf16.msra.mxu0 %v1023
  %1034 = vmatprep.subr.bf16.mxu0 0
  %1035 = vmatpush1.bf16.msra.mxu0 0
  %1036 = vmatprep.subr.bf16.mxu0 0
  %1037 = vmatpush1.bf16.msra.mxu0 0
  %1038 = vmatprep.subr.bf16.mxu0 0
  %1039 = vmatpush1.bf16.msra.mxu0 0
  %1040 = vmatprep.subr.bf16.mxu0 0
  %1041 = vmatpush1.bf16.msra.mxu0 0
  %1042 = vmatprep.subr.bf16.mxu0 0
  %1043 = vmatpush1.bf16.msra.mxu0 0
  %1044 = vmatprep.subr.bf16.mxu0 0
  %1045 = vmatpush1.bf16.msra.mxu0 0
  %1046 = vmatprep.subr.bf16.mxu0 0
  %1047 = vmatpush1.bf16.msra.mxu0 0
  %1048 = vmatprep.subr.bf16.mxu0 0
  %1049 = vmatpush1.bf16.msra.mxu0 0
  %1050 = vmatprep.subr.bf16.mxu0 0
  %1051 = vmatpush1.bf16.msra.mxu0 0
  %1052 = vmatprep.subr.bf16.mxu0 0
  %1053 = vmatpush1.bf16.msra.mxu0 0
  %1054 = vmatprep.subr.bf16.mxu0 0
  %1055 = vmatpush1.bf16.msra.mxu0 0
  %1056 = vmatprep.subr.bf16.mxu0 0
  %1057 = vmatpush1.bf16.msra.mxu0 0
  %1058 = vmatprep.subr.bf16.mxu0 0
  %1059 = vmatpush1.bf16.msra.mxu0 0
  %1060 = vmatprep.subr.bf16.mxu0 0
  %1061 = vmatpush1.bf16.msra.mxu0 0
  %1062 = vmatprep.subr.bf16.mxu0 0
  %1063 = vmatpush1.bf16.msra.mxu0 0
  %1064 = vmatprep.mubr.bf16.mxu0 0
  %1065 = vmatmul.mubr.bf16.gmra.mrb[0].mxu0 %v1030
  %v1066 = vpop.f32.mrb[0].mxu0
  %v1067 = vadd.f32 0.0, %v1066
  %v1068 = vpop.f32.mrb[0].mxu0
  %v1069 = vpop.f32.mrb[0].mxu0
  %v1070 = vadd.f32 0.0, %v1069
  %v1071 = vpop.f32.mrb[0].mxu0
  %1072 = vdwg.mxu0
  %v1073 = vadd.f32 %v1012, %v1067
  %v1074 = vadd.f32 %v1013, %v1070
  %1075 = vrot.lane.b32.xlu0 %v46, 120
  %v1076 = vpop.permute.xlu0 %1075
  %1077 = vrot.lane.b32.xlu0 %v47, 120
  %v1078 = vpop.permute.xlu0 %1077
  %v1079 = vmul.f32 %v1076, %v523
  %v1080 = vmul.f32 %v1078, %v523
  %s1081 = scalar_lea.vmem %s3, 56
  %v1082 = vld [vmem:[%s1081] sm:$0xf]
  %v1083 = vld [vmem:[%s1081 + $0x4] sm:$0xf]
  %v1084 = vpack.c.bf16 %v1080, %v1079
  %v1087 = vunpack.c.l.b16 %v1082
  %v1088 = vunpack.c.l.b16 %v1083
  %v1089 = vpack.c.b16 %v1088, %v1087
  %v1091 = vsel %vm677, %v1089, 0
  %1093 = vmatprep.subr.bf16.mxu0 0
  %1094 = vmatpush1.bf16.msra.mxu0 %v1084
  %1095 = vmatprep.subr.bf16.mxu0 0
  %1096 = vmatpush1.bf16.msra.mxu0 0
  %1097 = vmatprep.subr.bf16.mxu0 0
  %1098 = vmatpush1.bf16.msra.mxu0 0
  %1099 = vmatprep.subr.bf16.mxu0 0
  %1100 = vmatpush1.bf16.msra.mxu0 0
  %1101 = vmatprep.subr.bf16.mxu0 0
  %1102 = vmatpush1.bf16.msra.mxu0 0
  %1103 = vmatprep.subr.bf16.mxu0 0
  %1104 = vmatpush1.bf16.msra.mxu0 0
  %1105 = vmatprep.subr.bf16.mxu0 0
  %1106 = vmatpush1.bf16.msra.mxu0 0
  %1107 = vmatprep.subr.bf16.mxu0 0
  %1108 = vmatpush1.bf16.msra.mxu0 0
  %1109 = vmatprep.subr.bf16.mxu0 0
  %1110 = vmatpush1.bf16.msra.mxu0 0
  %1111 = vmatprep.subr.bf16.mxu0 0
  %1112 = vmatpush1.bf16.msra.mxu0 0
  %1113 = vmatprep.subr.bf16.mxu0 0
  %1114 = vmatpush1.bf16.msra.mxu0 0
  %1115 = vmatprep.subr.bf16.mxu0 0
  %1116 = vmatpush1.bf16.msra.mxu0 0
  %1117 = vmatprep.subr.bf16.mxu0 0
  %1118 = vmatpush1.bf16.msra.mxu0 0
  %1119 = vmatprep.subr.bf16.mxu0 0
  %1120 = vmatpush1.bf16.msra.mxu0 0
  %1121 = vmatprep.subr.bf16.mxu0 0
  %1122 = vmatpush1.bf16.msra.mxu0 0
  %1123 = vmatprep.subr.bf16.mxu0 0
  %1124 = vmatpush1.bf16.msra.mxu0 0
  %1125 = vmatprep.mubr.bf16.mxu0 0
  %1126 = vmatmul.mubr.bf16.gmra.mrb[0].mxu0 %v1091
  %v1127 = vpop.f32.mrb[0].mxu0
  %v1128 = vadd.f32 0.0, %v1127
  %v1129 = vpop.f32.mrb[0].mxu0
  %v1130 = vpop.f32.mrb[0].mxu0
  %v1131 = vadd.f32 0.0, %v1130
  %v1132 = vpop.f32.mrb[0].mxu0
  %1133 = vdwg.mxu0
  %v1134 = vadd.f32 %v1073, %v1128
  %v1135 = vadd.f32 %v1074, %v1131
  %1136 = vrot.lane.b32.xlu0 %v46, 119
  %v1137 = vpop.permute.xlu0 %1136
  %1138 = vrot.lane.b32.xlu0 %v47, 119
  %v1139 = vpop.permute.xlu0 %1138
  %v1140 = vmul.f32 %v1137, %v592
  %v1141 = vmul.f32 %v1139, %v592
  %s1142 = scalar_lea.vmem %s3, 64
  %v1143 = vld [vmem:[%s1142] sm:$0xf]
  %v1144 = vld [vmem:[%s1142 + $0x4] sm:$0xf]
  %v1145 = vpack.c.bf16 %v1141, %v1140
  %v1148 = vunpack.c.l.b16 %v1143
  %v1149 = vunpack.c.l.b16 %v1144
  %v1150 = vpack.c.b16 %v1149, %v1148
  %v1152 = vsel %vm677, %v1150, 0
  %1154 = vmatprep.subr.bf16.mxu0 0
  %1155 = vmatpush1.bf16.msra.mxu0 %v1145
  %1156 = vmatprep.subr.bf16.mxu0 0
  %1157 = vmatpush1.bf16.msra.mxu0 0
  %1158 = vmatprep.subr.bf16.mxu0 0
  %1159 = vmatpush1.bf16.msra.mxu0 0
  %1160 = vmatprep.subr.bf16.mxu0 0
  %1161 = vmatpush1.bf16.msra.mxu0 0
  %1162 = vmatprep.subr.bf16.mxu0 0
  %1163 = vmatpush1.bf16.msra.mxu0 0
  %1164 = vmatprep.subr.bf16.mxu0 0
  %1165 = vmatpush1.bf16.msra.mxu0 0
  %1166 = vmatprep.subr.bf16.mxu0 0
  %1167 = vmatpush1.bf16.msra.mxu0 0
  %1168 = vmatprep.subr.bf16.mxu0 0
  %1169 = vmatpush1.bf16.msra.mxu0 0
  %1170 = vmatprep.subr.bf16.mxu0 0
  %1171 = vmatpush1.bf16.msra.mxu0 0
  %1172 = vmatprep.subr.bf16.mxu0 0
  %1173 = vmatpush1.bf16.msra.mxu0 0
  %1174 = vmatprep.subr.bf16.mxu0 0
  %1175 = vmatpush1.bf16.msra.mxu0 0
  %1176 = vmatprep.subr.bf16.mxu0 0
  %1177 = vmatpush1.bf16.msra.mxu0 0
  %1178 = vmatprep.subr.bf16.mxu0 0
  %1179 = vmatpush1.bf16.msra.mxu0 0
  %1180 = vmatprep.subr.bf16.mxu0 0
  %1181 = vmatpush1.bf16.msra.mxu0 0
  %1182 = vmatprep.subr.bf16.mxu0 0
  %1183 = vmatpush1.bf16.msra.mxu0 0
  %1184 = vmatprep.subr.bf16.mxu0 0
  %1185 = vmatpush1.bf16.msra.mxu0 0
  %1186 = vmatprep.mubr.bf16.mxu0 0
  %1187 = vmatmul.mubr.bf16.gmra.mrb[0].mxu0 %v1152
  %v1188 = vpop.f32.mrb[0].mxu0
  %v1189 = vadd.f32 0.0, %v1188
  %v1190 = vpop.f32.mrb[0].mxu0
  %v1191 = vpop.f32.mrb[0].mxu0
  %v1192 = vadd.f32 0.0, %v1191
  %v1193 = vpop.f32.mrb[0].mxu0
  %1194 = vdwg.mxu0
  %v1195 = vadd.f32 %v1134, %v1189
  %v1196 = vadd.f32 %v1135, %v1192
  %v1197 = vadd.f32 %v651, %v1195
  %v1198 = vadd.f32 %v652, %v1196
  %v1199 = vld [vmem:[%s4] sm:$0xff]
  %v1200 = vld [vmem:[%s4 + $0x8] sm:$0xff]
  %1202 = vset.pattern.permute.xlu0 0
  %1203 = vperm.xlu0 %1202, %v1199
  %v1204 = vpop.permute.xlu0 %1203
  %1207 = vset.pattern.permute.xlu0 0
  %1208 = vperm.xlu0 %1207, %v1200
  %v1209 = vpop.permute.xlu0 %1208
  %v1211 = vadd.f32 %v1197, %v1204
  %v1212 = vadd.f32 %v1198, %v1209
  %v1213 = vmul.f32 %v1211, 0.1
  %v1214 = vmul.f32 %v1212, 0.1
  %v1215 = vmax.f32 %v1211, %v1213
  %v1216 = vmax.f32 %v1212, %v1214
  %v1217 = vld [vmem:[%s5] sm:$0xf]
  %v1218 = vld [vmem:[%s5 + $0x4] sm:$0xf]
  %v1219 = vpack.c.bf16 %v1216, %v1215
  %v1220 = vld [vmem:[%s6] sm:$0xff]
  %v1221 = vld [vmem:[%s6 + $0x8] sm:$0xff]
  %1223 = vset.pattern.permute.xlu0 0
  %1224 = vperm.xlu0 %1223, %v1220
  %v1225 = vpop.permute.xlu0 %1224
  %1228 = vset.pattern.permute.xlu0 0
  %1229 = vperm.xlu0 %1228, %v1221
  %v1230 = vpop.permute.xlu0 %1229
  %v1234 = vunpack.c.l.b16 %v1217
  %v1235 = vunpack.c.l.b16 %v1218
  %v1236 = vpack.c.b16 %v1235, %v1234
  %v1238 = vsel %vm677, %v1236, 0
  %1240 = vmatprep.subr.bf16.mxu0 0
  %1241 = vmatpush1.bf16.msra.mxu0 %v1219
  %1242 = vmatprep.subr.bf16.mxu0 0
  %1243 = vmatpush1.bf16.msra.mxu0 0
  %1244 = vmatprep.subr.bf16.mxu0 0
  %1245 = vmatpush1.bf16.msra.mxu0 0
  %1246 = vmatprep.subr.bf16.mxu0 0
  %1247 = vmatpush1.bf16.msra.mxu0 0
  %1248 = vmatprep.subr.bf16.mxu0 0
  %1249 = vmatpush1.bf16.msra.mxu0 0
  %1250 = vmatprep.subr.bf16.mxu0 0
  %1251 = vmatpush1.bf16.msra.mxu0 0
  %1252 = vmatprep.subr.bf16.mxu0 0
  %1253 = vmatpush1.bf16.msra.mxu0 0
  %1254 = vmatprep.subr.bf16.mxu0 0
  %1255 = vmatpush1.bf16.msra.mxu0 0
  %1256 = vmatprep.subr.bf16.mxu0 0
  %1257 = vmatpush1.bf16.msra.mxu0 0
  %1258 = vmatprep.subr.bf16.mxu0 0
  %1259 = vmatpush1.bf16.msra.mxu0 0
  %1260 = vmatprep.subr.bf16.mxu0 0
  %1261 = vmatpush1.bf16.msra.mxu0 0
  %1262 = vmatprep.subr.bf16.mxu0 0
  %1263 = vmatpush1.bf16.msra.mxu0 0
  %1264 = vmatprep.subr.bf16.mxu0 0
  %1265 = vmatpush1.bf16.msra.mxu0 0
  %1266 = vmatprep.subr.bf16.mxu0 0
  %1267 = vmatpush1.bf16.msra.mxu0 0
  %1268 = vmatprep.subr.bf16.mxu0 0
  %1269 = vmatpush1.bf16.msra.mxu0 0
  %1270 = vmatprep.subr.bf16.mxu0 0
  %1271 = vmatpush1.bf16.msra.mxu0 0
  %1272 = vmatprep.mubr.bf16.mxu0 0
  %1273 = vmatmul.mubr.bf16.gmra.mrb[0].mxu0 %v1238
  %v1274 = vpop.f32.mrb[0].mxu0
  %v1275 = vadd.f32 %v1225, %v1274
  %v1276 = vpop.f32.mrb[0].mxu0
  %v1277 = vpop.f32.mrb[0].mxu0
  %v1278 = vadd.f32 %v1230, %v1277
  %v1279 = vpop.f32.mrb[0].mxu0
  %1280 = vdwg.mxu0
  %v1281 = vmul.f32 %v1275, 0.1
  %v1282 = vmul.f32 %v1278, 0.1
  %v1283 = vmax.f32 %v1275, %v1281
  %v1284 = vmax.f32 %v1278, %v1282
  %v1285 = vsub.f32 0.0, %v1283
  %v1286 = vsub.f32 0.0, %v1284
  %v1287 = vmul.f32 %v1285, 1.442695
  %v1288 = vpow.pop %v1287
  %v1289 = vmul.f32 %v1286, 1.442695
  %v1290 = vpow.pop %v1289
  %v1291 = vadd.f32 %v1288, 1.0
  %v1292 = vadd.f32 %v1290, 1.0
  %v1293 = vrcp.pop %v1291
  %v1294 = vmul.f32 1.0, %v1293
  %v1295 = vrcp.pop %v1292
  %v1296 = vmul.f32 1.0, %v1295
  %v1297 = vld [vmem:[%s8] sm:$0xff]
  %v1298 = vld [vmem:[%s8 + $0x8] sm:$0xff]
  %1300 = vset.pattern.permute.xlu0 0
  %1301 = vperm.xlu0 %1300, %v1297
  %v1302 = vpop.permute.xlu0 %1301
  %1305 = vset.pattern.permute.xlu0 0
  %1306 = vperm.xlu0 %1305, %v1298
  %v1307 = vpop.permute.xlu0 %1306
  %v1309 = vmul.f32 %v1294, %v1302
  %v1310 = vmul.f32 %v1296, %v1307
  %v1311 = vld [vmem:[%s9] sm:$0xff]
  %v1312 = vld [vmem:[%s9 + $0x8] sm:$0xff]
  %1314 = vset.pattern.permute.xlu0 0
  %1315 = vperm.xlu0 %1314, %v1311
  %v1316 = vpop.permute.xlu0 %1315
  %1319 = vset.pattern.permute.xlu0 0
  %1320 = vperm.xlu0 %1319, %v1312
  %v1321 = vpop.permute.xlu0 %1320
  %v1323 = vmul.f32 %v1283, %v1316
  %v1324 = vmul.f32 %v1284, %v1321
  %v1325 = vmul.f32 %v1323, 1.442695
  %v1326 = vpow.pop %v1325
  %v1327 = vmul.f32 %v1324, 1.442695
  %v1328 = vpow.pop %v1327
  %v1329 = vld [vmem:[%s10] sm:$0xff]
  %v1330 = vld [vmem:[%s10 + $0x8] sm:$0xff]
  %1332 = vset.pattern.permute.xlu0 0
  %1333 = vperm.xlu0 %1332, %v1329
  %v1334 = vpop.permute.xlu0 %1333
  %1337 = vset.pattern.permute.xlu0 0
  %1338 = vperm.xlu0 %1337, %v1330
  %v1339 = vpop.permute.xlu0 %1338
  %v1341 = vmul.f32 %v1326, %v1334
  %v1342 = vmul.f32 %v1328, %v1339
  %v1343 = vadd.f32 %v1309, %v1341
  %v1344 = vadd.f32 %v1310, %v1342
  %v1345 = vld [vmem:[%s11] sm:$0xff]
  %v1346 = vld [vmem:[%s11 + $0x8] sm:$0xff]
  %v1347 = vadd.f32 %v1343, %v1345
  %v1348 = vadd.f32 %v1344, %v1346
  %1349 = vst [vmem:[%s12] sm:$0xff] %v1347
  %1350 = vst [vmem:[%s12 + $0x8] sm:$0xff] %v1348
  // Predicated region
  $region50: #{_lambda_.7} parent=0 // pred_check
    _
  $region51: #{_lambda_.7} parent=0 // pred_check_branch
    %1352 = sbr.rel (0) target = $region53
  $region52: #{_lambda_.7} parent=0 // pred_region
    _
  $region53: #{_lambda_.7} parent=0 // pred_fallthru
    _
  // Predicated region
  $region54: #{_lambda_.7} parent=0 // pred_check
    _
  $region55: #{_lambda_.7} parent=0 // pred_check_branch
    %1354 = sbr.rel (0) target = $region57
  $region56: #{_lambda_.7} parent=0 // pred_region
    _
  $region57: #{_lambda_.7} parent=0 // pred_fallthru
    _

</llo_original>
